<compile_context>
chip_gen: v5e
topology: v5e:2x2
jax: 0.10.0
libtpu: 0.0.40
codegen_flags: <defaults>
</compile_context>

<pallas_src>
import functools

import jax
import jax.numpy as jnp
from jax.experimental import pallas as pl
from jax.experimental.pallas import tpu as pltpu

EPS = 1e-5


def _lane_shift(v, s, R):
    """w[:, r] = v[:, (r + s) % R]  (caller masks the wrapped region)."""
    if s % R == 0:
        return v
    return pltpu.roll(v, (-s) % R, axis=1)


# ----------------------------------------------------------------------------
# Fully fused Pallas kernel: all dense layers for one batch element
# ----------------------------------------------------------------------------
def _fused_kernel(x_ref, *refs, depth, C, T, F, lorder, eps):
    """refs = (wconv_0, wfsmn_0, vec_0, ..., wconv_{d-1}, wfsmn_{d-1}, vec_{d-1},
               o_ref, skip_ref)

    x_ref:    [1, C, R]            layer-0 input
    wconv_i:  [6, C, (i+1)*C]      conv weight, tap-major (kt*3+kf)
    wfsmn_i:  [2, C, C]            [linear weight; project weight] (torch [out, in])
    vec_i:    [C, 4 + 2*lorder-1]  cols: IN gamma, IN beta, PReLU alpha, lin bias, mem conv
    o_ref:    [1, C, R]            final layer output
    skip_ref: [depth*C, R]         VMEM scratch holding the dense skip (out_i first, x last)
    """
    w_refs = refs[:3 * depth]
    o_ref = refs[3 * depth]
    skip_ref = refs[3 * depth + 1]
    R = T * F
    K = 2 * lorder - 1
    pad = lorder - 1

    # ---- masks hoisted once, shared by every tap of every layer -----------------
    r_idx = jax.lax.broadcasted_iota(jnp.int32, (1, R), 1)
    f_idx = r_idx % F
    shift_set = sorted(set(list(range(-pad, pad + 1)) + [-1, 1]) - {0})
    freq_mask = {d: jnp.logical_and(f_idx + d >= 0, f_idx + d < F) for d in shift_set}

    # ---- stage layer-0 input at the bottom of the skip buffer -------------------
    skip_ref[pl.ds((depth - 1) * C, C), :] = x_ref[0]

    out = None
    for i in range(depth):
        dil = 2 ** i
        Cin = (i + 1) * C
        wconv_ref = w_refs[3 * i]
        wfsmn_ref = w_refs[3 * i + 1]
        vec_ref = w_refs[3 * i + 2]

        # Dense input: [out_{i-1}, ..., out_0, x] == last (i+1)*C rows of the scratch.
        xin = skip_ref[pl.ds((depth - 1 - i) * C, Cin), :]           # [Cin, R]

        # Per-layer causal time mask (top zero-pad of `dil` frames), combined once
        # with the shared frequency-boundary masks.
        t_mask = r_idx >= dil * F
        conv_mask = {
            (-dil, -1): jnp.logical_and(t_mask, freq_mask[-1]),
            (-dil, 0): t_mask,
            (-dil, 1): jnp.logical_and(t_mask, freq_mask[1]),
            (0, -1): freq_mask[-1],
            (0, 0): None,
            (0, 1): freq_mask[1],
        }

        # ---- dilated causal Conv2d (2,3): 6 accumulating per-tap matmuls --------
        y = None
        for kt in range(2):                      # time taps: t - dil, t
            dt = (kt - 1) * dil
            for kf in range(3):                  # freq taps: f-1, f, f+1
                df = kf - 1
                xt = _lane_shift(xin, dt * F + df, R)
                m = conv_mask[(dt, df)]
                if m is not None:
                    xt = jnp.where(m, xt, 0.0)
                tap = jnp.dot(wconv_ref[3 * kt + kf], xt,
                              preferred_element_type=jnp.float32)
                y = tap if y is None else y + tap
        # Conv bias omitted: it is exactly cancelled by the InstanceNorm mean.

        # ---- InstanceNorm2d (single-pass stats, folded affine) + PReLU ----------
        ssum = jnp.sum(y, axis=1, keepdims=True)
        ssq = jnp.sum(y * y, axis=1, keepdims=True)
        mu = ssum * (1.0 / R)
        var = ssq * (1.0 / R) - mu * mu
        scale = vec_ref[:, 0:1] * jax.lax.rsqrt(var + eps)           # gamma * rstd
        shift = vec_ref[:, 1:2] - mu * scale                         # beta - mu*scale
        y = y * scale + shift
        y = jnp.where(y >= 0.0, y, vec_ref[:, 2:3] * y)              # PReLU

        # ---- FSMN_Wrap / UniDeepFsmn over the frequency axis --------------------
        # Features = channels, positions = (t, f); linear/project are [C,C] matmuls.
        f1 = jnp.dot(wfsmn_ref[0], y, preferred_element_type=jnp.float32) + vec_ref[:, 3:4]
        f1 = jnp.maximum(f1, 0.0)
        p1 = jnp.dot(wfsmn_ref[1], f1, preferred_element_type=jnp.float32)

        mem = None                                                   # depthwise memory conv
        for k in range(K):
            s = k - pad
            pt = _lane_shift(p1, s, R)
            if s != 0:
                pt = jnp.where(freq_mask[s], pt, 0.0)
            term = vec_ref[:, 4 + k:5 + k] * pt
            mem = term if mem is None else mem + term

        out = y + p1 + mem                                           # x + p1 + conv1(p1)

        if i + 1 < depth:
            # Prepend this layer's output to the dense skip (torch.cat([out, skip], 1)).
            skip_ref[pl.ds((depth - 2 - i) * C, C), :] = out

    o_ref[0] = out


# ----------------------------------------------------------------------------
# Wrapper
# ----------------------------------------------------------------------------
def pack_params(params):
    """One-time repack of PyTorch-layout weights into the kernel operand layout.

    Called OUTSIDE the jitted forward so no repacking ops sit on the forward path.
    Note: conv bias is intentionally not packed (cancelled by InstanceNorm).
    """
    packed = []
    for p in params:
        C, Cin = p["conv_w"].shape[0], p["conv_w"].shape[1]
        wconv = jnp.transpose(p["conv_w"], (2, 3, 0, 1)).reshape(6, C, Cin)
        wfsmn = jnp.stack([p["lin_w"], p["proj_w"]], axis=0)
        vec = jnp.concatenate(
            [p["in_g"][:, None], p["in_b"][:, None], p["prelu"][:, None],
             p["lin_b"][:, None], p["mem_w"]], axis=1)
        packed.append((wconv.astype(jnp.float32),
                       wfsmn.astype(jnp.float32),
                       vec.astype(jnp.float32)))
    return packed


def dilated_dense_net_forward(x, packed_params, *, eps=EPS):
    """x: [B, C, T, F] (NCHW) -> [B, C, T, F].  packed_params from pack_params()."""
    B, C, T, F = x.shape
    R = T * F
    depth = len(packed_params)
    K = packed_params[0][2].shape[1] - 4
    lorder = (K + 1) // 2

    x2 = x.astype(jnp.float32).reshape(B, C, R)       # contiguous reshape, no data movement
    flat_w = [w for layer in packed_params for w in layer]

    in_specs = [pl.BlockSpec((1, C, R), lambda b: (b, 0, 0))]
    for w in flat_w:                                   # weights: fetched once, stay resident
        in_specs.append(pl.BlockSpec(w.shape, lambda b, n=w.ndim: (0,) * n))

    out = pl.pallas_call(
        functools.partial(_fused_kernel, depth=depth, C=C, T=T, F=F,
                          lorder=lorder, eps=eps),
        out_shape=jax.ShapeDtypeStruct((B, C, R), jnp.float32),
        grid_spec=pltpu.PrefetchScalarGridSpec(
            num_scalar_prefetch=0,
            grid=(B,),
            in_specs=in_specs,
            out_specs=pl.BlockSpec((1, C, R), lambda b: (b, 0, 0)),
            scratch_shapes=[pltpu.VMEM((depth * C, R), jnp.float32)],
        ),
        compiler_params=pltpu.CompilerParams(dimension_semantics=("parallel",)),
    )(x2, *flat_w)
    return out.reshape(B, C, T, F)


# ----------------------------------------------------------------------------
# Pure-JAX reference (correctness verification only)
# ----------------------------------------------------------------------------
def _reference_forward(x, params, *, lorder=5, eps=EPS):
    hp = jax.lax.Precision.HIGHEST
    B, C, T, F = x.shape
    skip = x
    out = None
    for i, p in enumerate(params):
        dil = 2 ** i
        xp = jnp.pad(skip, ((0, 0), (0, 0), (dil, 0), (1, 1)))   # ConstantPad2d((1,1,dil,0))
        out = jax.lax.conv_general_dilated(
            xp, p["conv_w"], window_strides=(1, 1), padding="VALID",
            rhs_dilation=(dil, 1), dimension_numbers=("NCHW", "OIHW", "NCHW"),
            precision=hp) + p["conv_b"][None, :, None, None]
        mu = jnp.mean(out, axis=(2, 3), keepdims=True)
        var = jnp.mean((out - mu) ** 2, axis=(2, 3), keepdims=True)
        out = (out - mu) / jnp.sqrt(var + eps)
        out = out * p["in_g"][None, :, None, None] + p["in_b"][None, :, None, None]
        out = jnp.where(out >= 0, out, p["prelu"][None, :, None, None] * out)
        # FSMN_Wrap: [B,C,T,F] -> [B*T, F, C] -> UniDeepFsmn -> back.
        u = jnp.transpose(out, (0, 2, 3, 1)).reshape(B * T, F, C)
        f1 = jnp.maximum(jnp.einsum("bfc,dc->bfd", u, p["lin_w"], precision=hp)
                         + p["lin_b"], 0.0)
        p1 = jnp.einsum("bfc,dc->bfd", f1, p["proj_w"], precision=hp)
        p1p = jnp.pad(p1, ((0, 0), (lorder - 1, lorder - 1), (0, 0)))
        mem = jnp.zeros_like(p1)
        for k in range(2 * lorder - 1):
            mem = mem + p1p[:, k:k + F, :] * p["mem_w"][:, k][None, None, :]
        o = u + p1 + mem
        out = jnp.transpose(o.reshape(B, T, F, C), (0, 3, 1, 2))
        skip = jnp.concatenate([out, skip], axis=1)
    return out


# ----------------------------------------------------------------------------
# Deterministic synthetic parameters (mirror the PyTorch module's shapes)
# ----------------------------------------------------------------------------
def make_params(key, *, depth, in_channels, lorder):
    C = in_channels
    params = []
    layer_keys = jax.random.split(key, depth)
    for i in range(depth):
        Cin = C * (i + 1)
        ks = list(jax.random.split(layer_keys[i], 8))

        def nrm(k, shape, scale=0.1):
            return scale * jax.random.normal(k, shape, jnp.float32)

        params.append({
            "conv_w": nrm(ks[0], (C, Cin, 2, 3)),          # Conv2d weight [O, I, kH, kW]
            "conv_b": nrm(ks[1], (C,)),
            "in_g":   1.0 + nrm(ks[2], (C,), 0.05),        # InstanceNorm2d affine weight
            "in_b":   nrm(ks[3], (C,), 0.05),
            "prelu":  jnp.full((C,), 0.25, jnp.float32),   # PReLU default init
            "lin_w":  nrm(ks[4], (C, C)),                  # UniDeepFsmn.linear [out, in]
            "lin_b":  nrm(ks[5], (C,)),
            "proj_w": nrm(ks[6], (C, C)),                  # UniDeepFsmn.project (no bias)
            "mem_w":  nrm(ks[7], (C, 2 * lorder - 1)),     # depthwise memory conv [C, K]
        })
    return params


if __name__ == "__main__":
    depth, in_channels, lorder = 4, 16, 5
    B, T, F = 2, 16, 16

    key = jax.random.PRNGKey(0)
    kx, kp = jax.random.split(key)
    x = jax.random.normal(kx, (B, in_channels, T, F), jnp.float32)
    params = make_params(kp, depth=depth, in_channels=in_channels, lorder=lorder)
    packed = pack_params(params)            # one-time repack, outside the jitted forward

    fwd = jax.jit(dilated_dense_net_forward)
    out = jax.block_until_ready(fwd(x, packed))

    assert out.shape == (B, in_channels, T, F), out.shape
    assert bool(jnp.all(jnp.isfinite(out)))

    ref = jax.jit(functools.partial(_reference_forward, lorder=lorder))(x, params)
    max_err = float(jnp.max(jnp.abs(out - ref)))
    assert max_err < 5e-3, f"mismatch vs pure-JAX reference: {max_err}"

    print("KERNEL_OK")
</pallas_src>

<mosaic_0001>
module attributes {stable_mosaic.version = 11 : i64} {
  func.func @_fused_kernel(%arg0: i32, %arg1: memref<1x16x256xf32, #tpu.memory_space<vmem>>, %arg2: memref<6x16x16xf32, #tpu.memory_space<vmem>>, %arg3: memref<2x16x16xf32, #tpu.memory_space<vmem>>, %arg4: memref<16x13xf32, #tpu.memory_space<vmem>>, %arg5: memref<6x16x32xf32, #tpu.memory_space<vmem>>, %arg6: memref<2x16x16xf32, #tpu.memory_space<vmem>>, %arg7: memref<16x13xf32, #tpu.memory_space<vmem>>, %arg8: memref<6x16x48xf32, #tpu.memory_space<vmem>>, %arg9: memref<2x16x16xf32, #tpu.memory_space<vmem>>, %arg10: memref<16x13xf32, #tpu.memory_space<vmem>>, %arg11: memref<6x16x64xf32, #tpu.memory_space<vmem>>, %arg12: memref<2x16x16xf32, #tpu.memory_space<vmem>>, %arg13: memref<16x13xf32, #tpu.memory_space<vmem>>, %arg14: memref<1x16x256xf32, #tpu.memory_space<vmem>>, %arg15: memref<64x256xf32, #tpu.memory_space<vmem>>) attributes {dimension_semantics = [#tpu.dimension_semantics<parallel>], iteration_bounds = array<i64: 2>, scalar_prefetch = 0 : i64, scratch_operands = 1 : i64, tpu.core_type = #tpu.core_type<tc>, window_params = [{transform_indices = @transform_0, window_bounds = array<i64: 1, 16, 256>}, {pipeline_mode = #tpu.pipeline_mode<synchronous>, transform_indices = @transform_1, window_bounds = array<i64: 6, 16, 16>}, {pipeline_mode = #tpu.pipeline_mode<synchronous>, transform_indices = @transform_2, window_bounds = array<i64: 2, 16, 16>}, {pipeline_mode = #tpu.pipeline_mode<synchronous>, transform_indices = @transform_3, window_bounds = array<i64: 16, 13>}, {pipeline_mode = #tpu.pipeline_mode<synchronous>, transform_indices = @transform_4, window_bounds = array<i64: 6, 16, 32>}, {pipeline_mode = #tpu.pipeline_mode<synchronous>, transform_indices = @transform_5, window_bounds = array<i64: 2, 16, 16>}, {pipeline_mode = #tpu.pipeline_mode<synchronous>, transform_indices = @transform_6, window_bounds = array<i64: 16, 13>}, {pipeline_mode = #tpu.pipeline_mode<synchronous>, transform_indices = @transform_7, window_bounds = array<i64: 6, 16, 48>}, {pipeline_mode = #tpu.pipeline_mode<synchronous>, transform_indices = @transform_8, window_bounds = array<i64: 2, 16, 16>}, {pipeline_mode = #tpu.pipeline_mode<synchronous>, transform_indices = @transform_9, window_bounds = array<i64: 16, 13>}, {pipeline_mode = #tpu.pipeline_mode<synchronous>, transform_indices = @transform_10, window_bounds = array<i64: 6, 16, 64>}, {pipeline_mode = #tpu.pipeline_mode<synchronous>, transform_indices = @transform_11, window_bounds = array<i64: 2, 16, 16>}, {pipeline_mode = #tpu.pipeline_mode<synchronous>, transform_indices = @transform_12, window_bounds = array<i64: 16, 13>}, {transform_indices = @transform_13, window_bounds = array<i64: 1, 16, 256>}]} {
    %0 = tpu.iota {dimensions = array<i32: 1>} : vector<1x256xi32>
    %c16_i32 = arith.constant 16 : i32
    %c0_i32 = arith.constant 0 : i32
    %1 = arith.cmpi eq, %c16_i32, %c0_i32 : i32
    %c1_i32 = arith.constant 1 : i32
    %2 = arith.select %1, %c1_i32, %c16_i32 : i32
    %3 = vector.broadcast %2 : i32 to vector<1x256xi32>
    %4 = arith.remsi %0, %3 : vector<1x256xi32>
    %c0_i32_0 = arith.constant 0 : i32
    %5 = vector.broadcast %c0_i32_0 : i32 to vector<1x256xi32>
    %6 = arith.cmpi ne, %4, %5 : vector<1x256xi32>
    %c0_i32_1 = arith.constant 0 : i32
    %7 = vector.broadcast %c0_i32_1 : i32 to vector<1x256xi32>
    %8 = arith.cmpi slt, %4, %7 : vector<1x256xi32>
    %c0_i32_2 = arith.constant 0 : i32
    %9 = arith.cmpi slt, %2, %c0_i32_2 : i32
    %10 = vector.broadcast %9 : i1 to vector<1x256xi1>
    %11 = vector.broadcast %10 : vector<1x256xi1> to vector<1x256xi1>
    %12 = arith.xori %8, %11 : vector<1x256xi1>
    %13 = arith.andi %12, %6 : vector<1x256xi1>
    %14 = vector.broadcast %2 : i32 to vector<1x256xi32>
    %15 = arith.addi %4, %14 : vector<1x256xi32>
    %16 = arith.select %13, %15, %4 : vector<1x256xi1>, vector<1x256xi32>
    %c-4_i32 = arith.constant -4 : i32
    %17 = vector.broadcast %c-4_i32 : i32 to vector<1x256xi32>
    %18 = arith.addi %16, %17 : vector<1x256xi32>
    %c0_i32_3 = arith.constant 0 : i32
    %19 = vector.broadcast %c0_i32_3 : i32 to vector<1x256xi32>
    %20 = arith.cmpi sge, %18, %19 : vector<1x256xi32>
    %c-4_i32_4 = arith.constant -4 : i32
    %21 = vector.broadcast %c-4_i32_4 : i32 to vector<1x256xi32>
    %22 = arith.addi %16, %21 : vector<1x256xi32>
    %c16_i32_5 = arith.constant 16 : i32
    %23 = vector.broadcast %c16_i32_5 : i32 to vector<1x256xi32>
    %24 = arith.cmpi slt, %22, %23 : vector<1x256xi32>
    %25 = arith.andi %20, %24 : vector<1x256xi1>
    %c-3_i32 = arith.constant -3 : i32
    %26 = vector.broadcast %c-3_i32 : i32 to vector<1x256xi32>
    %27 = arith.addi %16, %26 : vector<1x256xi32>
    %c0_i32_6 = arith.constant 0 : i32
    %28 = vector.broadcast %c0_i32_6 : i32 to vector<1x256xi32>
    %29 = arith.cmpi sge, %27, %28 : vector<1x256xi32>
    %c-3_i32_7 = arith.constant -3 : i32
    %30 = vector.broadcast %c-3_i32_7 : i32 to vector<1x256xi32>
    %31 = arith.addi %16, %30 : vector<1x256xi32>
    %c16_i32_8 = arith.constant 16 : i32
    %32 = vector.broadcast %c16_i32_8 : i32 to vector<1x256xi32>
    %33 = arith.cmpi slt, %31, %32 : vector<1x256xi32>
    %34 = arith.andi %29, %33 : vector<1x256xi1>
    %c-2_i32 = arith.constant -2 : i32
    %35 = vector.broadcast %c-2_i32 : i32 to vector<1x256xi32>
    %36 = arith.addi %16, %35 : vector<1x256xi32>
    %c0_i32_9 = arith.constant 0 : i32
    %37 = vector.broadcast %c0_i32_9 : i32 to vector<1x256xi32>
    %38 = arith.cmpi sge, %36, %37 : vector<1x256xi32>
    %c-2_i32_10 = arith.constant -2 : i32
    %39 = vector.broadcast %c-2_i32_10 : i32 to vector<1x256xi32>
    %40 = arith.addi %16, %39 : vector<1x256xi32>
    %c16_i32_11 = arith.constant 16 : i32
    %41 = vector.broadcast %c16_i32_11 : i32 to vector<1x256xi32>
    %42 = arith.cmpi slt, %40, %41 : vector<1x256xi32>
    %43 = arith.andi %38, %42 : vector<1x256xi1>
    %c-1_i32 = arith.constant -1 : i32
    %44 = vector.broadcast %c-1_i32 : i32 to vector<1x256xi32>
    %45 = arith.addi %16, %44 : vector<1x256xi32>
    %c0_i32_12 = arith.constant 0 : i32
    %46 = vector.broadcast %c0_i32_12 : i32 to vector<1x256xi32>
    %47 = arith.cmpi sge, %45, %46 : vector<1x256xi32>
    %c-1_i32_13 = arith.constant -1 : i32
    %48 = vector.broadcast %c-1_i32_13 : i32 to vector<1x256xi32>
    %49 = arith.addi %16, %48 : vector<1x256xi32>
    %c16_i32_14 = arith.constant 16 : i32
    %50 = vector.broadcast %c16_i32_14 : i32 to vector<1x256xi32>
    %51 = arith.cmpi slt, %49, %50 : vector<1x256xi32>
    %52 = arith.andi %47, %51 : vector<1x256xi1>
    %c1_i32_15 = arith.constant 1 : i32
    %53 = vector.broadcast %c1_i32_15 : i32 to vector<1x256xi32>
    %54 = arith.addi %16, %53 : vector<1x256xi32>
    %c0_i32_16 = arith.constant 0 : i32
    %55 = vector.broadcast %c0_i32_16 : i32 to vector<1x256xi32>
    %56 = arith.cmpi sge, %54, %55 : vector<1x256xi32>
    %c1_i32_17 = arith.constant 1 : i32
    %57 = vector.broadcast %c1_i32_17 : i32 to vector<1x256xi32>
    %58 = arith.addi %16, %57 : vector<1x256xi32>
    %c16_i32_18 = arith.constant 16 : i32
    %59 = vector.broadcast %c16_i32_18 : i32 to vector<1x256xi32>
    %60 = arith.cmpi slt, %58, %59 : vector<1x256xi32>
    %61 = arith.andi %56, %60 : vector<1x256xi1>
    %c2_i32 = arith.constant 2 : i32
    %62 = vector.broadcast %c2_i32 : i32 to vector<1x256xi32>
    %63 = arith.addi %16, %62 : vector<1x256xi32>
    %c0_i32_19 = arith.constant 0 : i32
    %64 = vector.broadcast %c0_i32_19 : i32 to vector<1x256xi32>
    %65 = arith.cmpi sge, %63, %64 : vector<1x256xi32>
    %c2_i32_20 = arith.constant 2 : i32
    %66 = vector.broadcast %c2_i32_20 : i32 to vector<1x256xi32>
    %67 = arith.addi %16, %66 : vector<1x256xi32>
    %c16_i32_21 = arith.constant 16 : i32
    %68 = vector.broadcast %c16_i32_21 : i32 to vector<1x256xi32>
    %69 = arith.cmpi slt, %67, %68 : vector<1x256xi32>
    %70 = arith.andi %65, %69 : vector<1x256xi1>
    %c3_i32 = arith.constant 3 : i32
    %71 = vector.broadcast %c3_i32 : i32 to vector<1x256xi32>
    %72 = arith.addi %16, %71 : vector<1x256xi32>
    %c0_i32_22 = arith.constant 0 : i32
    %73 = vector.broadcast %c0_i32_22 : i32 to vector<1x256xi32>
    %74 = arith.cmpi sge, %72, %73 : vector<1x256xi32>
    %c3_i32_23 = arith.constant 3 : i32
    %75 = vector.broadcast %c3_i32_23 : i32 to vector<1x256xi32>
    %76 = arith.addi %16, %75 : vector<1x256xi32>
    %c16_i32_24 = arith.constant 16 : i32
    %77 = vector.broadcast %c16_i32_24 : i32 to vector<1x256xi32>
    %78 = arith.cmpi slt, %76, %77 : vector<1x256xi32>
    %79 = arith.andi %74, %78 : vector<1x256xi1>
    %c4_i32 = arith.constant 4 : i32
    %80 = vector.broadcast %c4_i32 : i32 to vector<1x256xi32>
    %81 = arith.addi %16, %80 : vector<1x256xi32>
    %c0_i32_25 = arith.constant 0 : i32
    %82 = vector.broadcast %c0_i32_25 : i32 to vector<1x256xi32>
    %83 = arith.cmpi sge, %81, %82 : vector<1x256xi32>
    %c4_i32_26 = arith.constant 4 : i32
    %84 = vector.broadcast %c4_i32_26 : i32 to vector<1x256xi32>
    %85 = arith.addi %16, %84 : vector<1x256xi32>
    %c16_i32_27 = arith.constant 16 : i32
    %86 = vector.broadcast %c16_i32_27 : i32 to vector<1x256xi32>
    %87 = arith.cmpi slt, %85, %86 : vector<1x256xi32>
    %88 = arith.andi %83, %87 : vector<1x256xi1>
    %c0 = arith.constant 0 : index
    %c0_28 = arith.constant 0 : index
    %c0_29 = arith.constant 0 : index
    %89 = vector.load %arg1[%c0, %c0_28, %c0_29] : memref<1x16x256xf32, #tpu.memory_space<vmem>>, vector<1x16x256xf32>
    %90 = vector.shape_cast %89 : vector<1x16x256xf32> to vector<16x256xf32>
    %c48 = arith.constant 48 : index
    %c0_30 = arith.constant 0 : index
    %91 = vector.load %arg15[%c48, %c0_30] : memref<64x256xf32, #tpu.memory_space<vmem>>, vector<16x256xf32>
    tpu.vector_store %arg15[%c48, %c0_30], %90 {strides = array<i32>} : memref<64x256xf32, #tpu.memory_space<vmem>>, vector<16x256xf32>,
    %c48_31 = arith.constant 48 : index
    %c0_32 = arith.constant 0 : index
    %92 = vector.load %arg15[%c48_31, %c0_32] : memref<64x256xf32, #tpu.memory_space<vmem>>, vector<16x256xf32>
    %c16_i32_33 = arith.constant 16 : i32
    %93 = vector.broadcast %c16_i32_33 : i32 to vector<1x256xi32>
    %94 = arith.cmpi sge, %0, %93 : vector<1x256xi32>
    %95 = arith.andi %94, %52 : vector<1x256xi1>
    %96 = arith.andi %94, %61 : vector<1x256xi1>
    %c17_i32 = arith.constant 17 : i32
    %97 = tpu.dynamic_rotate %92 by %c17_i32 dim 1 : vector<16x256xf32>, i32 -> vector<16x256xf32>
    %cst = arith.constant 0.000000e+00 : f32
    %98 = vector.shape_cast %95 : vector<1x256xi1> to vector<1x256xi1>
    %99 = vector.broadcast %98 : vector<1x256xi1> to vector<16x256xi1>
    %100 = vector.broadcast %cst : f32 to vector<16x256xf32>
    %101 = arith.select %99, %97, %100 : vector<16x256xi1>, vector<16x256xf32>
    %c0_34 = arith.constant 0 : index
    %c0_35 = arith.constant 0 : index
    %c0_36 = arith.constant 0 : index
    %102 = vector.load %arg2[%c0_34, %c0_35, %c0_36] : memref<6x16x16xf32, #tpu.memory_space<vmem>>, vector<1x16x16xf32>
    %103 = vector.shape_cast %102 : vector<1x16x16xf32> to vector<16x16xf32>
    %cst_37 = arith.constant dense<0.000000e+00> : vector<16x256xf32>
    %104 = tpu.matmul %103, %101, %cst_37 {dimension_numbers = #tpu.dot_dimension_numbers<[1], [0], [0], [1], [0, 0, 1, 1], [], []>} : vector<16x16xf32>, vector<16x256xf32>, vector<16x256xf32> -> vector<16x256xf32>
    %c16_i32_38 = arith.constant 16 : i32
    %105 = tpu.dynamic_rotate %92 by %c16_i32_38 dim 1 : vector<16x256xf32>, i32 -> vector<16x256xf32>
    %cst_39 = arith.constant 0.000000e+00 : f32
    %106 = vector.shape_cast %94 : vector<1x256xi1> to vector<1x256xi1>
    %107 = vector.broadcast %106 : vector<1x256xi1> to vector<16x256xi1>
    %108 = vector.broadcast %cst_39 : f32 to vector<16x256xf32>
    %109 = arith.select %107, %105, %108 : vector<16x256xi1>, vector<16x256xf32>
    %c1 = arith.constant 1 : index
    %c0_40 = arith.constant 0 : index
    %c0_41 = arith.constant 0 : index
    %110 = vector.load %arg2[%c1, %c0_40, %c0_41] : memref<6x16x16xf32, #tpu.memory_space<vmem>>, vector<1x16x16xf32>
    %111 = vector.shape_cast %110 : vector<1x16x16xf32> to vector<16x16xf32>
    %cst_42 = arith.constant dense<0.000000e+00> : vector<16x256xf32>
    %112 = tpu.matmul %111, %109, %cst_42 {dimension_numbers = #tpu.dot_dimension_numbers<[1], [0], [0], [1], [0, 0, 1, 1], [], []>} : vector<16x16xf32>, vector<16x256xf32>, vector<16x256xf32> -> vector<16x256xf32>
    %113 = arith.addf %104, %112 : vector<16x256xf32>
    %c15_i32 = arith.constant 15 : i32
    %114 = tpu.dynamic_rotate %92 by %c15_i32 dim 1 : vector<16x256xf32>, i32 -> vector<16x256xf32>
    %cst_43 = arith.constant 0.000000e+00 : f32
    %115 = vector.shape_cast %96 : vector<1x256xi1> to vector<1x256xi1>
    %116 = vector.broadcast %115 : vector<1x256xi1> to vector<16x256xi1>
    %117 = vector.broadcast %cst_43 : f32 to vector<16x256xf32>
    %118 = arith.select %116, %114, %117 : vector<16x256xi1>, vector<16x256xf32>
    %c2 = arith.constant 2 : index
    %c0_44 = arith.constant 0 : index
    %c0_45 = arith.constant 0 : index
    %119 = vector.load %arg2[%c2, %c0_44, %c0_45] : memref<6x16x16xf32, #tpu.memory_space<vmem>>, vector<1x16x16xf32>
    %120 = vector.shape_cast %119 : vector<1x16x16xf32> to vector<16x16xf32>
    %cst_46 = arith.constant dense<0.000000e+00> : vector<16x256xf32>
    %121 = tpu.matmul %120, %118, %cst_46 {dimension_numbers = #tpu.dot_dimension_numbers<[1], [0], [0], [1], [0, 0, 1, 1], [], []>} : vector<16x16xf32>, vector<16x256xf32>, vector<16x256xf32> -> vector<16x256xf32>
    %122 = arith.addf %113, %121 : vector<16x256xf32>
    %c1_i32_47 = arith.constant 1 : i32
    %123 = tpu.dynamic_rotate %92 by %c1_i32_47 dim 1 : vector<16x256xf32>, i32 -> vector<16x256xf32>
    %cst_48 = arith.constant 0.000000e+00 : f32
    %124 = vector.shape_cast %52 : vector<1x256xi1> to vector<1x256xi1>
    %125 = vector.broadcast %124 : vector<1x256xi1> to vector<16x256xi1>
    %126 = vector.broadcast %cst_48 : f32 to vector<16x256xf32>
    %127 = arith.select %125, %123, %126 : vector<16x256xi1>, vector<16x256xf32>
    %c3 = arith.constant 3 : index
    %c0_49 = arith.constant 0 : index
    %c0_50 = arith.constant 0 : index
    %128 = vector.load %arg2[%c3, %c0_49, %c0_50] : memref<6x16x16xf32, #tpu.memory_space<vmem>>, vector<1x16x16xf32>
    %129 = vector.shape_cast %128 : vector<1x16x16xf32> to vector<16x16xf32>
    %cst_51 = arith.constant dense<0.000000e+00> : vector<16x256xf32>
    %130 = tpu.matmul %129, %127, %cst_51 {dimension_numbers = #tpu.dot_dimension_numbers<[1], [0], [0], [1], [0, 0, 1, 1], [], []>} : vector<16x16xf32>, vector<16x256xf32>, vector<16x256xf32> -> vector<16x256xf32>
    %131 = arith.addf %122, %130 : vector<16x256xf32>
    %c4 = arith.constant 4 : index
    %c0_52 = arith.constant 0 : index
    %c0_53 = arith.constant 0 : index
    %132 = vector.load %arg2[%c4, %c0_52, %c0_53] : memref<6x16x16xf32, #tpu.memory_space<vmem>>, vector<1x16x16xf32>
    %133 = vector.shape_cast %132 : vector<1x16x16xf32> to vector<16x16xf32>
    %cst_54 = arith.constant dense<0.000000e+00> : vector<16x256xf32>
    %134 = tpu.matmul %133, %92, %cst_54 {dimension_numbers = #tpu.dot_dimension_numbers<[1], [0], [0], [1], [0, 0, 1, 1], [], []>} : vector<16x16xf32>, vector<16x256xf32>, vector<16x256xf32> -> vector<16x256xf32>
    %135 = arith.addf %131, %134 : vector<16x256xf32>
    %c255_i32 = arith.constant 255 : i32
    %136 = tpu.dynamic_rotate %92 by %c255_i32 dim 1 : vector<16x256xf32>, i32 -> vector<16x256xf32>
    %cst_55 = arith.constant 0.000000e+00 : f32
    %137 = vector.shape_cast %61 : vector<1x256xi1> to vector<1x256xi1>
    %138 = vector.broadcast %137 : vector<1x256xi1> to vector<16x256xi1>
    %139 = vector.broadcast %cst_55 : f32 to vector<16x256xf32>
    %140 = arith.select %138, %136, %139 : vector<16x256xi1>, vector<16x256xf32>
    %c5 = arith.constant 5 : index
    %c0_56 = arith.constant 0 : index
    %c0_57 = arith.constant 0 : index
    %141 = vector.load %arg2[%c5, %c0_56, %c0_57] : memref<6x16x16xf32, #tpu.memory_space<vmem>>, vector<1x16x16xf32>
    %142 = vector.shape_cast %141 : vector<1x16x16xf32> to vector<16x16xf32>
    %cst_58 = arith.constant dense<0.000000e+00> : vector<16x256xf32>
    %143 = tpu.matmul %142, %140, %cst_58 {dimension_numbers = #tpu.dot_dimension_numbers<[1], [0], [0], [1], [0, 0, 1, 1], [], []>} : vector<16x16xf32>, vector<16x256xf32>, vector<16x256xf32> -> vector<16x256xf32>
    %144 = arith.addf %135, %143 : vector<16x256xf32>
    %cst_59 = arith.constant dense<0.000000e+00> : vector<16xf32>
    %145 = vector.multi_reduction <add>, %144, %cst_59 [1] : vector<16x256xf32> to vector<16xf32>
    %146 = vector.shape_cast %145 : vector<16xf32> to vector<16x1xf32>
    %147 = arith.mulf %144, %144 : vector<16x256xf32>
    %cst_60 = arith.constant dense<0.000000e+00> : vector<16xf32>
    %148 = vector.multi_reduction <add>, %147, %cst_60 [1] : vector<16x256xf32> to vector<16xf32>
    %149 = vector.shape_cast %148 : vector<16xf32> to vector<16x1xf32>
    %cst_61 = arith.constant 3.906250e-03 : f32
    %150 = vector.broadcast %cst_61 : f32 to vector<16x1xf32>
    %151 = arith.mulf %146, %150 : vector<16x1xf32>
    %cst_62 = arith.constant 3.906250e-03 : f32
    %152 = vector.broadcast %cst_62 : f32 to vector<16x1xf32>
    %153 = arith.mulf %149, %152 : vector<16x1xf32>
    %154 = arith.mulf %151, %151 : vector<16x1xf32>
    %155 = arith.subf %153, %154 : vector<16x1xf32>
    %c0_63 = arith.constant 0 : index
    %c0_64 = arith.constant 0 : index
    %156 = vector.load %arg4[%c0_63, %c0_64] : memref<16x13xf32, #tpu.memory_space<vmem>>, vector<16x1xf32>
    %cst_65 = arith.constant 9.99999974E-6 : f32
    %157 = vector.broadcast %cst_65 : f32 to vector<16x1xf32>
    %158 = arith.addf %155, %157 : vector<16x1xf32>
    %159 = math.rsqrt %158 : vector<16x1xf32>
    %160 = arith.mulf %156, %159 : vector<16x1xf32>
    %c0_66 = arith.constant 0 : index
    %c1_67 = arith.constant 1 : index
    %161 = vector.load %arg4[%c0_66, %c1_67] : memref<16x13xf32, #tpu.memory_space<vmem>>, vector<16x1xf32>
    %162 = arith.mulf %151, %160 : vector<16x1xf32>
    %163 = arith.subf %161, %162 : vector<16x1xf32>
    %164 = vector.broadcast %160 : vector<16x1xf32> to vector<16x256xf32>
    %165 = arith.mulf %144, %164 : vector<16x256xf32>
    %166 = vector.broadcast %163 : vector<16x1xf32> to vector<16x256xf32>
    %167 = arith.addf %165, %166 : vector<16x256xf32>
    %cst_68 = arith.constant 0.000000e+00 : f32
    %168 = vector.broadcast %cst_68 : f32 to vector<16x256xf32>
    %169 = arith.cmpf oge, %167, %168 : vector<16x256xf32>
    %c0_69 = arith.constant 0 : index
    %c2_70 = arith.constant 2 : index
    %170 = vector.load %arg4[%c0_69, %c2_70] : memref<16x13xf32, #tpu.memory_space<vmem>>, vector<16x1xf32>
    %171 = vector.broadcast %170 : vector<16x1xf32> to vector<16x256xf32>
    %172 = arith.mulf %171, %167 : vector<16x256xf32>
    %173 = arith.select %169, %167, %172 : vector<16x256xi1>, vector<16x256xf32>
    %c0_71 = arith.constant 0 : index
    %c0_72 = arith.constant 0 : index
    %c0_73 = arith.constant 0 : index
    %174 = vector.load %arg3[%c0_71, %c0_72, %c0_73] : memref<2x16x16xf32, #tpu.memory_space<vmem>>, vector<1x16x16xf32>
    %175 = vector.shape_cast %174 : vector<1x16x16xf32> to vector<16x16xf32>
    %cst_74 = arith.constant dense<0.000000e+00> : vector<16x256xf32>
    %176 = tpu.matmul %175, %173, %cst_74 {dimension_numbers = #tpu.dot_dimension_numbers<[1], [0], [0], [1], [0, 0, 1, 1], [], []>} : vector<16x16xf32>, vector<16x256xf32>, vector<16x256xf32> -> vector<16x256xf32>
    %c0_75 = arith.constant 0 : index
    %c3_76 = arith.constant 3 : index
    %177 = vector.load %arg4[%c0_75, %c3_76] : memref<16x13xf32, #tpu.memory_space<vmem>>, vector<16x1xf32>
    %178 = vector.broadcast %177 : vector<16x1xf32> to vector<16x256xf32>
    %179 = arith.addf %176, %178 : vector<16x256xf32>
    %cst_77 = arith.constant 0.000000e+00 : f32
    %180 = vector.broadcast %cst_77 : f32 to vector<16x256xf32>
    %181 = arith.maximumf %179, %180 : vector<16x256xf32>
    %c1_78 = arith.constant 1 : index
    %c0_79 = arith.constant 0 : index
    %c0_80 = arith.constant 0 : index
    %182 = vector.load %arg3[%c1_78, %c0_79, %c0_80] : memref<2x16x16xf32, #tpu.memory_space<vmem>>, vector<1x16x16xf32>
    %183 = vector.shape_cast %182 : vector<1x16x16xf32> to vector<16x16xf32>
    %cst_81 = arith.constant dense<0.000000e+00> : vector<16x256xf32>
    %184 = tpu.matmul %183, %181, %cst_81 {dimension_numbers = #tpu.dot_dimension_numbers<[1], [0], [0], [1], [0, 0, 1, 1], [], []>} : vector<16x16xf32>, vector<16x256xf32>, vector<16x256xf32> -> vector<16x256xf32>
    %c4_i32_82 = arith.constant 4 : i32
    %185 = tpu.dynamic_rotate %184 by %c4_i32_82 dim 1 : vector<16x256xf32>, i32 -> vector<16x256xf32>
    %cst_83 = arith.constant 0.000000e+00 : f32
    %186 = vector.shape_cast %25 : vector<1x256xi1> to vector<1x256xi1>
    %187 = vector.broadcast %186 : vector<1x256xi1> to vector<16x256xi1>
    %188 = vector.broadcast %cst_83 : f32 to vector<16x256xf32>
    %189 = arith.select %187, %185, %188 : vector<16x256xi1>, vector<16x256xf32>
    %c0_84 = arith.constant 0 : index
    %c4_85 = arith.constant 4 : index
    %190 = vector.load %arg4[%c0_84, %c4_85] : memref<16x13xf32, #tpu.memory_space<vmem>>, vector<16x1xf32>
    %191 = vector.broadcast %190 : vector<16x1xf32> to vector<16x256xf32>
    %192 = arith.mulf %191, %189 : vector<16x256xf32>
    %c3_i32_86 = arith.constant 3 : i32
    %193 = tpu.dynamic_rotate %184 by %c3_i32_86 dim 1 : vector<16x256xf32>, i32 -> vector<16x256xf32>
    %cst_87 = arith.constant 0.000000e+00 : f32
    %194 = vector.shape_cast %34 : vector<1x256xi1> to vector<1x256xi1>
    %195 = vector.broadcast %194 : vector<1x256xi1> to vector<16x256xi1>
    %196 = vector.broadcast %cst_87 : f32 to vector<16x256xf32>
    %197 = arith.select %195, %193, %196 : vector<16x256xi1>, vector<16x256xf32>
    %c0_88 = arith.constant 0 : index
    %c5_89 = arith.constant 5 : index
    %198 = vector.load %arg4[%c0_88, %c5_89] : memref<16x13xf32, #tpu.memory_space<vmem>>, vector<16x1xf32>
    %199 = vector.broadcast %198 : vector<16x1xf32> to vector<16x256xf32>
    %200 = arith.mulf %199, %197 : vector<16x256xf32>
    %201 = arith.addf %192, %200 : vector<16x256xf32>
    %c2_i32_90 = arith.constant 2 : i32
    %202 = tpu.dynamic_rotate %184 by %c2_i32_90 dim 1 : vector<16x256xf32>, i32 -> vector<16x256xf32>
    %cst_91 = arith.constant 0.000000e+00 : f32
    %203 = vector.shape_cast %43 : vector<1x256xi1> to vector<1x256xi1>
    %204 = vector.broadcast %203 : vector<1x256xi1> to vector<16x256xi1>
    %205 = vector.broadcast %cst_91 : f32 to vector<16x256xf32>
    %206 = arith.select %204, %202, %205 : vector<16x256xi1>, vector<16x256xf32>
    %c0_92 = arith.constant 0 : index
    %c6 = arith.constant 6 : index
    %207 = vector.load %arg4[%c0_92, %c6] : memref<16x13xf32, #tpu.memory_space<vmem>>, vector<16x1xf32>
    %208 = vector.broadcast %207 : vector<16x1xf32> to vector<16x256xf32>
    %209 = arith.mulf %208, %206 : vector<16x256xf32>
    %210 = arith.addf %201, %209 : vector<16x256xf32>
    %c1_i32_93 = arith.constant 1 : i32
    %211 = tpu.dynamic_rotate %184 by %c1_i32_93 dim 1 : vector<16x256xf32>, i32 -> vector<16x256xf32>
    %cst_94 = arith.constant 0.000000e+00 : f32
    %212 = vector.shape_cast %52 : vector<1x256xi1> to vector<1x256xi1>
    %213 = vector.broadcast %212 : vector<1x256xi1> to vector<16x256xi1>
    %214 = vector.broadcast %cst_94 : f32 to vector<16x256xf32>
    %215 = arith.select %213, %211, %214 : vector<16x256xi1>, vector<16x256xf32>
    %c0_95 = arith.constant 0 : index
    %c7 = arith.constant 7 : index
    %216 = vector.load %arg4[%c0_95, %c7] : memref<16x13xf32, #tpu.memory_space<vmem>>, vector<16x1xf32>
    %217 = vector.broadcast %216 : vector<16x1xf32> to vector<16x256xf32>
    %218 = arith.mulf %217, %215 : vector<16x256xf32>
    %219 = arith.addf %210, %218 : vector<16x256xf32>
    %c0_96 = arith.constant 0 : index
    %c8 = arith.constant 8 : index
    %220 = vector.load %arg4[%c0_96, %c8] : memref<16x13xf32, #tpu.memory_space<vmem>>, vector<16x1xf32>
    %221 = vector.broadcast %220 : vector<16x1xf32> to vector<16x256xf32>
    %222 = arith.mulf %221, %184 : vector<16x256xf32>
    %223 = arith.addf %219, %222 : vector<16x256xf32>
    %c255_i32_97 = arith.constant 255 : i32
    %224 = tpu.dynamic_rotate %184 by %c255_i32_97 dim 1 : vector<16x256xf32>, i32 -> vector<16x256xf32>
    %cst_98 = arith.constant 0.000000e+00 : f32
    %225 = vector.shape_cast %61 : vector<1x256xi1> to vector<1x256xi1>
    %226 = vector.broadcast %225 : vector<1x256xi1> to vector<16x256xi1>
    %227 = vector.broadcast %cst_98 : f32 to vector<16x256xf32>
    %228 = arith.select %226, %224, %227 : vector<16x256xi1>, vector<16x256xf32>
    %c0_99 = arith.constant 0 : index
    %c9 = arith.constant 9 : index
    %229 = vector.load %arg4[%c0_99, %c9] : memref<16x13xf32, #tpu.memory_space<vmem>>, vector<16x1xf32>
    %230 = vector.broadcast %229 : vector<16x1xf32> to vector<16x256xf32>
    %231 = arith.mulf %230, %228 : vector<16x256xf32>
    %232 = arith.addf %223, %231 : vector<16x256xf32>
    %c254_i32 = arith.constant 254 : i32
    %233 = tpu.dynamic_rotate %184 by %c254_i32 dim 1 : vector<16x256xf32>, i32 -> vector<16x256xf32>
    %cst_100 = arith.constant 0.000000e+00 : f32
    %234 = vector.shape_cast %70 : vector<1x256xi1> to vector<1x256xi1>
    %235 = vector.broadcast %234 : vector<1x256xi1> to vector<16x256xi1>
    %236 = vector.broadcast %cst_100 : f32 to vector<16x256xf32>
    %237 = arith.select %235, %233, %236 : vector<16x256xi1>, vector<16x256xf32>
    %c0_101 = arith.constant 0 : index
    %c10 = arith.constant 10 : index
    %238 = vector.load %arg4[%c0_101, %c10] : memref<16x13xf32, #tpu.memory_space<vmem>>, vector<16x1xf32>
    %239 = vector.broadcast %238 : vector<16x1xf32> to vector<16x256xf32>
    %240 = arith.mulf %239, %237 : vector<16x256xf32>
    %241 = arith.addf %232, %240 : vector<16x256xf32>
    %c253_i32 = arith.constant 253 : i32
    %242 = tpu.dynamic_rotate %184 by %c253_i32 dim 1 : vector<16x256xf32>, i32 -> vector<16x256xf32>
    %cst_102 = arith.constant 0.000000e+00 : f32
    %243 = vector.shape_cast %79 : vector<1x256xi1> to vector<1x256xi1>
    %244 = vector.broadcast %243 : vector<1x256xi1> to vector<16x256xi1>
    %245 = vector.broadcast %cst_102 : f32 to vector<16x256xf32>
    %246 = arith.select %244, %242, %245 : vector<16x256xi1>, vector<16x256xf32>
    %c0_103 = arith.constant 0 : index
    %c11 = arith.constant 11 : index
    %247 = vector.load %arg4[%c0_103, %c11] : memref<16x13xf32, #tpu.memory_space<vmem>>, vector<16x1xf32>
    %248 = vector.broadcast %247 : vector<16x1xf32> to vector<16x256xf32>
    %249 = arith.mulf %248, %246 : vector<16x256xf32>
    %250 = arith.addf %241, %249 : vector<16x256xf32>
    %c252_i32 = arith.constant 252 : i32
    %251 = tpu.dynamic_rotate %184 by %c252_i32 dim 1 : vector<16x256xf32>, i32 -> vector<16x256xf32>
    %cst_104 = arith.constant 0.000000e+00 : f32
    %252 = vector.shape_cast %88 : vector<1x256xi1> to vector<1x256xi1>
    %253 = vector.broadcast %252 : vector<1x256xi1> to vector<16x256xi1>
    %254 = vector.broadcast %cst_104 : f32 to vector<16x256xf32>
    %255 = arith.select %253, %251, %254 : vector<16x256xi1>, vector<16x256xf32>
    %c0_105 = arith.constant 0 : index
    %c12 = arith.constant 12 : index
    %256 = vector.load %arg4[%c0_105, %c12] : memref<16x13xf32, #tpu.memory_space<vmem>>, vector<16x1xf32>
    %257 = vector.broadcast %256 : vector<16x1xf32> to vector<16x256xf32>
    %258 = arith.mulf %257, %255 : vector<16x256xf32>
    %259 = arith.addf %250, %258 : vector<16x256xf32>
    %260 = arith.addf %173, %184 : vector<16x256xf32>
    %261 = arith.addf %260, %259 : vector<16x256xf32>
    %c32 = arith.constant 32 : index
    %c0_106 = arith.constant 0 : index
    %262 = vector.load %arg15[%c32, %c0_106] : memref<64x256xf32, #tpu.memory_space<vmem>>, vector<16x256xf32>
    tpu.vector_store %arg15[%c32, %c0_106], %261 {strides = array<i32>} : memref<64x256xf32, #tpu.memory_space<vmem>>, vector<16x256xf32>,
    %c32_107 = arith.constant 32 : index
    %c0_108 = arith.constant 0 : index
    %263 = vector.load %arg15[%c32_107, %c0_108] : memref<64x256xf32, #tpu.memory_space<vmem>>, vector<32x256xf32>
    %c32_i32 = arith.constant 32 : i32
    %264 = vector.broadcast %c32_i32 : i32 to vector<1x256xi32>
    %265 = arith.cmpi sge, %0, %264 : vector<1x256xi32>
    %266 = arith.andi %265, %52 : vector<1x256xi1>
    %267 = arith.andi %265, %61 : vector<1x256xi1>
    %c33_i32 = arith.constant 33 : i32
    %268 = tpu.dynamic_rotate %263 by %c33_i32 dim 1 : vector<32x256xf32>, i32 -> vector<32x256xf32>
    %cst_109 = arith.constant 0.000000e+00 : f32
    %269 = vector.shape_cast %266 : vector<1x256xi1> to vector<1x256xi1>
    %270 = vector.broadcast %269 : vector<1x256xi1> to vector<32x256xi1>
    %271 = vector.broadcast %cst_109 : f32 to vector<32x256xf32>
    %272 = arith.select %270, %268, %271 : vector<32x256xi1>, vector<32x256xf32>
    %c0_110 = arith.constant 0 : index
    %c0_111 = arith.constant 0 : index
    %c0_112 = arith.constant 0 : index
    %273 = vector.load %arg5[%c0_110, %c0_111, %c0_112] : memref<6x16x32xf32, #tpu.memory_space<vmem>>, vector<1x16x32xf32>
    %274 = vector.shape_cast %273 : vector<1x16x32xf32> to vector<16x32xf32>
    %cst_113 = arith.constant dense<0.000000e+00> : vector<16x256xf32>
    %275 = tpu.matmul %274, %272, %cst_113 {dimension_numbers = #tpu.dot_dimension_numbers<[1], [0], [0], [1], [0, 0, 1, 1], [], []>} : vector<16x32xf32>, vector<32x256xf32>, vector<16x256xf32> -> vector<16x256xf32>
    %c32_i32_114 = arith.constant 32 : i32
    %276 = tpu.dynamic_rotate %263 by %c32_i32_114 dim 1 : vector<32x256xf32>, i32 -> vector<32x256xf32>
    %cst_115 = arith.constant 0.000000e+00 : f32
    %277 = vector.shape_cast %265 : vector<1x256xi1> to vector<1x256xi1>
    %278 = vector.broadcast %277 : vector<1x256xi1> to vector<32x256xi1>
    %279 = vector.broadcast %cst_115 : f32 to vector<32x256xf32>
    %280 = arith.select %278, %276, %279 : vector<32x256xi1>, vector<32x256xf32>
    %c1_116 = arith.constant 1 : index
    %c0_117 = arith.constant 0 : index
    %c0_118 = arith.constant 0 : index
    %281 = vector.load %arg5[%c1_116, %c0_117, %c0_118] : memref<6x16x32xf32, #tpu.memory_space<vmem>>, vector<1x16x32xf32>
    %282 = vector.shape_cast %281 : vector<1x16x32xf32> to vector<16x32xf32>
    %cst_119 = arith.constant dense<0.000000e+00> : vector<16x256xf32>
    %283 = tpu.matmul %282, %280, %cst_119 {dimension_numbers = #tpu.dot_dimension_numbers<[1], [0], [0], [1], [0, 0, 1, 1], [], []>} : vector<16x32xf32>, vector<32x256xf32>, vector<16x256xf32> -> vector<16x256xf32>
    %284 = arith.addf %275, %283 : vector<16x256xf32>
    %c31_i32 = arith.constant 31 : i32
    %285 = tpu.dynamic_rotate %263 by %c31_i32 dim 1 : vector<32x256xf32>, i32 -> vector<32x256xf32>
    %cst_120 = arith.constant 0.000000e+00 : f32
    %286 = vector.shape_cast %267 : vector<1x256xi1> to vector<1x256xi1>
    %287 = vector.broadcast %286 : vector<1x256xi1> to vector<32x256xi1>
    %288 = vector.broadcast %cst_120 : f32 to vector<32x256xf32>
    %289 = arith.select %287, %285, %288 : vector<32x256xi1>, vector<32x256xf32>
    %c2_121 = arith.constant 2 : index
    %c0_122 = arith.constant 0 : index
    %c0_123 = arith.constant 0 : index
    %290 = vector.load %arg5[%c2_121, %c0_122, %c0_123] : memref<6x16x32xf32, #tpu.memory_space<vmem>>, vector<1x16x32xf32>
    %291 = vector.shape_cast %290 : vector<1x16x32xf32> to vector<16x32xf32>
    %cst_124 = arith.constant dense<0.000000e+00> : vector<16x256xf32>
    %292 = tpu.matmul %291, %289, %cst_124 {dimension_numbers = #tpu.dot_dimension_numbers<[1], [0], [0], [1], [0, 0, 1, 1], [], []>} : vector<16x32xf32>, vector<32x256xf32>, vector<16x256xf32> -> vector<16x256xf32>
    %293 = arith.addf %284, %292 : vector<16x256xf32>
    %c1_i32_125 = arith.constant 1 : i32
    %294 = tpu.dynamic_rotate %263 by %c1_i32_125 dim 1 : vector<32x256xf32>, i32 -> vector<32x256xf32>
    %cst_126 = arith.constant 0.000000e+00 : f32
    %295 = vector.shape_cast %52 : vector<1x256xi1> to vector<1x256xi1>
    %296 = vector.broadcast %295 : vector<1x256xi1> to vector<32x256xi1>
    %297 = vector.broadcast %cst_126 : f32 to vector<32x256xf32>
    %298 = arith.select %296, %294, %297 : vector<32x256xi1>, vector<32x256xf32>
    %c3_127 = arith.constant 3 : index
    %c0_128 = arith.constant 0 : index
    %c0_129 = arith.constant 0 : index
    %299 = vector.load %arg5[%c3_127, %c0_128, %c0_129] : memref<6x16x32xf32, #tpu.memory_space<vmem>>, vector<1x16x32xf32>
    %300 = vector.shape_cast %299 : vector<1x16x32xf32> to vector<16x32xf32>
    %cst_130 = arith.constant dense<0.000000e+00> : vector<16x256xf32>
    %301 = tpu.matmul %300, %298, %cst_130 {dimension_numbers = #tpu.dot_dimension_numbers<[1], [0], [0], [1], [0, 0, 1, 1], [], []>} : vector<16x32xf32>, vector<32x256xf32>, vector<16x256xf32> -> vector<16x256xf32>
    %302 = arith.addf %293, %301 : vector<16x256xf32>
    %c4_131 = arith.constant 4 : index
    %c0_132 = arith.constant 0 : index
    %c0_133 = arith.constant 0 : index
    %303 = vector.load %arg5[%c4_131, %c0_132, %c0_133] : memref<6x16x32xf32, #tpu.memory_space<vmem>>, vector<1x16x32xf32>
    %304 = vector.shape_cast %303 : vector<1x16x32xf32> to vector<16x32xf32>
    %cst_134 = arith.constant dense<0.000000e+00> : vector<16x256xf32>
    %305 = tpu.matmul %304, %263, %cst_134 {dimension_numbers = #tpu.dot_dimension_numbers<[1], [0], [0], [1], [0, 0, 1, 1], [], []>} : vector<16x32xf32>, vector<32x256xf32>, vector<16x256xf32> -> vector<16x256xf32>
    %306 = arith.addf %302, %305 : vector<16x256xf32>
    %c255_i32_135 = arith.constant 255 : i32
    %307 = tpu.dynamic_rotate %263 by %c255_i32_135 dim 1 : vector<32x256xf32>, i32 -> vector<32x256xf32>
    %cst_136 = arith.constant 0.000000e+00 : f32
    %308 = vector.shape_cast %61 : vector<1x256xi1> to vector<1x256xi1>
    %309 = vector.broadcast %308 : vector<1x256xi1> to vector<32x256xi1>
    %310 = vector.broadcast %cst_136 : f32 to vector<32x256xf32>
    %311 = arith.select %309, %307, %310 : vector<32x256xi1>, vector<32x256xf32>
    %c5_137 = arith.constant 5 : index
    %c0_138 = arith.constant 0 : index
    %c0_139 = arith.constant 0 : index
    %312 = vector.load %arg5[%c5_137, %c0_138, %c0_139] : memref<6x16x32xf32, #tpu.memory_space<vmem>>, vector<1x16x32xf32>
    %313 = vector.shape_cast %312 : vector<1x16x32xf32> to vector<16x32xf32>
    %cst_140 = arith.constant dense<0.000000e+00> : vector<16x256xf32>
    %314 = tpu.matmul %313, %311, %cst_140 {dimension_numbers = #tpu.dot_dimension_numbers<[1], [0], [0], [1], [0, 0, 1, 1], [], []>} : vector<16x32xf32>, vector<32x256xf32>, vector<16x256xf32> -> vector<16x256xf32>
    %315 = arith.addf %306, %314 : vector<16x256xf32>
    %cst_141 = arith.constant dense<0.000000e+00> : vector<16xf32>
    %316 = vector.multi_reduction <add>, %315, %cst_141 [1] : vector<16x256xf32> to vector<16xf32>
    %317 = vector.shape_cast %316 : vector<16xf32> to vector<16x1xf32>
    %318 = arith.mulf %315, %315 : vector<16x256xf32>
    %cst_142 = arith.constant dense<0.000000e+00> : vector<16xf32>
    %319 = vector.multi_reduction <add>, %318, %cst_142 [1] : vector<16x256xf32> to vector<16xf32>
    %320 = vector.shape_cast %319 : vector<16xf32> to vector<16x1xf32>
    %cst_143 = arith.constant 3.906250e-03 : f32
    %321 = vector.broadcast %cst_143 : f32 to vector<16x1xf32>
    %322 = arith.mulf %317, %321 : vector<16x1xf32>
    %cst_144 = arith.constant 3.906250e-03 : f32
    %323 = vector.broadcast %cst_144 : f32 to vector<16x1xf32>
    %324 = arith.mulf %320, %323 : vector<16x1xf32>
    %325 = arith.mulf %322, %322 : vector<16x1xf32>
    %326 = arith.subf %324, %325 : vector<16x1xf32>
    %c0_145 = arith.constant 0 : index
    %c0_146 = arith.constant 0 : index
    %327 = vector.load %arg7[%c0_145, %c0_146] : memref<16x13xf32, #tpu.memory_space<vmem>>, vector<16x1xf32>
    %cst_147 = arith.constant 9.99999974E-6 : f32
    %328 = vector.broadcast %cst_147 : f32 to vector<16x1xf32>
    %329 = arith.addf %326, %328 : vector<16x1xf32>
    %330 = math.rsqrt %329 : vector<16x1xf32>
    %331 = arith.mulf %327, %330 : vector<16x1xf32>
    %c0_148 = arith.constant 0 : index
    %c1_149 = arith.constant 1 : index
    %332 = vector.load %arg7[%c0_148, %c1_149] : memref<16x13xf32, #tpu.memory_space<vmem>>, vector<16x1xf32>
    %333 = arith.mulf %322, %331 : vector<16x1xf32>
    %334 = arith.subf %332, %333 : vector<16x1xf32>
    %335 = vector.broadcast %331 : vector<16x1xf32> to vector<16x256xf32>
    %336 = arith.mulf %315, %335 : vector<16x256xf32>
    %337 = vector.broadcast %334 : vector<16x1xf32> to vector<16x256xf32>
    %338 = arith.addf %336, %337 : vector<16x256xf32>
    %cst_150 = arith.constant 0.000000e+00 : f32
    %339 = vector.broadcast %cst_150 : f32 to vector<16x256xf32>
    %340 = arith.cmpf oge, %338, %339 : vector<16x256xf32>
    %c0_151 = arith.constant 0 : index
    %c2_152 = arith.constant 2 : index
    %341 = vector.load %arg7[%c0_151, %c2_152] : memref<16x13xf32, #tpu.memory_space<vmem>>, vector<16x1xf32>
    %342 = vector.broadcast %341 : vector<16x1xf32> to vector<16x256xf32>
    %343 = arith.mulf %342, %338 : vector<16x256xf32>
    %344 = arith.select %340, %338, %343 : vector<16x256xi1>, vector<16x256xf32>
    %c0_153 = arith.constant 0 : index
    %c0_154 = arith.constant 0 : index
    %c0_155 = arith.constant 0 : index
    %345 = vector.load %arg6[%c0_153, %c0_154, %c0_155] : memref<2x16x16xf32, #tpu.memory_space<vmem>>, vector<1x16x16xf32>
    %346 = vector.shape_cast %345 : vector<1x16x16xf32> to vector<16x16xf32>
    %cst_156 = arith.constant dense<0.000000e+00> : vector<16x256xf32>
    %347 = tpu.matmul %346, %344, %cst_156 {dimension_numbers = #tpu.dot_dimension_numbers<[1], [0], [0], [1], [0, 0, 1, 1], [], []>} : vector<16x16xf32>, vector<16x256xf32>, vector<16x256xf32> -> vector<16x256xf32>
    %c0_157 = arith.constant 0 : index
    %c3_158 = arith.constant 3 : index
    %348 = vector.load %arg7[%c0_157, %c3_158] : memref<16x13xf32, #tpu.memory_space<vmem>>, vector<16x1xf32>
    %349 = vector.broadcast %348 : vector<16x1xf32> to vector<16x256xf32>
    %350 = arith.addf %347, %349 : vector<16x256xf32>
    %cst_159 = arith.constant 0.000000e+00 : f32
    %351 = vector.broadcast %cst_159 : f32 to vector<16x256xf32>
    %352 = arith.maximumf %350, %351 : vector<16x256xf32>
    %c1_160 = arith.constant 1 : index
    %c0_161 = arith.constant 0 : index
    %c0_162 = arith.constant 0 : index
    %353 = vector.load %arg6[%c1_160, %c0_161, %c0_162] : memref<2x16x16xf32, #tpu.memory_space<vmem>>, vector<1x16x16xf32>
    %354 = vector.shape_cast %353 : vector<1x16x16xf32> to vector<16x16xf32>
    %cst_163 = arith.constant dense<0.000000e+00> : vector<16x256xf32>
    %355 = tpu.matmul %354, %352, %cst_163 {dimension_numbers = #tpu.dot_dimension_numbers<[1], [0], [0], [1], [0, 0, 1, 1], [], []>} : vector<16x16xf32>, vector<16x256xf32>, vector<16x256xf32> -> vector<16x256xf32>
    %c4_i32_164 = arith.constant 4 : i32
    %356 = tpu.dynamic_rotate %355 by %c4_i32_164 dim 1 : vector<16x256xf32>, i32 -> vector<16x256xf32>
    %cst_165 = arith.constant 0.000000e+00 : f32
    %357 = vector.shape_cast %25 : vector<1x256xi1> to vector<1x256xi1>
    %358 = vector.broadcast %357 : vector<1x256xi1> to vector<16x256xi1>
    %359 = vector.broadcast %cst_165 : f32 to vector<16x256xf32>
    %360 = arith.select %358, %356, %359 : vector<16x256xi1>, vector<16x256xf32>
    %c0_166 = arith.constant 0 : index
    %c4_167 = arith.constant 4 : index
    %361 = vector.load %arg7[%c0_166, %c4_167] : memref<16x13xf32, #tpu.memory_space<vmem>>, vector<16x1xf32>
    %362 = vector.broadcast %361 : vector<16x1xf32> to vector<16x256xf32>
    %363 = arith.mulf %362, %360 : vector<16x256xf32>
    %c3_i32_168 = arith.constant 3 : i32
    %364 = tpu.dynamic_rotate %355 by %c3_i32_168 dim 1 : vector<16x256xf32>, i32 -> vector<16x256xf32>
    %cst_169 = arith.constant 0.000000e+00 : f32
    %365 = vector.shape_cast %34 : vector<1x256xi1> to vector<1x256xi1>
    %366 = vector.broadcast %365 : vector<1x256xi1> to vector<16x256xi1>
    %367 = vector.broadcast %cst_169 : f32 to vector<16x256xf32>
    %368 = arith.select %366, %364, %367 : vector<16x256xi1>, vector<16x256xf32>
    %c0_170 = arith.constant 0 : index
    %c5_171 = arith.constant 5 : index
    %369 = vector.load %arg7[%c0_170, %c5_171] : memref<16x13xf32, #tpu.memory_space<vmem>>, vector<16x1xf32>
    %370 = vector.broadcast %369 : vector<16x1xf32> to vector<16x256xf32>
    %371 = arith.mulf %370, %368 : vector<16x256xf32>
    %372 = arith.addf %363, %371 : vector<16x256xf32>
    %c2_i32_172 = arith.constant 2 : i32
    %373 = tpu.dynamic_rotate %355 by %c2_i32_172 dim 1 : vector<16x256xf32>, i32 -> vector<16x256xf32>
    %cst_173 = arith.constant 0.000000e+00 : f32
    %374 = vector.shape_cast %43 : vector<1x256xi1> to vector<1x256xi1>
    %375 = vector.broadcast %374 : vector<1x256xi1> to vector<16x256xi1>
    %376 = vector.broadcast %cst_173 : f32 to vector<16x256xf32>
    %377 = arith.select %375, %373, %376 : vector<16x256xi1>, vector<16x256xf32>
    %c0_174 = arith.constant 0 : index
    %c6_175 = arith.constant 6 : index
    %378 = vector.load %arg7[%c0_174, %c6_175] : memref<16x13xf32, #tpu.memory_space<vmem>>, vector<16x1xf32>
    %379 = vector.broadcast %378 : vector<16x1xf32> to vector<16x256xf32>
    %380 = arith.mulf %379, %377 : vector<16x256xf32>
    %381 = arith.addf %372, %380 : vector<16x256xf32>
    %c1_i32_176 = arith.constant 1 : i32
    %382 = tpu.dynamic_rotate %355 by %c1_i32_176 dim 1 : vector<16x256xf32>, i32 -> vector<16x256xf32>
    %cst_177 = arith.constant 0.000000e+00 : f32
    %383 = vector.shape_cast %52 : vector<1x256xi1> to vector<1x256xi1>
    %384 = vector.broadcast %383 : vector<1x256xi1> to vector<16x256xi1>
    %385 = vector.broadcast %cst_177 : f32 to vector<16x256xf32>
    %386 = arith.select %384, %382, %385 : vector<16x256xi1>, vector<16x256xf32>
    %c0_178 = arith.constant 0 : index
    %c7_179 = arith.constant 7 : index
    %387 = vector.load %arg7[%c0_178, %c7_179] : memref<16x13xf32, #tpu.memory_space<vmem>>, vector<16x1xf32>
    %388 = vector.broadcast %387 : vector<16x1xf32> to vector<16x256xf32>
    %389 = arith.mulf %388, %386 : vector<16x256xf32>
    %390 = arith.addf %381, %389 : vector<16x256xf32>
    %c0_180 = arith.constant 0 : index
    %c8_181 = arith.constant 8 : index
    %391 = vector.load %arg7[%c0_180, %c8_181] : memref<16x13xf32, #tpu.memory_space<vmem>>, vector<16x1xf32>
    %392 = vector.broadcast %391 : vector<16x1xf32> to vector<16x256xf32>
    %393 = arith.mulf %392, %355 : vector<16x256xf32>
    %394 = arith.addf %390, %393 : vector<16x256xf32>
    %c255_i32_182 = arith.constant 255 : i32
    %395 = tpu.dynamic_rotate %355 by %c255_i32_182 dim 1 : vector<16x256xf32>, i32 -> vector<16x256xf32>
    %cst_183 = arith.constant 0.000000e+00 : f32
    %396 = vector.shape_cast %61 : vector<1x256xi1> to vector<1x256xi1>
    %397 = vector.broadcast %396 : vector<1x256xi1> to vector<16x256xi1>
    %398 = vector.broadcast %cst_183 : f32 to vector<16x256xf32>
    %399 = arith.select %397, %395, %398 : vector<16x256xi1>, vector<16x256xf32>
    %c0_184 = arith.constant 0 : index
    %c9_185 = arith.constant 9 : index
    %400 = vector.load %arg7[%c0_184, %c9_185] : memref<16x13xf32, #tpu.memory_space<vmem>>, vector<16x1xf32>
    %401 = vector.broadcast %400 : vector<16x1xf32> to vector<16x256xf32>
    %402 = arith.mulf %401, %399 : vector<16x256xf32>
    %403 = arith.addf %394, %402 : vector<16x256xf32>
    %c254_i32_186 = arith.constant 254 : i32
    %404 = tpu.dynamic_rotate %355 by %c254_i32_186 dim 1 : vector<16x256xf32>, i32 -> vector<16x256xf32>
    %cst_187 = arith.constant 0.000000e+00 : f32
    %405 = vector.shape_cast %70 : vector<1x256xi1> to vector<1x256xi1>
    %406 = vector.broadcast %405 : vector<1x256xi1> to vector<16x256xi1>
    %407 = vector.broadcast %cst_187 : f32 to vector<16x256xf32>
    %408 = arith.select %406, %404, %407 : vector<16x256xi1>, vector<16x256xf32>
    %c0_188 = arith.constant 0 : index
    %c10_189 = arith.constant 10 : index
    %409 = vector.load %arg7[%c0_188, %c10_189] : memref<16x13xf32, #tpu.memory_space<vmem>>, vector<16x1xf32>
    %410 = vector.broadcast %409 : vector<16x1xf32> to vector<16x256xf32>
    %411 = arith.mulf %410, %408 : vector<16x256xf32>
    %412 = arith.addf %403, %411 : vector<16x256xf32>
    %c253_i32_190 = arith.constant 253 : i32
    %413 = tpu.dynamic_rotate %355 by %c253_i32_190 dim 1 : vector<16x256xf32>, i32 -> vector<16x256xf32>
    %cst_191 = arith.constant 0.000000e+00 : f32
    %414 = vector.shape_cast %79 : vector<1x256xi1> to vector<1x256xi1>
    %415 = vector.broadcast %414 : vector<1x256xi1> to vector<16x256xi1>
    %416 = vector.broadcast %cst_191 : f32 to vector<16x256xf32>
    %417 = arith.select %415, %413, %416 : vector<16x256xi1>, vector<16x256xf32>
    %c0_192 = arith.constant 0 : index
    %c11_193 = arith.constant 11 : index
    %418 = vector.load %arg7[%c0_192, %c11_193] : memref<16x13xf32, #tpu.memory_space<vmem>>, vector<16x1xf32>
    %419 = vector.broadcast %418 : vector<16x1xf32> to vector<16x256xf32>
    %420 = arith.mulf %419, %417 : vector<16x256xf32>
    %421 = arith.addf %412, %420 : vector<16x256xf32>
    %c252_i32_194 = arith.constant 252 : i32
    %422 = tpu.dynamic_rotate %355 by %c252_i32_194 dim 1 : vector<16x256xf32>, i32 -> vector<16x256xf32>
    %cst_195 = arith.constant 0.000000e+00 : f32
    %423 = vector.shape_cast %88 : vector<1x256xi1> to vector<1x256xi1>
    %424 = vector.broadcast %423 : vector<1x256xi1> to vector<16x256xi1>
    %425 = vector.broadcast %cst_195 : f32 to vector<16x256xf32>
    %426 = arith.select %424, %422, %425 : vector<16x256xi1>, vector<16x256xf32>
    %c0_196 = arith.constant 0 : index
    %c12_197 = arith.constant 12 : index
    %427 = vector.load %arg7[%c0_196, %c12_197] : memref<16x13xf32, #tpu.memory_space<vmem>>, vector<16x1xf32>
    %428 = vector.broadcast %427 : vector<16x1xf32> to vector<16x256xf32>
    %429 = arith.mulf %428, %426 : vector<16x256xf32>
    %430 = arith.addf %421, %429 : vector<16x256xf32>
    %431 = arith.addf %344, %355 : vector<16x256xf32>
    %432 = arith.addf %431, %430 : vector<16x256xf32>
    %c16 = arith.constant 16 : index
    %c0_198 = arith.constant 0 : index
    %433 = vector.load %arg15[%c16, %c0_198] : memref<64x256xf32, #tpu.memory_space<vmem>>, vector<16x256xf32>
    tpu.vector_store %arg15[%c16, %c0_198], %432 {strides = array<i32>} : memref<64x256xf32, #tpu.memory_space<vmem>>, vector<16x256xf32>,
    %c16_199 = arith.constant 16 : index
    %c0_200 = arith.constant 0 : index
    %434 = vector.load %arg15[%c16_199, %c0_200] : memref<64x256xf32, #tpu.memory_space<vmem>>, vector<48x256xf32>
    %c64_i32 = arith.constant 64 : i32
    %435 = vector.broadcast %c64_i32 : i32 to vector<1x256xi32>
    %436 = arith.cmpi sge, %0, %435 : vector<1x256xi32>
    %437 = arith.andi %436, %52 : vector<1x256xi1>
    %438 = arith.andi %436, %61 : vector<1x256xi1>
    %c65_i32 = arith.constant 65 : i32
    %439 = tpu.dynamic_rotate %434 by %c65_i32 dim 1 : vector<48x256xf32>, i32 -> vector<48x256xf32>
    %cst_201 = arith.constant 0.000000e+00 : f32
    %440 = vector.shape_cast %437 : vector<1x256xi1> to vector<1x256xi1>
    %441 = vector.broadcast %440 : vector<1x256xi1> to vector<48x256xi1>
    %442 = vector.broadcast %cst_201 : f32 to vector<48x256xf32>
    %443 = arith.select %441, %439, %442 : vector<48x256xi1>, vector<48x256xf32>
    %c0_202 = arith.constant 0 : index
    %c0_203 = arith.constant 0 : index
    %c0_204 = arith.constant 0 : index
    %444 = vector.load %arg8[%c0_202, %c0_203, %c0_204] : memref<6x16x48xf32, #tpu.memory_space<vmem>>, vector<1x16x48xf32>
    %445 = vector.shape_cast %444 : vector<1x16x48xf32> to vector<16x48xf32>
    %cst_205 = arith.constant dense<0.000000e+00> : vector<16x256xf32>
    %446 = tpu.matmul %445, %443, %cst_205 {dimension_numbers = #tpu.dot_dimension_numbers<[1], [0], [0], [1], [0, 0, 1, 1], [], []>} : vector<16x48xf32>, vector<48x256xf32>, vector<16x256xf32> -> vector<16x256xf32>
    %c64_i32_206 = arith.constant 64 : i32
    %447 = tpu.dynamic_rotate %434 by %c64_i32_206 dim 1 : vector<48x256xf32>, i32 -> vector<48x256xf32>
    %cst_207 = arith.constant 0.000000e+00 : f32
    %448 = vector.shape_cast %436 : vector<1x256xi1> to vector<1x256xi1>
    %449 = vector.broadcast %448 : vector<1x256xi1> to vector<48x256xi1>
    %450 = vector.broadcast %cst_207 : f32 to vector<48x256xf32>
    %451 = arith.select %449, %447, %450 : vector<48x256xi1>, vector<48x256xf32>
    %c1_208 = arith.constant 1 : index
    %c0_209 = arith.constant 0 : index
    %c0_210 = arith.constant 0 : index
    %452 = vector.load %arg8[%c1_208, %c0_209, %c0_210] : memref<6x16x48xf32, #tpu.memory_space<vmem>>, vector<1x16x48xf32>
    %453 = vector.shape_cast %452 : vector<1x16x48xf32> to vector<16x48xf32>
    %cst_211 = arith.constant dense<0.000000e+00> : vector<16x256xf32>
    %454 = tpu.matmul %453, %451, %cst_211 {dimension_numbers = #tpu.dot_dimension_numbers<[1], [0], [0], [1], [0, 0, 1, 1], [], []>} : vector<16x48xf32>, vector<48x256xf32>, vector<16x256xf32> -> vector<16x256xf32>
    %455 = arith.addf %446, %454 : vector<16x256xf32>
    %c63_i32 = arith.constant 63 : i32
    %456 = tpu.dynamic_rotate %434 by %c63_i32 dim 1 : vector<48x256xf32>, i32 -> vector<48x256xf32>
    %cst_212 = arith.constant 0.000000e+00 : f32
    %457 = vector.shape_cast %438 : vector<1x256xi1> to vector<1x256xi1>
    %458 = vector.broadcast %457 : vector<1x256xi1> to vector<48x256xi1>
    %459 = vector.broadcast %cst_212 : f32 to vector<48x256xf32>
    %460 = arith.select %458, %456, %459 : vector<48x256xi1>, vector<48x256xf32>
    %c2_213 = arith.constant 2 : index
    %c0_214 = arith.constant 0 : index
    %c0_215 = arith.constant 0 : index
    %461 = vector.load %arg8[%c2_213, %c0_214, %c0_215] : memref<6x16x48xf32, #tpu.memory_space<vmem>>, vector<1x16x48xf32>
    %462 = vector.shape_cast %461 : vector<1x16x48xf32> to vector<16x48xf32>
    %cst_216 = arith.constant dense<0.000000e+00> : vector<16x256xf32>
    %463 = tpu.matmul %462, %460, %cst_216 {dimension_numbers = #tpu.dot_dimension_numbers<[1], [0], [0], [1], [0, 0, 1, 1], [], []>} : vector<16x48xf32>, vector<48x256xf32>, vector<16x256xf32> -> vector<16x256xf32>
    %464 = arith.addf %455, %463 : vector<16x256xf32>
    %c1_i32_217 = arith.constant 1 : i32
    %465 = tpu.dynamic_rotate %434 by %c1_i32_217 dim 1 : vector<48x256xf32>, i32 -> vector<48x256xf32>
    %cst_218 = arith.constant 0.000000e+00 : f32
    %466 = vector.shape_cast %52 : vector<1x256xi1> to vector<1x256xi1>
    %467 = vector.broadcast %466 : vector<1x256xi1> to vector<48x256xi1>
    %468 = vector.broadcast %cst_218 : f32 to vector<48x256xf32>
    %469 = arith.select %467, %465, %468 : vector<48x256xi1>, vector<48x256xf32>
    %c3_219 = arith.constant 3 : index
    %c0_220 = arith.constant 0 : index
    %c0_221 = arith.constant 0 : index
    %470 = vector.load %arg8[%c3_219, %c0_220, %c0_221] : memref<6x16x48xf32, #tpu.memory_space<vmem>>, vector<1x16x48xf32>
    %471 = vector.shape_cast %470 : vector<1x16x48xf32> to vector<16x48xf32>
    %cst_222 = arith.constant dense<0.000000e+00> : vector<16x256xf32>
    %472 = tpu.matmul %471, %469, %cst_222 {dimension_numbers = #tpu.dot_dimension_numbers<[1], [0], [0], [1], [0, 0, 1, 1], [], []>} : vector<16x48xf32>, vector<48x256xf32>, vector<16x256xf32> -> vector<16x256xf32>
    %473 = arith.addf %464, %472 : vector<16x256xf32>
    %c4_223 = arith.constant 4 : index
    %c0_224 = arith.constant 0 : index
    %c0_225 = arith.constant 0 : index
    %474 = vector.load %arg8[%c4_223, %c0_224, %c0_225] : memref<6x16x48xf32, #tpu.memory_space<vmem>>, vector<1x16x48xf32>
    %475 = vector.shape_cast %474 : vector<1x16x48xf32> to vector<16x48xf32>
    %cst_226 = arith.constant dense<0.000000e+00> : vector<16x256xf32>
    %476 = tpu.matmul %475, %434, %cst_226 {dimension_numbers = #tpu.dot_dimension_numbers<[1], [0], [0], [1], [0, 0, 1, 1], [], []>} : vector<16x48xf32>, vector<48x256xf32>, vector<16x256xf32> -> vector<16x256xf32>
    %477 = arith.addf %473, %476 : vector<16x256xf32>
    %c255_i32_227 = arith.constant 255 : i32
    %478 = tpu.dynamic_rotate %434 by %c255_i32_227 dim 1 : vector<48x256xf32>, i32 -> vector<48x256xf32>
    %cst_228 = arith.constant 0.000000e+00 : f32
    %479 = vector.shape_cast %61 : vector<1x256xi1> to vector<1x256xi1>
    %480 = vector.broadcast %479 : vector<1x256xi1> to vector<48x256xi1>
    %481 = vector.broadcast %cst_228 : f32 to vector<48x256xf32>
    %482 = arith.select %480, %478, %481 : vector<48x256xi1>, vector<48x256xf32>
    %c5_229 = arith.constant 5 : index
    %c0_230 = arith.constant 0 : index
    %c0_231 = arith.constant 0 : index
    %483 = vector.load %arg8[%c5_229, %c0_230, %c0_231] : memref<6x16x48xf32, #tpu.memory_space<vmem>>, vector<1x16x48xf32>
    %484 = vector.shape_cast %483 : vector<1x16x48xf32> to vector<16x48xf32>
    %cst_232 = arith.constant dense<0.000000e+00> : vector<16x256xf32>
    %485 = tpu.matmul %484, %482, %cst_232 {dimension_numbers = #tpu.dot_dimension_numbers<[1], [0], [0], [1], [0, 0, 1, 1], [], []>} : vector<16x48xf32>, vector<48x256xf32>, vector<16x256xf32> -> vector<16x256xf32>
    %486 = arith.addf %477, %485 : vector<16x256xf32>
    %cst_233 = arith.constant dense<0.000000e+00> : vector<16xf32>
    %487 = vector.multi_reduction <add>, %486, %cst_233 [1] : vector<16x256xf32> to vector<16xf32>
    %488 = vector.shape_cast %487 : vector<16xf32> to vector<16x1xf32>
    %489 = arith.mulf %486, %486 : vector<16x256xf32>
    %cst_234 = arith.constant dense<0.000000e+00> : vector<16xf32>
    %490 = vector.multi_reduction <add>, %489, %cst_234 [1] : vector<16x256xf32> to vector<16xf32>
    %491 = vector.shape_cast %490 : vector<16xf32> to vector<16x1xf32>
    %cst_235 = arith.constant 3.906250e-03 : f32
    %492 = vector.broadcast %cst_235 : f32 to vector<16x1xf32>
    %493 = arith.mulf %488, %492 : vector<16x1xf32>
    %cst_236 = arith.constant 3.906250e-03 : f32
    %494 = vector.broadcast %cst_236 : f32 to vector<16x1xf32>
    %495 = arith.mulf %491, %494 : vector<16x1xf32>
    %496 = arith.mulf %493, %493 : vector<16x1xf32>
    %497 = arith.subf %495, %496 : vector<16x1xf32>
    %c0_237 = arith.constant 0 : index
    %c0_238 = arith.constant 0 : index
    %498 = vector.load %arg10[%c0_237, %c0_238] : memref<16x13xf32, #tpu.memory_space<vmem>>, vector<16x1xf32>
    %cst_239 = arith.constant 9.99999974E-6 : f32
    %499 = vector.broadcast %cst_239 : f32 to vector<16x1xf32>
    %500 = arith.addf %497, %499 : vector<16x1xf32>
    %501 = math.rsqrt %500 : vector<16x1xf32>
    %502 = arith.mulf %498, %501 : vector<16x1xf32>
    %c0_240 = arith.constant 0 : index
    %c1_241 = arith.constant 1 : index
    %503 = vector.load %arg10[%c0_240, %c1_241] : memref<16x13xf32, #tpu.memory_space<vmem>>, vector<16x1xf32>
    %504 = arith.mulf %493, %502 : vector<16x1xf32>
    %505 = arith.subf %503, %504 : vector<16x1xf32>
    %506 = vector.broadcast %502 : vector<16x1xf32> to vector<16x256xf32>
    %507 = arith.mulf %486, %506 : vector<16x256xf32>
    %508 = vector.broadcast %505 : vector<16x1xf32> to vector<16x256xf32>
    %509 = arith.addf %507, %508 : vector<16x256xf32>
    %cst_242 = arith.constant 0.000000e+00 : f32
    %510 = vector.broadcast %cst_242 : f32 to vector<16x256xf32>
    %511 = arith.cmpf oge, %509, %510 : vector<16x256xf32>
    %c0_243 = arith.constant 0 : index
    %c2_244 = arith.constant 2 : index
    %512 = vector.load %arg10[%c0_243, %c2_244] : memref<16x13xf32, #tpu.memory_space<vmem>>, vector<16x1xf32>
    %513 = vector.broadcast %512 : vector<16x1xf32> to vector<16x256xf32>
    %514 = arith.mulf %513, %509 : vector<16x256xf32>
    %515 = arith.select %511, %509, %514 : vector<16x256xi1>, vector<16x256xf32>
    %c0_245 = arith.constant 0 : index
    %c0_246 = arith.constant 0 : index
    %c0_247 = arith.constant 0 : index
    %516 = vector.load %arg9[%c0_245, %c0_246, %c0_247] : memref<2x16x16xf32, #tpu.memory_space<vmem>>, vector<1x16x16xf32>
    %517 = vector.shape_cast %516 : vector<1x16x16xf32> to vector<16x16xf32>
    %cst_248 = arith.constant dense<0.000000e+00> : vector<16x256xf32>
    %518 = tpu.matmul %517, %515, %cst_248 {dimension_numbers = #tpu.dot_dimension_numbers<[1], [0], [0], [1], [0, 0, 1, 1], [], []>} : vector<16x16xf32>, vector<16x256xf32>, vector<16x256xf32> -> vector<16x256xf32>
    %c0_249 = arith.constant 0 : index
    %c3_250 = arith.constant 3 : index
    %519 = vector.load %arg10[%c0_249, %c3_250] : memref<16x13xf32, #tpu.memory_space<vmem>>, vector<16x1xf32>
    %520 = vector.broadcast %519 : vector<16x1xf32> to vector<16x256xf32>
    %521 = arith.addf %518, %520 : vector<16x256xf32>
    %cst_251 = arith.constant 0.000000e+00 : f32
    %522 = vector.broadcast %cst_251 : f32 to vector<16x256xf32>
    %523 = arith.maximumf %521, %522 : vector<16x256xf32>
    %c1_252 = arith.constant 1 : index
    %c0_253 = arith.constant 0 : index
    %c0_254 = arith.constant 0 : index
    %524 = vector.load %arg9[%c1_252, %c0_253, %c0_254] : memref<2x16x16xf32, #tpu.memory_space<vmem>>, vector<1x16x16xf32>
    %525 = vector.shape_cast %524 : vector<1x16x16xf32> to vector<16x16xf32>
    %cst_255 = arith.constant dense<0.000000e+00> : vector<16x256xf32>
    %526 = tpu.matmul %525, %523, %cst_255 {dimension_numbers = #tpu.dot_dimension_numbers<[1], [0], [0], [1], [0, 0, 1, 1], [], []>} : vector<16x16xf32>, vector<16x256xf32>, vector<16x256xf32> -> vector<16x256xf32>
    %c4_i32_256 = arith.constant 4 : i32
    %527 = tpu.dynamic_rotate %526 by %c4_i32_256 dim 1 : vector<16x256xf32>, i32 -> vector<16x256xf32>
    %cst_257 = arith.constant 0.000000e+00 : f32
    %528 = vector.shape_cast %25 : vector<1x256xi1> to vector<1x256xi1>
    %529 = vector.broadcast %528 : vector<1x256xi1> to vector<16x256xi1>
    %530 = vector.broadcast %cst_257 : f32 to vector<16x256xf32>
    %531 = arith.select %529, %527, %530 : vector<16x256xi1>, vector<16x256xf32>
    %c0_258 = arith.constant 0 : index
    %c4_259 = arith.constant 4 : index
    %532 = vector.load %arg10[%c0_258, %c4_259] : memref<16x13xf32, #tpu.memory_space<vmem>>, vector<16x1xf32>
    %533 = vector.broadcast %532 : vector<16x1xf32> to vector<16x256xf32>
    %534 = arith.mulf %533, %531 : vector<16x256xf32>
    %c3_i32_260 = arith.constant 3 : i32
    %535 = tpu.dynamic_rotate %526 by %c3_i32_260 dim 1 : vector<16x256xf32>, i32 -> vector<16x256xf32>
    %cst_261 = arith.constant 0.000000e+00 : f32
    %536 = vector.shape_cast %34 : vector<1x256xi1> to vector<1x256xi1>
    %537 = vector.broadcast %536 : vector<1x256xi1> to vector<16x256xi1>
    %538 = vector.broadcast %cst_261 : f32 to vector<16x256xf32>
    %539 = arith.select %537, %535, %538 : vector<16x256xi1>, vector<16x256xf32>
    %c0_262 = arith.constant 0 : index
    %c5_263 = arith.constant 5 : index
    %540 = vector.load %arg10[%c0_262, %c5_263] : memref<16x13xf32, #tpu.memory_space<vmem>>, vector<16x1xf32>
    %541 = vector.broadcast %540 : vector<16x1xf32> to vector<16x256xf32>
    %542 = arith.mulf %541, %539 : vector<16x256xf32>
    %543 = arith.addf %534, %542 : vector<16x256xf32>
    %c2_i32_264 = arith.constant 2 : i32
    %544 = tpu.dynamic_rotate %526 by %c2_i32_264 dim 1 : vector<16x256xf32>, i32 -> vector<16x256xf32>
    %cst_265 = arith.constant 0.000000e+00 : f32
    %545 = vector.shape_cast %43 : vector<1x256xi1> to vector<1x256xi1>
    %546 = vector.broadcast %545 : vector<1x256xi1> to vector<16x256xi1>
    %547 = vector.broadcast %cst_265 : f32 to vector<16x256xf32>
    %548 = arith.select %546, %544, %547 : vector<16x256xi1>, vector<16x256xf32>
    %c0_266 = arith.constant 0 : index
    %c6_267 = arith.constant 6 : index
    %549 = vector.load %arg10[%c0_266, %c6_267] : memref<16x13xf32, #tpu.memory_space<vmem>>, vector<16x1xf32>
    %550 = vector.broadcast %549 : vector<16x1xf32> to vector<16x256xf32>
    %551 = arith.mulf %550, %548 : vector<16x256xf32>
    %552 = arith.addf %543, %551 : vector<16x256xf32>
    %c1_i32_268 = arith.constant 1 : i32
    %553 = tpu.dynamic_rotate %526 by %c1_i32_268 dim 1 : vector<16x256xf32>, i32 -> vector<16x256xf32>
    %cst_269 = arith.constant 0.000000e+00 : f32
    %554 = vector.shape_cast %52 : vector<1x256xi1> to vector<1x256xi1>
    %555 = vector.broadcast %554 : vector<1x256xi1> to vector<16x256xi1>
    %556 = vector.broadcast %cst_269 : f32 to vector<16x256xf32>
    %557 = arith.select %555, %553, %556 : vector<16x256xi1>, vector<16x256xf32>
    %c0_270 = arith.constant 0 : index
    %c7_271 = arith.constant 7 : index
    %558 = vector.load %arg10[%c0_270, %c7_271] : memref<16x13xf32, #tpu.memory_space<vmem>>, vector<16x1xf32>
    %559 = vector.broadcast %558 : vector<16x1xf32> to vector<16x256xf32>
    %560 = arith.mulf %559, %557 : vector<16x256xf32>
    %561 = arith.addf %552, %560 : vector<16x256xf32>
    %c0_272 = arith.constant 0 : index
    %c8_273 = arith.constant 8 : index
    %562 = vector.load %arg10[%c0_272, %c8_273] : memref<16x13xf32, #tpu.memory_space<vmem>>, vector<16x1xf32>
    %563 = vector.broadcast %562 : vector<16x1xf32> to vector<16x256xf32>
    %564 = arith.mulf %563, %526 : vector<16x256xf32>
    %565 = arith.addf %561, %564 : vector<16x256xf32>
    %c255_i32_274 = arith.constant 255 : i32
    %566 = tpu.dynamic_rotate %526 by %c255_i32_274 dim 1 : vector<16x256xf32>, i32 -> vector<16x256xf32>
    %cst_275 = arith.constant 0.000000e+00 : f32
    %567 = vector.shape_cast %61 : vector<1x256xi1> to vector<1x256xi1>
    %568 = vector.broadcast %567 : vector<1x256xi1> to vector<16x256xi1>
    %569 = vector.broadcast %cst_275 : f32 to vector<16x256xf32>
    %570 = arith.select %568, %566, %569 : vector<16x256xi1>, vector<16x256xf32>
    %c0_276 = arith.constant 0 : index
    %c9_277 = arith.constant 9 : index
    %571 = vector.load %arg10[%c0_276, %c9_277] : memref<16x13xf32, #tpu.memory_space<vmem>>, vector<16x1xf32>
    %572 = vector.broadcast %571 : vector<16x1xf32> to vector<16x256xf32>
    %573 = arith.mulf %572, %570 : vector<16x256xf32>
    %574 = arith.addf %565, %573 : vector<16x256xf32>
    %c254_i32_278 = arith.constant 254 : i32
    %575 = tpu.dynamic_rotate %526 by %c254_i32_278 dim 1 : vector<16x256xf32>, i32 -> vector<16x256xf32>
    %cst_279 = arith.constant 0.000000e+00 : f32
    %576 = vector.shape_cast %70 : vector<1x256xi1> to vector<1x256xi1>
    %577 = vector.broadcast %576 : vector<1x256xi1> to vector<16x256xi1>
    %578 = vector.broadcast %cst_279 : f32 to vector<16x256xf32>
    %579 = arith.select %577, %575, %578 : vector<16x256xi1>, vector<16x256xf32>
    %c0_280 = arith.constant 0 : index
    %c10_281 = arith.constant 10 : index
    %580 = vector.load %arg10[%c0_280, %c10_281] : memref<16x13xf32, #tpu.memory_space<vmem>>, vector<16x1xf32>
    %581 = vector.broadcast %580 : vector<16x1xf32> to vector<16x256xf32>
    %582 = arith.mulf %581, %579 : vector<16x256xf32>
    %583 = arith.addf %574, %582 : vector<16x256xf32>
    %c253_i32_282 = arith.constant 253 : i32
    %584 = tpu.dynamic_rotate %526 by %c253_i32_282 dim 1 : vector<16x256xf32>, i32 -> vector<16x256xf32>
    %cst_283 = arith.constant 0.000000e+00 : f32
    %585 = vector.shape_cast %79 : vector<1x256xi1> to vector<1x256xi1>
    %586 = vector.broadcast %585 : vector<1x256xi1> to vector<16x256xi1>
    %587 = vector.broadcast %cst_283 : f32 to vector<16x256xf32>
    %588 = arith.select %586, %584, %587 : vector<16x256xi1>, vector<16x256xf32>
    %c0_284 = arith.constant 0 : index
    %c11_285 = arith.constant 11 : index
    %589 = vector.load %arg10[%c0_284, %c11_285] : memref<16x13xf32, #tpu.memory_space<vmem>>, vector<16x1xf32>
    %590 = vector.broadcast %589 : vector<16x1xf32> to vector<16x256xf32>
    %591 = arith.mulf %590, %588 : vector<16x256xf32>
    %592 = arith.addf %583, %591 : vector<16x256xf32>
    %c252_i32_286 = arith.constant 252 : i32
    %593 = tpu.dynamic_rotate %526 by %c252_i32_286 dim 1 : vector<16x256xf32>, i32 -> vector<16x256xf32>
    %cst_287 = arith.constant 0.000000e+00 : f32
    %594 = vector.shape_cast %88 : vector<1x256xi1> to vector<1x256xi1>
    %595 = vector.broadcast %594 : vector<1x256xi1> to vector<16x256xi1>
    %596 = vector.broadcast %cst_287 : f32 to vector<16x256xf32>
    %597 = arith.select %595, %593, %596 : vector<16x256xi1>, vector<16x256xf32>
    %c0_288 = arith.constant 0 : index
    %c12_289 = arith.constant 12 : index
    %598 = vector.load %arg10[%c0_288, %c12_289] : memref<16x13xf32, #tpu.memory_space<vmem>>, vector<16x1xf32>
    %599 = vector.broadcast %598 : vector<16x1xf32> to vector<16x256xf32>
    %600 = arith.mulf %599, %597 : vector<16x256xf32>
    %601 = arith.addf %592, %600 : vector<16x256xf32>
    %602 = arith.addf %515, %526 : vector<16x256xf32>
    %603 = arith.addf %602, %601 : vector<16x256xf32>
    %c0_290 = arith.constant 0 : index
    %c0_291 = arith.constant 0 : index
    %604 = vector.load %arg15[%c0_290, %c0_291] : memref<64x256xf32, #tpu.memory_space<vmem>>, vector<16x256xf32>
    tpu.vector_store %arg15[%c0_290, %c0_291], %603 {strides = array<i32>} : memref<64x256xf32, #tpu.memory_space<vmem>>, vector<16x256xf32>,
    %c0_292 = arith.constant 0 : index
    %c0_293 = arith.constant 0 : index
    %605 = vector.load %arg15[%c0_292, %c0_293] : memref<64x256xf32, #tpu.memory_space<vmem>>, vector<64x256xf32>
    %c128_i32 = arith.constant 128 : i32
    %606 = vector.broadcast %c128_i32 : i32 to vector<1x256xi32>
    %607 = arith.cmpi sge, %0, %606 : vector<1x256xi32>
    %608 = arith.andi %607, %52 : vector<1x256xi1>
    %609 = arith.andi %607, %61 : vector<1x256xi1>
    %c129_i32 = arith.constant 129 : i32
    %610 = tpu.dynamic_rotate %605 by %c129_i32 dim 1 : vector<64x256xf32>, i32 -> vector<64x256xf32>
    %cst_294 = arith.constant 0.000000e+00 : f32
    %611 = vector.shape_cast %608 : vector<1x256xi1> to vector<1x256xi1>
    %612 = vector.broadcast %611 : vector<1x256xi1> to vector<64x256xi1>
    %613 = vector.broadcast %cst_294 : f32 to vector<64x256xf32>
    %614 = arith.select %612, %610, %613 : vector<64x256xi1>, vector<64x256xf32>
    %c0_295 = arith.constant 0 : index
    %c0_296 = arith.constant 0 : index
    %c0_297 = arith.constant 0 : index
    %615 = vector.load %arg11[%c0_295, %c0_296, %c0_297] : memref<6x16x64xf32, #tpu.memory_space<vmem>>, vector<1x16x64xf32>
    %616 = vector.shape_cast %615 : vector<1x16x64xf32> to vector<16x64xf32>
    %cst_298 = arith.constant dense<0.000000e+00> : vector<16x256xf32>
    %617 = tpu.matmul %616, %614, %cst_298 {dimension_numbers = #tpu.dot_dimension_numbers<[1], [0], [0], [1], [0, 0, 1, 1], [], []>} : vector<16x64xf32>, vector<64x256xf32>, vector<16x256xf32> -> vector<16x256xf32>
    %c128_i32_299 = arith.constant 128 : i32
    %618 = tpu.dynamic_rotate %605 by %c128_i32_299 dim 1 : vector<64x256xf32>, i32 -> vector<64x256xf32>
    %cst_300 = arith.constant 0.000000e+00 : f32
    %619 = vector.shape_cast %607 : vector<1x256xi1> to vector<1x256xi1>
    %620 = vector.broadcast %619 : vector<1x256xi1> to vector<64x256xi1>
    %621 = vector.broadcast %cst_300 : f32 to vector<64x256xf32>
    %622 = arith.select %620, %618, %621 : vector<64x256xi1>, vector<64x256xf32>
    %c1_301 = arith.constant 1 : index
    %c0_302 = arith.constant 0 : index
    %c0_303 = arith.constant 0 : index
    %623 = vector.load %arg11[%c1_301, %c0_302, %c0_303] : memref<6x16x64xf32, #tpu.memory_space<vmem>>, vector<1x16x64xf32>
    %624 = vector.shape_cast %623 : vector<1x16x64xf32> to vector<16x64xf32>
    %cst_304 = arith.constant dense<0.000000e+00> : vector<16x256xf32>
    %625 = tpu.matmul %624, %622, %cst_304 {dimension_numbers = #tpu.dot_dimension_numbers<[1], [0], [0], [1], [0, 0, 1, 1], [], []>} : vector<16x64xf32>, vector<64x256xf32>, vector<16x256xf32> -> vector<16x256xf32>
    %626 = arith.addf %617, %625 : vector<16x256xf32>
    %c127_i32 = arith.constant 127 : i32
    %627 = tpu.dynamic_rotate %605 by %c127_i32 dim 1 : vector<64x256xf32>, i32 -> vector<64x256xf32>
    %cst_305 = arith.constant 0.000000e+00 : f32
    %628 = vector.shape_cast %609 : vector<1x256xi1> to vector<1x256xi1>
    %629 = vector.broadcast %628 : vector<1x256xi1> to vector<64x256xi1>
    %630 = vector.broadcast %cst_305 : f32 to vector<64x256xf32>
    %631 = arith.select %629, %627, %630 : vector<64x256xi1>, vector<64x256xf32>
    %c2_306 = arith.constant 2 : index
    %c0_307 = arith.constant 0 : index
    %c0_308 = arith.constant 0 : index
    %632 = vector.load %arg11[%c2_306, %c0_307, %c0_308] : memref<6x16x64xf32, #tpu.memory_space<vmem>>, vector<1x16x64xf32>
    %633 = vector.shape_cast %632 : vector<1x16x64xf32> to vector<16x64xf32>
    %cst_309 = arith.constant dense<0.000000e+00> : vector<16x256xf32>
    %634 = tpu.matmul %633, %631, %cst_309 {dimension_numbers = #tpu.dot_dimension_numbers<[1], [0], [0], [1], [0, 0, 1, 1], [], []>} : vector<16x64xf32>, vector<64x256xf32>, vector<16x256xf32> -> vector<16x256xf32>
    %635 = arith.addf %626, %634 : vector<16x256xf32>
    %c1_i32_310 = arith.constant 1 : i32
    %636 = tpu.dynamic_rotate %605 by %c1_i32_310 dim 1 : vector<64x256xf32>, i32 -> vector<64x256xf32>
    %cst_311 = arith.constant 0.000000e+00 : f32
    %637 = vector.shape_cast %52 : vector<1x256xi1> to vector<1x256xi1>
    %638 = vector.broadcast %637 : vector<1x256xi1> to vector<64x256xi1>
    %639 = vector.broadcast %cst_311 : f32 to vector<64x256xf32>
    %640 = arith.select %638, %636, %639 : vector<64x256xi1>, vector<64x256xf32>
    %c3_312 = arith.constant 3 : index
    %c0_313 = arith.constant 0 : index
    %c0_314 = arith.constant 0 : index
    %641 = vector.load %arg11[%c3_312, %c0_313, %c0_314] : memref<6x16x64xf32, #tpu.memory_space<vmem>>, vector<1x16x64xf32>
    %642 = vector.shape_cast %641 : vector<1x16x64xf32> to vector<16x64xf32>
    %cst_315 = arith.constant dense<0.000000e+00> : vector<16x256xf32>
    %643 = tpu.matmul %642, %640, %cst_315 {dimension_numbers = #tpu.dot_dimension_numbers<[1], [0], [0], [1], [0, 0, 1, 1], [], []>} : vector<16x64xf32>, vector<64x256xf32>, vector<16x256xf32> -> vector<16x256xf32>
    %644 = arith.addf %635, %643 : vector<16x256xf32>
    %c4_316 = arith.constant 4 : index
    %c0_317 = arith.constant 0 : index
    %c0_318 = arith.constant 0 : index
    %645 = vector.load %arg11[%c4_316, %c0_317, %c0_318] : memref<6x16x64xf32, #tpu.memory_space<vmem>>, vector<1x16x64xf32>
    %646 = vector.shape_cast %645 : vector<1x16x64xf32> to vector<16x64xf32>
    %cst_319 = arith.constant dense<0.000000e+00> : vector<16x256xf32>
    %647 = tpu.matmul %646, %605, %cst_319 {dimension_numbers = #tpu.dot_dimension_numbers<[1], [0], [0], [1], [0, 0, 1, 1], [], []>} : vector<16x64xf32>, vector<64x256xf32>, vector<16x256xf32> -> vector<16x256xf32>
    %648 = arith.addf %644, %647 : vector<16x256xf32>
    %c255_i32_320 = arith.constant 255 : i32
    %649 = tpu.dynamic_rotate %605 by %c255_i32_320 dim 1 : vector<64x256xf32>, i32 -> vector<64x256xf32>
    %cst_321 = arith.constant 0.000000e+00 : f32
    %650 = vector.shape_cast %61 : vector<1x256xi1> to vector<1x256xi1>
    %651 = vector.broadcast %650 : vector<1x256xi1> to vector<64x256xi1>
    %652 = vector.broadcast %cst_321 : f32 to vector<64x256xf32>
    %653 = arith.select %651, %649, %652 : vector<64x256xi1>, vector<64x256xf32>
    %c5_322 = arith.constant 5 : index
    %c0_323 = arith.constant 0 : index
    %c0_324 = arith.constant 0 : index
    %654 = vector.load %arg11[%c5_322, %c0_323, %c0_324] : memref<6x16x64xf32, #tpu.memory_space<vmem>>, vector<1x16x64xf32>
    %655 = vector.shape_cast %654 : vector<1x16x64xf32> to vector<16x64xf32>
    %cst_325 = arith.constant dense<0.000000e+00> : vector<16x256xf32>
    %656 = tpu.matmul %655, %653, %cst_325 {dimension_numbers = #tpu.dot_dimension_numbers<[1], [0], [0], [1], [0, 0, 1, 1], [], []>} : vector<16x64xf32>, vector<64x256xf32>, vector<16x256xf32> -> vector<16x256xf32>
    %657 = arith.addf %648, %656 : vector<16x256xf32>
    %cst_326 = arith.constant dense<0.000000e+00> : vector<16xf32>
    %658 = vector.multi_reduction <add>, %657, %cst_326 [1] : vector<16x256xf32> to vector<16xf32>
    %659 = vector.shape_cast %658 : vector<16xf32> to vector<16x1xf32>
    %660 = arith.mulf %657, %657 : vector<16x256xf32>
    %cst_327 = arith.constant dense<0.000000e+00> : vector<16xf32>
    %661 = vector.multi_reduction <add>, %660, %cst_327 [1] : vector<16x256xf32> to vector<16xf32>
    %662 = vector.shape_cast %661 : vector<16xf32> to vector<16x1xf32>
    %cst_328 = arith.constant 3.906250e-03 : f32
    %663 = vector.broadcast %cst_328 : f32 to vector<16x1xf32>
    %664 = arith.mulf %659, %663 : vector<16x1xf32>
    %cst_329 = arith.constant 3.906250e-03 : f32
    %665 = vector.broadcast %cst_329 : f32 to vector<16x1xf32>
    %666 = arith.mulf %662, %665 : vector<16x1xf32>
    %667 = arith.mulf %664, %664 : vector<16x1xf32>
    %668 = arith.subf %666, %667 : vector<16x1xf32>
    %c0_330 = arith.constant 0 : index
    %c0_331 = arith.constant 0 : index
    %669 = vector.load %arg13[%c0_330, %c0_331] : memref<16x13xf32, #tpu.memory_space<vmem>>, vector<16x1xf32>
    %cst_332 = arith.constant 9.99999974E-6 : f32
    %670 = vector.broadcast %cst_332 : f32 to vector<16x1xf32>
    %671 = arith.addf %668, %670 : vector<16x1xf32>
    %672 = math.rsqrt %671 : vector<16x1xf32>
    %673 = arith.mulf %669, %672 : vector<16x1xf32>
    %c0_333 = arith.constant 0 : index
    %c1_334 = arith.constant 1 : index
    %674 = vector.load %arg13[%c0_333, %c1_334] : memref<16x13xf32, #tpu.memory_space<vmem>>, vector<16x1xf32>
    %675 = arith.mulf %664, %673 : vector<16x1xf32>
    %676 = arith.subf %674, %675 : vector<16x1xf32>
    %677 = vector.broadcast %673 : vector<16x1xf32> to vector<16x256xf32>
    %678 = arith.mulf %657, %677 : vector<16x256xf32>
    %679 = vector.broadcast %676 : vector<16x1xf32> to vector<16x256xf32>
    %680 = arith.addf %678, %679 : vector<16x256xf32>
    %cst_335 = arith.constant 0.000000e+00 : f32
    %681 = vector.broadcast %cst_335 : f32 to vector<16x256xf32>
    %682 = arith.cmpf oge, %680, %681 : vector<16x256xf32>
    %c0_336 = arith.constant 0 : index
    %c2_337 = arith.constant 2 : index
    %683 = vector.load %arg13[%c0_336, %c2_337] : memref<16x13xf32, #tpu.memory_space<vmem>>, vector<16x1xf32>
    %684 = vector.broadcast %683 : vector<16x1xf32> to vector<16x256xf32>
    %685 = arith.mulf %684, %680 : vector<16x256xf32>
    %686 = arith.select %682, %680, %685 : vector<16x256xi1>, vector<16x256xf32>
    %c0_338 = arith.constant 0 : index
    %c0_339 = arith.constant 0 : index
    %c0_340 = arith.constant 0 : index
    %687 = vector.load %arg12[%c0_338, %c0_339, %c0_340] : memref<2x16x16xf32, #tpu.memory_space<vmem>>, vector<1x16x16xf32>
    %688 = vector.shape_cast %687 : vector<1x16x16xf32> to vector<16x16xf32>
    %cst_341 = arith.constant dense<0.000000e+00> : vector<16x256xf32>
    %689 = tpu.matmul %688, %686, %cst_341 {dimension_numbers = #tpu.dot_dimension_numbers<[1], [0], [0], [1], [0, 0, 1, 1], [], []>} : vector<16x16xf32>, vector<16x256xf32>, vector<16x256xf32> -> vector<16x256xf32>
    %c0_342 = arith.constant 0 : index
    %c3_343 = arith.constant 3 : index
    %690 = vector.load %arg13[%c0_342, %c3_343] : memref<16x13xf32, #tpu.memory_space<vmem>>, vector<16x1xf32>
    %691 = vector.broadcast %690 : vector<16x1xf32> to vector<16x256xf32>
    %692 = arith.addf %689, %691 : vector<16x256xf32>
    %cst_344 = arith.constant 0.000000e+00 : f32
    %693 = vector.broadcast %cst_344 : f32 to vector<16x256xf32>
    %694 = arith.maximumf %692, %693 : vector<16x256xf32>
    %c1_345 = arith.constant 1 : index
    %c0_346 = arith.constant 0 : index
    %c0_347 = arith.constant 0 : index
    %695 = vector.load %arg12[%c1_345, %c0_346, %c0_347] : memref<2x16x16xf32, #tpu.memory_space<vmem>>, vector<1x16x16xf32>
    %696 = vector.shape_cast %695 : vector<1x16x16xf32> to vector<16x16xf32>
    %cst_348 = arith.constant dense<0.000000e+00> : vector<16x256xf32>
    %697 = tpu.matmul %696, %694, %cst_348 {dimension_numbers = #tpu.dot_dimension_numbers<[1], [0], [0], [1], [0, 0, 1, 1], [], []>} : vector<16x16xf32>, vector<16x256xf32>, vector<16x256xf32> -> vector<16x256xf32>
    %c4_i32_349 = arith.constant 4 : i32
    %698 = tpu.dynamic_rotate %697 by %c4_i32_349 dim 1 : vector<16x256xf32>, i32 -> vector<16x256xf32>
    %cst_350 = arith.constant 0.000000e+00 : f32
    %699 = vector.shape_cast %25 : vector<1x256xi1> to vector<1x256xi1>
    %700 = vector.broadcast %699 : vector<1x256xi1> to vector<16x256xi1>
    %701 = vector.broadcast %cst_350 : f32 to vector<16x256xf32>
    %702 = arith.select %700, %698, %701 : vector<16x256xi1>, vector<16x256xf32>
    %c0_351 = arith.constant 0 : index
    %c4_352 = arith.constant 4 : index
    %703 = vector.load %arg13[%c0_351, %c4_352] : memref<16x13xf32, #tpu.memory_space<vmem>>, vector<16x1xf32>
    %704 = vector.broadcast %703 : vector<16x1xf32> to vector<16x256xf32>
    %705 = arith.mulf %704, %702 : vector<16x256xf32>
    %c3_i32_353 = arith.constant 3 : i32
    %706 = tpu.dynamic_rotate %697 by %c3_i32_353 dim 1 : vector<16x256xf32>, i32 -> vector<16x256xf32>
    %cst_354 = arith.constant 0.000000e+00 : f32
    %707 = vector.shape_cast %34 : vector<1x256xi1> to vector<1x256xi1>
    %708 = vector.broadcast %707 : vector<1x256xi1> to vector<16x256xi1>
    %709 = vector.broadcast %cst_354 : f32 to vector<16x256xf32>
    %710 = arith.select %708, %706, %709 : vector<16x256xi1>, vector<16x256xf32>
    %c0_355 = arith.constant 0 : index
    %c5_356 = arith.constant 5 : index
    %711 = vector.load %arg13[%c0_355, %c5_356] : memref<16x13xf32, #tpu.memory_space<vmem>>, vector<16x1xf32>
    %712 = vector.broadcast %711 : vector<16x1xf32> to vector<16x256xf32>
    %713 = arith.mulf %712, %710 : vector<16x256xf32>
    %714 = arith.addf %705, %713 : vector<16x256xf32>
    %c2_i32_357 = arith.constant 2 : i32
    %715 = tpu.dynamic_rotate %697 by %c2_i32_357 dim 1 : vector<16x256xf32>, i32 -> vector<16x256xf32>
    %cst_358 = arith.constant 0.000000e+00 : f32
    %716 = vector.shape_cast %43 : vector<1x256xi1> to vector<1x256xi1>
    %717 = vector.broadcast %716 : vector<1x256xi1> to vector<16x256xi1>
    %718 = vector.broadcast %cst_358 : f32 to vector<16x256xf32>
    %719 = arith.select %717, %715, %718 : vector<16x256xi1>, vector<16x256xf32>
    %c0_359 = arith.constant 0 : index
    %c6_360 = arith.constant 6 : index
    %720 = vector.load %arg13[%c0_359, %c6_360] : memref<16x13xf32, #tpu.memory_space<vmem>>, vector<16x1xf32>
    %721 = vector.broadcast %720 : vector<16x1xf32> to vector<16x256xf32>
    %722 = arith.mulf %721, %719 : vector<16x256xf32>
    %723 = arith.addf %714, %722 : vector<16x256xf32>
    %c1_i32_361 = arith.constant 1 : i32
    %724 = tpu.dynamic_rotate %697 by %c1_i32_361 dim 1 : vector<16x256xf32>, i32 -> vector<16x256xf32>
    %cst_362 = arith.constant 0.000000e+00 : f32
    %725 = vector.shape_cast %52 : vector<1x256xi1> to vector<1x256xi1>
    %726 = vector.broadcast %725 : vector<1x256xi1> to vector<16x256xi1>
    %727 = vector.broadcast %cst_362 : f32 to vector<16x256xf32>
    %728 = arith.select %726, %724, %727 : vector<16x256xi1>, vector<16x256xf32>
    %c0_363 = arith.constant 0 : index
    %c7_364 = arith.constant 7 : index
    %729 = vector.load %arg13[%c0_363, %c7_364] : memref<16x13xf32, #tpu.memory_space<vmem>>, vector<16x1xf32>
    %730 = vector.broadcast %729 : vector<16x1xf32> to vector<16x256xf32>
    %731 = arith.mulf %730, %728 : vector<16x256xf32>
    %732 = arith.addf %723, %731 : vector<16x256xf32>
    %c0_365 = arith.constant 0 : index
    %c8_366 = arith.constant 8 : index
    %733 = vector.load %arg13[%c0_365, %c8_366] : memref<16x13xf32, #tpu.memory_space<vmem>>, vector<16x1xf32>
    %734 = vector.broadcast %733 : vector<16x1xf32> to vector<16x256xf32>
    %735 = arith.mulf %734, %697 : vector<16x256xf32>
    %736 = arith.addf %732, %735 : vector<16x256xf32>
    %c255_i32_367 = arith.constant 255 : i32
    %737 = tpu.dynamic_rotate %697 by %c255_i32_367 dim 1 : vector<16x256xf32>, i32 -> vector<16x256xf32>
    %cst_368 = arith.constant 0.000000e+00 : f32
    %738 = vector.shape_cast %61 : vector<1x256xi1> to vector<1x256xi1>
    %739 = vector.broadcast %738 : vector<1x256xi1> to vector<16x256xi1>
    %740 = vector.broadcast %cst_368 : f32 to vector<16x256xf32>
    %741 = arith.select %739, %737, %740 : vector<16x256xi1>, vector<16x256xf32>
    %c0_369 = arith.constant 0 : index
    %c9_370 = arith.constant 9 : index
    %742 = vector.load %arg13[%c0_369, %c9_370] : memref<16x13xf32, #tpu.memory_space<vmem>>, vector<16x1xf32>
    %743 = vector.broadcast %742 : vector<16x1xf32> to vector<16x256xf32>
    %744 = arith.mulf %743, %741 : vector<16x256xf32>
    %745 = arith.addf %736, %744 : vector<16x256xf32>
    %c254_i32_371 = arith.constant 254 : i32
    %746 = tpu.dynamic_rotate %697 by %c254_i32_371 dim 1 : vector<16x256xf32>, i32 -> vector<16x256xf32>
    %cst_372 = arith.constant 0.000000e+00 : f32
    %747 = vector.shape_cast %70 : vector<1x256xi1> to vector<1x256xi1>
    %748 = vector.broadcast %747 : vector<1x256xi1> to vector<16x256xi1>
    %749 = vector.broadcast %cst_372 : f32 to vector<16x256xf32>
    %750 = arith.select %748, %746, %749 : vector<16x256xi1>, vector<16x256xf32>
    %c0_373 = arith.constant 0 : index
    %c10_374 = arith.constant 10 : index
    %751 = vector.load %arg13[%c0_373, %c10_374] : memref<16x13xf32, #tpu.memory_space<vmem>>, vector<16x1xf32>
    %752 = vector.broadcast %751 : vector<16x1xf32> to vector<16x256xf32>
    %753 = arith.mulf %752, %750 : vector<16x256xf32>
    %754 = arith.addf %745, %753 : vector<16x256xf32>
    %c253_i32_375 = arith.constant 253 : i32
    %755 = tpu.dynamic_rotate %697 by %c253_i32_375 dim 1 : vector<16x256xf32>, i32 -> vector<16x256xf32>
    %cst_376 = arith.constant 0.000000e+00 : f32
    %756 = vector.shape_cast %79 : vector<1x256xi1> to vector<1x256xi1>
    %757 = vector.broadcast %756 : vector<1x256xi1> to vector<16x256xi1>
    %758 = vector.broadcast %cst_376 : f32 to vector<16x256xf32>
    %759 = arith.select %757, %755, %758 : vector<16x256xi1>, vector<16x256xf32>
    %c0_377 = arith.constant 0 : index
    %c11_378 = arith.constant 11 : index
    %760 = vector.load %arg13[%c0_377, %c11_378] : memref<16x13xf32, #tpu.memory_space<vmem>>, vector<16x1xf32>
    %761 = vector.broadcast %760 : vector<16x1xf32> to vector<16x256xf32>
    %762 = arith.mulf %761, %759 : vector<16x256xf32>
    %763 = arith.addf %754, %762 : vector<16x256xf32>
    %c252_i32_379 = arith.constant 252 : i32
    %764 = tpu.dynamic_rotate %697 by %c252_i32_379 dim 1 : vector<16x256xf32>, i32 -> vector<16x256xf32>
    %cst_380 = arith.constant 0.000000e+00 : f32
    %765 = vector.shape_cast %88 : vector<1x256xi1> to vector<1x256xi1>
    %766 = vector.broadcast %765 : vector<1x256xi1> to vector<16x256xi1>
    %767 = vector.broadcast %cst_380 : f32 to vector<16x256xf32>
    %768 = arith.select %766, %764, %767 : vector<16x256xi1>, vector<16x256xf32>
    %c0_381 = arith.constant 0 : index
    %c12_382 = arith.constant 12 : index
    %769 = vector.load %arg13[%c0_381, %c12_382] : memref<16x13xf32, #tpu.memory_space<vmem>>, vector<16x1xf32>
    %770 = vector.broadcast %769 : vector<16x1xf32> to vector<16x256xf32>
    %771 = arith.mulf %770, %768 : vector<16x256xf32>
    %772 = arith.addf %763, %771 : vector<16x256xf32>
    %773 = arith.addf %686, %697 : vector<16x256xf32>
    %774 = arith.addf %773, %772 : vector<16x256xf32>
    %c0_383 = arith.constant 0 : index
    %c0_384 = arith.constant 0 : index
    %c0_385 = arith.constant 0 : index
    %775 = vector.load %arg14[%c0_383, %c0_384, %c0_385] : memref<1x16x256xf32, #tpu.memory_space<vmem>>, vector<1x16x256xf32>
    %776 = vector.shape_cast %775 : vector<1x16x256xf32> to vector<16x256xf32>
    %777 = vector.shape_cast %774 : vector<16x256xf32> to vector<1x16x256xf32>
    tpu.vector_store %arg14[%c0_383, %c0_384, %c0_385], %777 {strides = array<i32>} : memref<1x16x256xf32, #tpu.memory_space<vmem>>, vector<1x16x256xf32>,
    return
  }
  func.func @transform_0(%arg0: i32) -> (i32, i32, i32) {
    %c0_i32 = arith.constant 0 : i32
    %c0_i32_0 = arith.constant 0 : i32
    %c0_i32_1 = arith.constant 0 : i32
    return %arg0, %c0_i32, %c0_i32_0 : i32, i32, i32
  }
  func.func @transform_1(%arg0: i32) -> (i32, i32, i32) {
    %c0_i32 = arith.constant 0 : i32
    %c0_i32_0 = arith.constant 0 : i32
    %c0_i32_1 = arith.constant 0 : i32
    %c0_i32_2 = arith.constant 0 : i32
    return %c0_i32, %c0_i32_0, %c0_i32_1 : i32, i32, i32
  }
  func.func @transform_2(%arg0: i32) -> (i32, i32, i32) {
    %c0_i32 = arith.constant 0 : i32
    %c0_i32_0 = arith.constant 0 : i32
    %c0_i32_1 = arith.constant 0 : i32
    %c0_i32_2 = arith.constant 0 : i32
    return %c0_i32, %c0_i32_0, %c0_i32_1 : i32, i32, i32
  }
  func.func @transform_3(%arg0: i32) -> (i32, i32) {
    %c0_i32 = arith.constant 0 : i32
    %c0_i32_0 = arith.constant 0 : i32
    %c0_i32_1 = arith.constant 0 : i32
    return %c0_i32, %c0_i32_0 : i32, i32
  }
  func.func @transform_4(%arg0: i32) -> (i32, i32, i32) {
    %c0_i32 = arith.constant 0 : i32
    %c0_i32_0 = arith.constant 0 : i32
    %c0_i32_1 = arith.constant 0 : i32
    %c0_i32_2 = arith.constant 0 : i32
    return %c0_i32, %c0_i32_0, %c0_i32_1 : i32, i32, i32
  }
  func.func @transform_5(%arg0: i32) -> (i32, i32, i32) {
    %c0_i32 = arith.constant 0 : i32
    %c0_i32_0 = arith.constant 0 : i32
    %c0_i32_1 = arith.constant 0 : i32
    %c0_i32_2 = arith.constant 0 : i32
    return %c0_i32, %c0_i32_0, %c0_i32_1 : i32, i32, i32
  }
  func.func @transform_6(%arg0: i32) -> (i32, i32) {
    %c0_i32 = arith.constant 0 : i32
    %c0_i32_0 = arith.constant 0 : i32
    %c0_i32_1 = arith.constant 0 : i32
    return %c0_i32, %c0_i32_0 : i32, i32
  }
  func.func @transform_7(%arg0: i32) -> (i32, i32, i32) {
    %c0_i32 = arith.constant 0 : i32
    %c0_i32_0 = arith.constant 0 : i32
    %c0_i32_1 = arith.constant 0 : i32
    %c0_i32_2 = arith.constant 0 : i32
    return %c0_i32, %c0_i32_0, %c0_i32_1 : i32, i32, i32
  }
  func.func @transform_8(%arg0: i32) -> (i32, i32, i32) {
    %c0_i32 = arith.constant 0 : i32
    %c0_i32_0 = arith.constant 0 : i32
    %c0_i32_1 = arith.constant 0 : i32
    %c0_i32_2 = arith.constant 0 : i32
    return %c0_i32, %c0_i32_0, %c0_i32_1 : i32, i32, i32
  }
  func.func @transform_9(%arg0: i32) -> (i32, i32) {
    %c0_i32 = arith.constant 0 : i32
    %c0_i32_0 = arith.constant 0 : i32
    %c0_i32_1 = arith.constant 0 : i32
    return %c0_i32, %c0_i32_0 : i32, i32
  }
  func.func @transform_10(%arg0: i32) -> (i32, i32, i32) {
    %c0_i32 = arith.constant 0 : i32
    %c0_i32_0 = arith.constant 0 : i32
    %c0_i32_1 = arith.constant 0 : i32
    %c0_i32_2 = arith.constant 0 : i32
    return %c0_i32, %c0_i32_0, %c0_i32_1 : i32, i32, i32
  }
  func.func @transform_11(%arg0: i32) -> (i32, i32, i32) {
    %c0_i32 = arith.constant 0 : i32
    %c0_i32_0 = arith.constant 0 : i32
    %c0_i32_1 = arith.constant 0 : i32
    %c0_i32_2 = arith.constant 0 : i32
    return %c0_i32, %c0_i32_0, %c0_i32_1 : i32, i32, i32
  }
  func.func @transform_12(%arg0: i32) -> (i32, i32) {
    %c0_i32 = arith.constant 0 : i32
    %c0_i32_0 = arith.constant 0 : i32
    %c0_i32_1 = arith.constant 0 : i32
    return %c0_i32, %c0_i32_0 : i32, i32
  }
  func.func @transform_13(%arg0: i32) -> (i32, i32, i32) {
    %c0_i32 = arith.constant 0 : i32
    %c0_i32_0 = arith.constant 0 : i32
    %c0_i32_1 = arith.constant 0 : i32
    return %arg0, %c0_i32, %c0_i32_0 : i32, i32, i32
  }
}

</mosaic_0001>

<llo_original>
// kernel: dilated_dense_net_forward.1
$region0: #{dilated_dense_net_forward.1}
  #allocation0 [shape = 'u32[]', space=smem, size = 0x4, offset = 0x4, fixed_abs, tag = 'smem constant byte address 0x4 - core index']
  #allocation1 [shape = 'u32[72,128]{1,0:T(1,128)}', space=vmem, size = 0x9000, scoped, tag = 'internal scratch']
  #allocation2 [shape = 'f32[64,256]{1,0:T(8,128)}', space=vmem, size = 0x10000, scoped, tag = 'scratch operand']
  %s0 = inlined_call_operand.vmem [shape: f32[2,16,256], index: 0, kind: input, shape index: {}]
  %s1 = inlined_call_operand.vmem [shape: f32[6,16,16], index: 1, kind: input, shape index: {}]
  %s2 = inlined_call_operand.vmem [shape: f32[2,16,16], index: 2, kind: input, shape index: {}]
  %s3 = inlined_call_operand.vmem [shape: f32[16,13], index: 3, kind: input, shape index: {}]
  %s4 = inlined_call_operand.vmem [shape: f32[6,16,32], index: 4, kind: input, shape index: {}]
  %s5 = inlined_call_operand.vmem [shape: f32[2,16,16], index: 5, kind: input, shape index: {}]
  %s6 = inlined_call_operand.vmem [shape: f32[16,13], index: 6, kind: input, shape index: {}]
  %s7 = inlined_call_operand.vmem [shape: f32[6,16,48], index: 7, kind: input, shape index: {}]
  %s8 = inlined_call_operand.vmem [shape: f32[2,16,16], index: 8, kind: input, shape index: {}]
  %s9 = inlined_call_operand.vmem [shape: f32[16,13], index: 9, kind: input, shape index: {}]
  %s10 = inlined_call_operand.vmem [shape: f32[6,16,64], index: 10, kind: input, shape index: {}]
  %s11 = inlined_call_operand.vmem [shape: f32[2,16,16], index: 11, kind: input, shape index: {}]
  %s12 = inlined_call_operand.vmem [shape: f32[16,13], index: 12, kind: input, shape index: {}]
  %s13 = inlined_call_operand.vmem [shape: f32[2,16,256], index: 13, kind: output, shape index: {}]
  %s14 = sld [smem:[#allocation0]]
  $region85: #{dilated_dense_net_forward.1} parent=0
    _
  %s16 = ssub.s32 1, %s14
  %s17 = scalar_select 0, %s16, %s14
  loop: start=0, step=1, limit=4
  $region2: #{dilated_dense_net_forward.1} parent=0 // loop_pre_header
    _
  $region3: #{dilated_dense_net_forward.1} parent=0 // loop_header
    %s19 = sphi 0, %s23
    %p20 = scmp.ge.s32.totalorder %s19, 4
    %s29 = sphi 0, %s31
    %s32 = sphi 0, %s29
    %s33 = sphi 0, %s32
    %s49 = sphi 0, %s33
    %s53 = sphi 0, %s53
    %s55 = sphi 0, %s53
    %s56 = sphi 0, %s55
    %s70 = sphi 0, %s56
    %s74 = sphi 0, %s74
    %s76 = sphi 0, %s74
    %s77 = sphi 0, %s76
    %s91 = sphi 0, %s77
    %s95 = sphi 0, %s95
    %s97 = sphi 0, %s95
    %s98 = sphi 0, %s97
    %s112 = sphi 0, %s98
    %s116 = sphi 0, %s116
    %s118 = sphi 0, %s116
    %s119 = sphi 0, %s118
    %s133 = sphi 0, %s119
    %s137 = sphi 0, %s137
    %s139 = sphi 0, %s137
    %s140 = sphi 0, %s139
    %s154 = sphi 0, %s140
    %s158 = sphi 0, %s158
    %s160 = sphi 0, %s158
    %s161 = sphi 0, %s160
    %s175 = sphi 0, %s161
    %s179 = sphi 0, %s179
    %s181 = sphi 0, %s179
    %s182 = sphi 0, %s181
    %s196 = sphi 0, %s182
    %s200 = sphi 0, %s200
    %s202 = sphi 0, %s200
    %s203 = sphi 0, %s202
    %s217 = sphi 0, %s203
    %s221 = sphi 0, %s221
    %s223 = sphi 0, %s221
    %s224 = sphi 0, %s223
    %s238 = sphi 0, %s224
    %s242 = sphi 0, %s242
    %s244 = sphi 0, %s242
    %s245 = sphi 0, %s244
    %s259 = sphi 0, %s245
    %s263 = sphi 0, %s263
    %s265 = sphi 0, %s263
    %s266 = sphi 0, %s265
    %s280 = sphi 0, %s266
    %s284 = sphi 0, %s284
    %s286 = sphi 0, %s284
    %s287 = sphi 0, %s286
    %s301 = sphi 0, %s287
    %s307 = sphi 0, %s309
    %s310 = sphi 0, %s307
    %s311 = sphi 0, %s310
    %s327 = sphi 0, %s311
  $region4: #{dilated_dense_net_forward.1} parent=0 // loop_header_branch
    %22 = sbr.rel (%p20) target = $region8
  $region5: #{dilated_dense_net_forward.1} parent=0 // loop_body
    %s24 = ssub.s32 %s19, 1
    %s25 = ssub.s32 %s19, 2
    %s26 = sadd.s32 %s19, 1
    %s27 = ssub.s32 %s19, %s26
    %p28 = scmp.eq.s32.totalorder %s27, 0
    %s30 = sadd.s32 %s29, 1
    %s31 = scalar_select %p28, %s29, %s30
    %p34 = pneg %p28
    %p35 = scmp.eq.s32.totalorder %s19, 1
    %p36 = por %p34, %p35
    %p37 = scmp.ne.s32.totalorder %s29, %s32
    %p38 = scmp.eq.s32.totalorder %s19, 0
    %p39 = por %p37, %p38
    %p40 = scmp.ne.s32.totalorder %s29, %s32
    %p41 = scmp.eq.s32.totalorder %s24, 1
    %p42 = por %p40, %p41
    %p43 = scmp.ne.s32.totalorder %s32, %s33
    %p44 = scmp.eq.s32.totalorder %s24, 0
    %p45 = por %p43, %p44
    %p46 = scmp.ne.s32.totalorder %s32, %s33
    %p47 = scmp.eq.s32.totalorder %s25, 1
    %p48 = por %p46, %p47
    %p50 = scmp.ne.s32.totalorder %s33, %s49
    %p51 = scmp.eq.s32.totalorder %s25, 0
    %p52 = por %p50, %p51
    %s54 = sadd.s32 %s53, 1
    %p57 = scmp.eq.s32.totalorder %s19, 1
    %p58 = scmp.ne.s32.totalorder %s53, %s55
    %p59 = scmp.eq.s32.totalorder %s19, 0
    %p60 = por %p58, %p59
    %p61 = scmp.ne.s32.totalorder %s53, %s55
    %p62 = scmp.eq.s32.totalorder %s24, 1
    %p63 = por %p61, %p62
    %p64 = scmp.ne.s32.totalorder %s55, %s56
    %p65 = scmp.eq.s32.totalorder %s24, 0
    %p66 = por %p64, %p65
    %p67 = scmp.ne.s32.totalorder %s55, %s56
    %p68 = scmp.eq.s32.totalorder %s25, 1
    %p69 = por %p67, %p68
    %p71 = scmp.ne.s32.totalorder %s56, %s70
    %p72 = scmp.eq.s32.totalorder %s25, 0
    %p73 = por %p71, %p72
    %s75 = sadd.s32 %s74, 1
    %p78 = scmp.eq.s32.totalorder %s19, 1
    %p79 = scmp.ne.s32.totalorder %s74, %s76
    %p80 = scmp.eq.s32.totalorder %s19, 0
    %p81 = por %p79, %p80
    %p82 = scmp.ne.s32.totalorder %s74, %s76
    %p83 = scmp.eq.s32.totalorder %s24, 1
    %p84 = por %p82, %p83
    %p85 = scmp.ne.s32.totalorder %s76, %s77
    %p86 = scmp.eq.s32.totalorder %s24, 0
    %p87 = por %p85, %p86
    %p88 = scmp.ne.s32.totalorder %s76, %s77
    %p89 = scmp.eq.s32.totalorder %s25, 1
    %p90 = por %p88, %p89
    %p92 = scmp.ne.s32.totalorder %s77, %s91
    %p93 = scmp.eq.s32.totalorder %s25, 0
    %p94 = por %p92, %p93
    %s96 = sadd.s32 %s95, 1
    %p99 = scmp.eq.s32.totalorder %s19, 1
    %p100 = scmp.ne.s32.totalorder %s95, %s97
    %p101 = scmp.eq.s32.totalorder %s19, 0
    %p102 = por %p100, %p101
    %p103 = scmp.ne.s32.totalorder %s95, %s97
    %p104 = scmp.eq.s32.totalorder %s24, 1
    %p105 = por %p103, %p104
    %p106 = scmp.ne.s32.totalorder %s97, %s98
    %p107 = scmp.eq.s32.totalorder %s24, 0
    %p108 = por %p106, %p107
    %p109 = scmp.ne.s32.totalorder %s97, %s98
    %p110 = scmp.eq.s32.totalorder %s25, 1
    %p111 = por %p109, %p110
    %p113 = scmp.ne.s32.totalorder %s98, %s112
    %p114 = scmp.eq.s32.totalorder %s25, 0
    %p115 = por %p113, %p114
    %s117 = sadd.s32 %s116, 1
    %p120 = scmp.eq.s32.totalorder %s19, 1
    %p121 = scmp.ne.s32.totalorder %s116, %s118
    %p122 = scmp.eq.s32.totalorder %s19, 0
    %p123 = por %p121, %p122
    %p124 = scmp.ne.s32.totalorder %s116, %s118
    %p125 = scmp.eq.s32.totalorder %s24, 1
    %p126 = por %p124, %p125
    %p127 = scmp.ne.s32.totalorder %s118, %s119
    %p128 = scmp.eq.s32.totalorder %s24, 0
    %p129 = por %p127, %p128
    %p130 = scmp.ne.s32.totalorder %s118, %s119
    %p131 = scmp.eq.s32.totalorder %s25, 1
    %p132 = por %p130, %p131
    %p134 = scmp.ne.s32.totalorder %s119, %s133
    %p135 = scmp.eq.s32.totalorder %s25, 0
    %p136 = por %p134, %p135
    %s138 = sadd.s32 %s137, 1
    %p141 = scmp.eq.s32.totalorder %s19, 1
    %p142 = scmp.ne.s32.totalorder %s137, %s139
    %p143 = scmp.eq.s32.totalorder %s19, 0
    %p144 = por %p142, %p143
    %p145 = scmp.ne.s32.totalorder %s137, %s139
    %p146 = scmp.eq.s32.totalorder %s24, 1
    %p147 = por %p145, %p146
    %p148 = scmp.ne.s32.totalorder %s139, %s140
    %p149 = scmp.eq.s32.totalorder %s24, 0
    %p150 = por %p148, %p149
    %p151 = scmp.ne.s32.totalorder %s139, %s140
    %p152 = scmp.eq.s32.totalorder %s25, 1
    %p153 = por %p151, %p152
    %p155 = scmp.ne.s32.totalorder %s140, %s154
    %p156 = scmp.eq.s32.totalorder %s25, 0
    %p157 = por %p155, %p156
    %s159 = sadd.s32 %s158, 1
    %p162 = scmp.eq.s32.totalorder %s19, 1
    %p163 = scmp.ne.s32.totalorder %s158, %s160
    %p164 = scmp.eq.s32.totalorder %s19, 0
    %p165 = por %p163, %p164
    %p166 = scmp.ne.s32.totalorder %s158, %s160
    %p167 = scmp.eq.s32.totalorder %s24, 1
    %p168 = por %p166, %p167
    %p169 = scmp.ne.s32.totalorder %s160, %s161
    %p170 = scmp.eq.s32.totalorder %s24, 0
    %p171 = por %p169, %p170
    %p172 = scmp.ne.s32.totalorder %s160, %s161
    %p173 = scmp.eq.s32.totalorder %s25, 1
    %p174 = por %p172, %p173
    %p176 = scmp.ne.s32.totalorder %s161, %s175
    %p177 = scmp.eq.s32.totalorder %s25, 0
    %p178 = por %p176, %p177
    %s180 = sadd.s32 %s179, 1
    %p183 = scmp.eq.s32.totalorder %s19, 1
    %p184 = scmp.ne.s32.totalorder %s179, %s181
    %p185 = scmp.eq.s32.totalorder %s19, 0
    %p186 = por %p184, %p185
    %p187 = scmp.ne.s32.totalorder %s179, %s181
    %p188 = scmp.eq.s32.totalorder %s24, 1
    %p189 = por %p187, %p188
    %p190 = scmp.ne.s32.totalorder %s181, %s182
    %p191 = scmp.eq.s32.totalorder %s24, 0
    %p192 = por %p190, %p191
    %p193 = scmp.ne.s32.totalorder %s181, %s182
    %p194 = scmp.eq.s32.totalorder %s25, 1
    %p195 = por %p193, %p194
    %p197 = scmp.ne.s32.totalorder %s182, %s196
    %p198 = scmp.eq.s32.totalorder %s25, 0
    %p199 = por %p197, %p198
    %s201 = sadd.s32 %s200, 1
    %p204 = scmp.eq.s32.totalorder %s19, 1
    %p205 = scmp.ne.s32.totalorder %s200, %s202
    %p206 = scmp.eq.s32.totalorder %s19, 0
    %p207 = por %p205, %p206
    %p208 = scmp.ne.s32.totalorder %s200, %s202
    %p209 = scmp.eq.s32.totalorder %s24, 1
    %p210 = por %p208, %p209
    %p211 = scmp.ne.s32.totalorder %s202, %s203
    %p212 = scmp.eq.s32.totalorder %s24, 0
    %p213 = por %p211, %p212
    %p214 = scmp.ne.s32.totalorder %s202, %s203
    %p215 = scmp.eq.s32.totalorder %s25, 1
    %p216 = por %p214, %p215
    %p218 = scmp.ne.s32.totalorder %s203, %s217
    %p219 = scmp.eq.s32.totalorder %s25, 0
    %p220 = por %p218, %p219
    %s222 = sadd.s32 %s221, 1
    %p225 = scmp.eq.s32.totalorder %s19, 1
    %p226 = scmp.ne.s32.totalorder %s221, %s223
    %p227 = scmp.eq.s32.totalorder %s19, 0
    %p228 = por %p226, %p227
    %p229 = scmp.ne.s32.totalorder %s221, %s223
    %p230 = scmp.eq.s32.totalorder %s24, 1
    %p231 = por %p229, %p230
    %p232 = scmp.ne.s32.totalorder %s223, %s224
    %p233 = scmp.eq.s32.totalorder %s24, 0
    %p234 = por %p232, %p233
    %p235 = scmp.ne.s32.totalorder %s223, %s224
    %p236 = scmp.eq.s32.totalorder %s25, 1
    %p237 = por %p235, %p236
    %p239 = scmp.ne.s32.totalorder %s224, %s238
    %p240 = scmp.eq.s32.totalorder %s25, 0
    %p241 = por %p239, %p240
    %s243 = sadd.s32 %s242, 1
    %p246 = scmp.eq.s32.totalorder %s19, 1
    %p247 = scmp.ne.s32.totalorder %s242, %s244
    %p248 = scmp.eq.s32.totalorder %s19, 0
    %p249 = por %p247, %p248
    %p250 = scmp.ne.s32.totalorder %s242, %s244
    %p251 = scmp.eq.s32.totalorder %s24, 1
    %p252 = por %p250, %p251
    %p253 = scmp.ne.s32.totalorder %s244, %s245
    %p254 = scmp.eq.s32.totalorder %s24, 0
    %p255 = por %p253, %p254
    %p256 = scmp.ne.s32.totalorder %s244, %s245
    %p257 = scmp.eq.s32.totalorder %s25, 1
    %p258 = por %p256, %p257
    %p260 = scmp.ne.s32.totalorder %s245, %s259
    %p261 = scmp.eq.s32.totalorder %s25, 0
    %p262 = por %p260, %p261
    %s264 = sadd.s32 %s263, 1
    %p267 = scmp.eq.s32.totalorder %s19, 1
    %p268 = scmp.ne.s32.totalorder %s263, %s265
    %p269 = scmp.eq.s32.totalorder %s19, 0
    %p270 = por %p268, %p269
    %p271 = scmp.ne.s32.totalorder %s263, %s265
    %p272 = scmp.eq.s32.totalorder %s24, 1
    %p273 = por %p271, %p272
    %p274 = scmp.ne.s32.totalorder %s265, %s266
    %p275 = scmp.eq.s32.totalorder %s24, 0
    %p276 = por %p274, %p275
    %p277 = scmp.ne.s32.totalorder %s265, %s266
    %p278 = scmp.eq.s32.totalorder %s25, 1
    %p279 = por %p277, %p278
    %p281 = scmp.ne.s32.totalorder %s266, %s280
    %p282 = scmp.eq.s32.totalorder %s25, 0
    %p283 = por %p281, %p282
    %s285 = sadd.s32 %s284, 1
    %p288 = scmp.eq.s32.totalorder %s19, 1
    %p289 = scmp.ne.s32.totalorder %s284, %s286
    %p290 = scmp.eq.s32.totalorder %s19, 0
    %p291 = por %p289, %p290
    %p292 = scmp.ne.s32.totalorder %s284, %s286
    %p293 = scmp.eq.s32.totalorder %s24, 1
    %p294 = por %p292, %p293
    %p295 = scmp.ne.s32.totalorder %s286, %s287
    %p296 = scmp.eq.s32.totalorder %s24, 0
    %p297 = por %p295, %p296
    %p298 = scmp.ne.s32.totalorder %s286, %s287
    %p299 = scmp.eq.s32.totalorder %s25, 1
    %p300 = por %p298, %p299
    %p302 = scmp.ne.s32.totalorder %s287, %s301
    %p303 = scmp.eq.s32.totalorder %s25, 0
    %p304 = por %p302, %p303
    %s305 = ssub.s32 %s19, %s26
    %p306 = scmp.eq.s32.totalorder %s305, 0
    %s308 = sadd.s32 %s307, 1
    %s309 = scalar_select %p306, %s307, %s308
    %p312 = pneg %p306
    %p313 = scmp.eq.s32.totalorder %s19, 1
    %p314 = por %p312, %p313
    %p315 = scmp.ne.s32.totalorder %s307, %s310
    %p316 = scmp.eq.s32.totalorder %s19, 0
    %p317 = por %p315, %p316
    %p318 = scmp.ne.s32.totalorder %s307, %s310
    %p319 = scmp.eq.s32.totalorder %s24, 1
    %p320 = por %p318, %p319
    %p321 = scmp.ne.s32.totalorder %s310, %s311
    %p322 = scmp.eq.s32.totalorder %s24, 0
    %p323 = por %p321, %p322
    %p324 = scmp.ne.s32.totalorder %s310, %s311
    %p325 = scmp.eq.s32.totalorder %s25, 1
    %p326 = por %p324, %p325
    %p328 = scmp.ne.s32.totalorder %s311, %s327
    %p329 = scmp.eq.s32.totalorder %s25, 0
    %p330 = por %p328, %p329
    %p331 = scmp.le.s32.totalorder 1, %s19
    %p332 = scmp.lt.s32.totalorder %s19, 3
    %p333 = pnand %p331, %p332
    %p334 = pneg %p333
    // Predicated region
    $region9: #{dilated_dense_net_forward.1} parent=5 // pred_check
      _
    $region10: #{dilated_dense_net_forward.1} parent=5 // pred_check_branch
      %336 = sbr.rel (%p333) target = $region12
    $region11: #{dilated_dense_net_forward.1} parent=5 // pred_region
      %s337 = ssub.s32 %s19, 1
      // Predicated region
      $region13: #{dilated_dense_net_forward.1} parent=11 // pred_check
        %p338 = pneg %p66
      $region14: #{dilated_dense_net_forward.1} parent=11 // pred_check_branch
        %340 = sbr.rel (%p338) target = $region16
      $region15: #{dilated_dense_net_forward.1} parent=11 // pred_region
        _
      $region16: #{dilated_dense_net_forward.1} parent=11 // pred_fallthru
        _
      // Predicated region
      $region17: #{dilated_dense_net_forward.1} parent=11 // pred_check
        %p341 = pneg %p87
      $region18: #{dilated_dense_net_forward.1} parent=11 // pred_check_branch
        %343 = sbr.rel (%p341) target = $region20
      $region19: #{dilated_dense_net_forward.1} parent=11 // pred_region
        _
      $region20: #{dilated_dense_net_forward.1} parent=11 // pred_fallthru
        _
      // Predicated region
      $region21: #{dilated_dense_net_forward.1} parent=11 // pred_check
        %p344 = pneg %p108
      $region22: #{dilated_dense_net_forward.1} parent=11 // pred_check_branch
        %346 = sbr.rel (%p344) target = $region24
      $region23: #{dilated_dense_net_forward.1} parent=11 // pred_region
        _
      $region24: #{dilated_dense_net_forward.1} parent=11 // pred_fallthru
        _
      // Predicated region
      $region25: #{dilated_dense_net_forward.1} parent=11 // pred_check
        %p347 = pneg %p129
      $region26: #{dilated_dense_net_forward.1} parent=11 // pred_check_branch
        %349 = sbr.rel (%p347) target = $region28
      $region27: #{dilated_dense_net_forward.1} parent=11 // pred_region
        _
      $region28: #{dilated_dense_net_forward.1} parent=11 // pred_fallthru
        _
      // Predicated region
      $region29: #{dilated_dense_net_forward.1} parent=11 // pred_check
        %p350 = pneg %p150
      $region30: #{dilated_dense_net_forward.1} parent=11 // pred_check_branch
        %352 = sbr.rel (%p350) target = $region32
      $region31: #{dilated_dense_net_forward.1} parent=11 // pred_region
        _
      $region32: #{dilated_dense_net_forward.1} parent=11 // pred_fallthru
        _
      // Predicated region
      $region33: #{dilated_dense_net_forward.1} parent=11 // pred_check
        %p353 = pneg %p171
      $region34: #{dilated_dense_net_forward.1} parent=11 // pred_check_branch
        %355 = sbr.rel (%p353) target = $region36
      $region35: #{dilated_dense_net_forward.1} parent=11 // pred_region
        _
      $region36: #{dilated_dense_net_forward.1} parent=11 // pred_fallthru
        _
      // Predicated region
      $region37: #{dilated_dense_net_forward.1} parent=11 // pred_check
        %p356 = pneg %p192
      $region38: #{dilated_dense_net_forward.1} parent=11 // pred_check_branch
        %358 = sbr.rel (%p356) target = $region40
      $region39: #{dilated_dense_net_forward.1} parent=11 // pred_region
        _
      $region40: #{dilated_dense_net_forward.1} parent=11 // pred_fallthru
        _
      // Predicated region
      $region41: #{dilated_dense_net_forward.1} parent=11 // pred_check
        %p359 = pneg %p213
      $region42: #{dilated_dense_net_forward.1} parent=11 // pred_check_branch
        %361 = sbr.rel (%p359) target = $region44
      $region43: #{dilated_dense_net_forward.1} parent=11 // pred_region
        _
      $region44: #{dilated_dense_net_forward.1} parent=11 // pred_fallthru
        _
      // Predicated region
      $region45: #{dilated_dense_net_forward.1} parent=11 // pred_check
        %p362 = pneg %p234
      $region46: #{dilated_dense_net_forward.1} parent=11 // pred_check_branch
        %364 = sbr.rel (%p362) target = $region48
      $region47: #{dilated_dense_net_forward.1} parent=11 // pred_region
        _
      $region48: #{dilated_dense_net_forward.1} parent=11 // pred_fallthru
        _
      // Predicated region
      $region49: #{dilated_dense_net_forward.1} parent=11 // pred_check
        %p365 = pneg %p255
      $region50: #{dilated_dense_net_forward.1} parent=11 // pred_check_branch
        %367 = sbr.rel (%p365) target = $region52
      $region51: #{dilated_dense_net_forward.1} parent=11 // pred_region
        _
      $region52: #{dilated_dense_net_forward.1} parent=11 // pred_fallthru
        _
      // Predicated region
      $region53: #{dilated_dense_net_forward.1} parent=11 // pred_check
        %p368 = pneg %p276
      $region54: #{dilated_dense_net_forward.1} parent=11 // pred_check_branch
        %370 = sbr.rel (%p368) target = $region56
      $region55: #{dilated_dense_net_forward.1} parent=11 // pred_region
        _
      $region56: #{dilated_dense_net_forward.1} parent=11 // pred_fallthru
        _
      // Predicated region
      $region57: #{dilated_dense_net_forward.1} parent=11 // pred_check
        %p371 = pneg %p297
      $region58: #{dilated_dense_net_forward.1} parent=11 // pred_check_branch
        %373 = sbr.rel (%p371) target = $region60
      $region59: #{dilated_dense_net_forward.1} parent=11 // pred_region
        _
      $region60: #{dilated_dense_net_forward.1} parent=11 // pred_fallthru
        _
    $region12: #{dilated_dense_net_forward.1} parent=5 // pred_fallthru
      _
    %p374 = scmp.lt.s32.totalorder %s19, 2
    // Predicated region
    $region61: #{dilated_dense_net_forward.1} parent=5 // pred_check
      %p375 = pneg %p374
    $region62: #{dilated_dense_net_forward.1} parent=5 // pred_check_branch
      %377 = sbr.rel (%p375) target = $region64
    $region63: #{dilated_dense_net_forward.1} parent=5 // pred_region
      // Predicated region
      $region65: #{dilated_dense_net_forward.1} parent=63 // pred_check
        %p378 = pneg %p39
      $region66: #{dilated_dense_net_forward.1} parent=63 // pred_check_branch
        %380 = sbr.rel (%p378) target = $region68
      $region67: #{dilated_dense_net_forward.1} parent=63 // pred_region
        %p381 = scmp.lt.s32.totalorder %s19, 1
        %s382 = scalar_select %p381, %s19, 1
        %s383 = smul.addr %s382, 4
        %s384 = smul.addr %s383, 8
        %s385 = scalar_lea.vmem %s0, %s384
      $region68: #{dilated_dense_net_forward.1} parent=63 // pred_fallthru
        _
    $region64: #{dilated_dense_net_forward.1} parent=5 // pred_fallthru
      _
    %p386 = scmp.le.s32.totalorder 1, %s19
    %p387 = scmp.lt.s32.totalorder %s19, 3
    %p388 = pnand %p386, %p387
    %p389 = pneg %p388
    // Predicated region
    $region69: #{dilated_dense_net_forward.1} parent=5 // pred_check
      _
    $region70: #{dilated_dense_net_forward.1} parent=5 // pred_check_branch
      %391 = sbr.rel (%p388) target = $region72
    $region71: #{dilated_dense_net_forward.1} parent=5 // pred_region
      %s392 = ssub.s32 %s19, 1
      %p393 = scmp.lt.s32.totalorder %s24, 1
      %s394 = scalar_select %p393, %s24, 1
      %s395 = smul.addr %s394, 4
      %s396 = smul.addr %s395, 8
      %s397 = scalar_lea.vmem %s0, %s396
      %p398 = pneg %p45
      %p399 = pneg %p42
      %p400 = pneg %p66
      %p401 = pneg %p63
      %p402 = pneg %p87
      %p403 = pneg %p84
      %p404 = pneg %p108
      %p405 = pneg %p105
      %p406 = pneg %p129
      %p407 = pneg %p126
      %p408 = pneg %p150
      %p409 = pneg %p147
      %p410 = pneg %p171
      %p411 = pneg %p168
      %p412 = pneg %p192
      %p413 = pneg %p189
      %p414 = pneg %p213
      %p415 = pneg %p210
      %p416 = pneg %p234
      %p417 = pneg %p231
      %p418 = pneg %p255
      %p419 = pneg %p252
      %p420 = pneg %p276
      %p421 = pneg %p273
      %p422 = pneg %p297
      %p423 = pneg %p294
      %p424 = pneg %p323
      %p425 = pneg %p320
      %p426 = scmp.lt.s32.totalorder %s24, 1
      %s427 = scalar_select %p426, %s24, 1
      %s428 = smul.addr %s427, 4
      %s429 = smul.addr %s428, 8
      %s430 = scalar_lea.vmem %s13, %s429
      %p431 = scmp.lt.s32.totalorder %s24, 1
      %s432 = scalar_select %p431, %s24, 1
      %s433 = smul.addr %s432, 4
      %s434 = smul.addr %s433, 8
      %s435 = scalar_lea.vmem %s0, %s434
      %p436 = scmp.lt.s32.totalorder %s24, 1
      %s437 = scalar_select %p436, %s24, 1
      %s438 = smul.addr %s437, 4
      %s439 = smul.addr %s438, 8
      %s440 = scalar_lea.vmem %s13, %s439
      %v441 = vlaneseq
      %v442 = vand.u32 %v441, 127
      %v443 = vadd.s32 %v442, 128
      %vm444 = vcmp.lt.s32.totalorder %v442, 0
      %v445 = vsub.s32 0, %v442
      %v446 = vsel %vm444, %v445, %v442
      %v447 = vshrl.u32 %v446, 4
      %v448 = vand.u32 %v446, 15
      %v449 = vsub.s32 0, %v448
      %v450 = vsel %vm444, %v449, %v448
      %vm451 = vcmp.lt.s32.totalorder %v443, 0
      %v452 = vsub.s32 0, %v443
      %v453 = vsel %vm451, %v452, %v443
      %v454 = vshrl.u32 %v453, 4
      %v455 = vand.u32 %v453, 15
      %v456 = vsub.s32 0, %v455
      %v457 = vsel %vm451, %v456, %v455
      %vm458 = vcmp.ne.s32.totalorder %v450, 0
      %vm459 = vcmp.ne.s32.totalorder %v457, 0
      %vm460 = vcmp.lt.s32.totalorder %v450, 0
      %vm461 = vcmp.lt.s32.totalorder %v457, 0
      %vm462 = vmand %vm460, %vm458
      %vm463 = vmand %vm461, %vm459
      %v464 = vadd.s32 %v450, 16
      %v465 = vadd.s32 %v457, 16
      %v466 = vsel %vm462, %v464, %v450
      %v467 = vsel %vm463, %v465, %v457
      %v468 = vadd.s32 %v466, 4294967292
      %v469 = vadd.s32 %v467, 4294967292
      %vm470 = vcmp.ge.s32.totalorder %v468, 0
      %vm471 = vcmp.ge.s32.totalorder %v469, 0
      %vm472 = vcmp.lt.s32.totalorder %v468, 16
      %vm473 = vcmp.lt.s32.totalorder %v469, 16
      %vm474 = vmand %vm470, %vm472
      %vm475 = vmand %vm471, %vm473
      %v476 = vadd.s32 %v466, 4294967293
      %v477 = vadd.s32 %v467, 4294967293
      %vm478 = vcmp.ge.s32.totalorder %v476, 0
      %vm479 = vcmp.ge.s32.totalorder %v477, 0
      %vm480 = vcmp.lt.s32.totalorder %v476, 16
      %vm481 = vcmp.lt.s32.totalorder %v477, 16
      %vm482 = vmand %vm478, %vm480
      %vm483 = vmand %vm479, %vm481
      %v484 = vadd.s32 %v466, 4294967294
      %v485 = vadd.s32 %v467, 4294967294
      %vm486 = vcmp.ge.s32.totalorder %v484, 0
      %vm487 = vcmp.ge.s32.totalorder %v485, 0
      %vm488 = vcmp.lt.s32.totalorder %v484, 16
      %vm489 = vcmp.lt.s32.totalorder %v485, 16
      %vm490 = vmand %vm486, %vm488
      %vm491 = vmand %vm487, %vm489
      %v492 = vadd.s32 %v466, 4294967295
      %v493 = vadd.s32 %v467, 4294967295
      %vm494 = vcmp.ge.s32.totalorder %v492, 0
      %vm495 = vcmp.ge.s32.totalorder %v493, 0
      %vm496 = vcmp.lt.s32.totalorder %v492, 16
      %vm497 = vcmp.lt.s32.totalorder %v493, 16
      %vm498 = vmand %vm494, %vm496
      %vm499 = vmand %vm495, %vm497
      %v500 = vadd.s32 %v466, 1
      %v501 = vadd.s32 %v467, 1
      %vm502 = vcmp.ge.s32.totalorder %v500, 0
      %vm503 = vcmp.ge.s32.totalorder %v501, 0
      %vm504 = vcmp.lt.s32.totalorder %v500, 16
      %vm505 = vcmp.lt.s32.totalorder %v501, 16
      %vm506 = vmand %vm502, %vm504
      %vm507 = vmand %vm503, %vm505
      %v508 = vadd.s32 %v466, 2
      %v509 = vadd.s32 %v467, 2
      %vm510 = vcmp.ge.s32.totalorder %v508, 0
      %vm511 = vcmp.ge.s32.totalorder %v509, 0
      %vm512 = vcmp.lt.s32.totalorder %v508, 16
      %vm513 = vcmp.lt.s32.totalorder %v509, 16
      %vm514 = vmand %vm510, %vm512
      %vm515 = vmand %vm511, %vm513
      %v516 = vadd.s32 %v466, 3
      %v517 = vadd.s32 %v467, 3
      %vm518 = vcmp.ge.s32.totalorder %v516, 0
      %vm519 = vcmp.ge.s32.totalorder %v517, 0
      %vm520 = vcmp.lt.s32.totalorder %v516, 16
      %vm521 = vcmp.lt.s32.totalorder %v517, 16
      %vm522 = vmand %vm518, %vm520
      %vm523 = vmand %vm519, %vm521
      %v524 = vadd.s32 %v466, 4
      %v525 = vadd.s32 %v467, 4
      %vm526 = vcmp.ge.s32.totalorder %v524, 0
      %vm527 = vcmp.ge.s32.totalorder %v525, 0
      %vm528 = vcmp.lt.s32.totalorder %v524, 16
      %vm529 = vcmp.lt.s32.totalorder %v525, 16
      %vm530 = vmand %vm526, %vm528
      %vm531 = vmand %vm527, %vm529
      %v532 = vld [vmem:[%s435] sm:$0xff]
      %v533 = vld [vmem:[%s435 + $0x8] sm:$0xff]
      %v534 = vld [vmem:[%s435 + $0x10] sm:$0xff]
      %v535 = vld [vmem:[%s435 + $0x18] sm:$0xff]
      %536 = vst [vmem:[#allocation2 + $0x60] sm:$0xff] %v532
      %537 = vst [vmem:[#allocation2 + $0x68] sm:$0xff] %v533
      %538 = vst [vmem:[#allocation2 + $0x70] sm:$0xff] %v534
      %539 = vst [vmem:[#allocation2 + $0x78] sm:$0xff] %v535
      %v540 = vld [vmem:[#allocation2 + $0x60] sm:$0xff]
      %v541 = vld [vmem:[#allocation2 + $0x68] sm:$0xff]
      %v542 = vld [vmem:[#allocation2 + $0x70] sm:$0xff]
      %v543 = vld [vmem:[#allocation2 + $0x78] sm:$0xff]
      %vm544 = vcmp.ge.s32.totalorder %v442, 16
      %vm545 = vcmp.ge.s32.totalorder %v443, 16
      %vm546 = vmand %vm544, %vm498
      %vm547 = vmand %vm545, %vm499
      %vm548 = vmand %vm544, %vm506
      %vm549 = vmand %vm545, %vm507
      %550 = vrot.lane.b32.xlu0 %v540, 17
      %v551 = vpop.permute.xlu0 %550
      %552 = vrot.lane.b32.xlu0 %v542, 17
      %v553 = vpop.permute.xlu0 %552
      %554 = vrot.lane.b32.xlu0 %v541, 17
      %v555 = vpop.permute.xlu0 %554
      %556 = vrot.lane.b32.xlu0 %v543, 17
      %v557 = vpop.permute.xlu0 %556
      %vm558 = vcmp.lt.s32.totalorder %v442, 17
      %v559 = vsel %vm558, %v551, %v555
      %v560 = vsel %vm558, %v553, %v557
      %v561 = vsel %vm558, %v555, %v551
      %v562 = vsel %vm558, %v557, %v553
      %v563 = vsel %vm546, 1, 0
      %v564 = vsel %vm547, 1, 0
      %vm565 = vcmp.eq.s32.totalorder %v563, 1
      %vm566 = vcmp.eq.s32.totalorder %v564, 1
      %v567 = vsel %vm565, %v561, 0.0
      %v568 = vsel %vm566, %v559, 0.0
      %v569 = vsel %vm565, %v562, 0.0
      %v570 = vsel %vm566, %v560, 0.0
      %v571 = vld [vmem:[%s1] sm:$0xff]
      %v572 = vld [vmem:[%s1 + $0x8] sm:$0xff]
      %573 = vrot.lane.b32.xlu0 %v540, 16
      %v574 = vpop.permute.xlu0 %573
      %575 = vrot.lane.b32.xlu0 %v542, 16
      %v576 = vpop.permute.xlu0 %575
      %577 = vrot.lane.b32.xlu0 %v541, 16
      %v578 = vpop.permute.xlu0 %577
      %579 = vrot.lane.b32.xlu0 %v543, 16
      %v580 = vpop.permute.xlu0 %579
      %vm581 = vcmp.lt.s32.totalorder %v442, 16
      %v582 = vsel %vm581, %v574, %v578
      %v583 = vsel %vm581, %v576, %v580
      %v584 = vsel %vm581, %v578, %v574
      %v585 = vsel %vm581, %v580, %v576
      %v586 = vsel %vm544, 1, 0
      %v587 = vsel %vm545, 1, 0
      %vm588 = vcmp.eq.s32.totalorder %v586, 1
      %vm589 = vcmp.eq.s32.totalorder %v587, 1
      %v590 = vsel %vm588, %v584, 0.0
      %v591 = vsel %vm589, %v582, 0.0
      %v592 = vsel %vm588, %v585, 0.0
      %v593 = vsel %vm589, %v583, 0.0
      %s594 = scalar_lea.vmem %s1, 16
      %v595 = vld [vmem:[%s594] sm:$0xff]
      %v596 = vld [vmem:[%s594 + $0x8] sm:$0xff]
      %vm597 = vcmask 130048
      %v599 = vsel %vm597, %v595, 0
      %v602 = vsel %vm597, %v596, 0
      %604 = vmatpush.msra.mxu0 0.0
      %605 = vmatpush.msra.mxu0 0.0
      %606 = vmatpush.msra.mxu0 0.0
      %607 = vmatpush.msra.mxu0 0.0
      %608 = vmatpush.msra.mxu0 0.0
      %609 = vmatpush.msra.mxu0 0.0
      %610 = vmatpush.msra.mxu0 0.0
      %611 = vmatpush.msra.mxu0 0.0
      %612 = vmatpush.msra.mxu0 0.0
      %613 = vmatpush.msra.mxu0 0.0
      %614 = vmatpush.msra.mxu0 0.0
      %615 = vmatpush.msra.mxu0 0.0
      %616 = vmatpush.msra.mxu0 0.0
      %617 = vmatpush.msra.mxu0 0.0
      %618 = vmatpush.msra.mxu0 %v592
      %619 = vmatpush.msra.mxu0 %v590
      %620 = vmatmul.f32.gmra.mxu0 %v599
      %v621 = vpop.f32.mrf.mxu0
      %v622 = vadd.f32 0.0, %v621
      %623 = vmatmul.f32.gmra.mxu0 %v602
      %v624 = vpop.f32.mrf.mxu0
      %v625 = vadd.f32 0.0, %v624
      %626 = vdwg.mxu0
      %627 = vmatpush.msra.mxu0 0.0
      %628 = vmatpush.msra.mxu0 0.0
      %629 = vmatpush.msra.mxu0 0.0
      %630 = vmatpush.msra.mxu0 0.0
      %631 = vmatpush.msra.mxu0 0.0
      %632 = vmatpush.msra.mxu0 0.0
      %633 = vmatpush.msra.mxu0 0.0
      %634 = vmatpush.msra.mxu0 0.0
      %635 = vmatpush.msra.mxu0 0.0
      %636 = vmatpush.msra.mxu0 0.0
      %637 = vmatpush.msra.mxu0 0.0
      %638 = vmatpush.msra.mxu0 0.0
      %639 = vmatpush.msra.mxu0 0.0
      %640 = vmatpush.msra.mxu0 0.0
      %641 = vmatpush.msra.mxu0 %v593
      %642 = vmatpush.msra.mxu0 %v591
      %643 = vmatmul.f32.gmra.mxu0 %v599
      %v644 = vpop.f32.mrf.mxu0
      %v645 = vadd.f32 0.0, %v644
      %646 = vmatmul.f32.gmra.mxu0 %v602
      %v647 = vpop.f32.mrf.mxu0
      %v648 = vadd.f32 0.0, %v647
      %649 = vdwg.mxu0
      %v651 = vsel %vm597, %v571, 0
      %v654 = vsel %vm597, %v572, 0
      %656 = vmatpush.msra.mxu0 0.0
      %657 = vmatpush.msra.mxu0 0.0
      %658 = vmatpush.msra.mxu0 0.0
      %659 = vmatpush.msra.mxu0 0.0
      %660 = vmatpush.msra.mxu0 0.0
      %661 = vmatpush.msra.mxu0 0.0
      %662 = vmatpush.msra.mxu0 0.0
      %663 = vmatpush.msra.mxu0 0.0
      %664 = vmatpush.msra.mxu0 0.0
      %665 = vmatpush.msra.mxu0 0.0
      %666 = vmatpush.msra.mxu0 0.0
      %667 = vmatpush.msra.mxu0 0.0
      %668 = vmatpush.msra.mxu0 0.0
      %669 = vmatpush.msra.mxu0 0.0
      %670 = vmatpush.msra.mxu0 %v569
      %671 = vmatpush.msra.mxu0 %v567
      %672 = vmatmul.f32.gmra.mxu0 %v651
      %v673 = vpop.f32.mrf.mxu0
      %v674 = vadd.f32 %v622, %v673
      %675 = vmatmul.f32.gmra.mxu0 %v654
      %v676 = vpop.f32.mrf.mxu0
      %v677 = vadd.f32 %v625, %v676
      %678 = vdwg.mxu0
      %679 = vmatpush.msra.mxu0 0.0
      %680 = vmatpush.msra.mxu0 0.0
      %681 = vmatpush.msra.mxu0 0.0
      %682 = vmatpush.msra.mxu0 0.0
      %683 = vmatpush.msra.mxu0 0.0
      %684 = vmatpush.msra.mxu0 0.0
      %685 = vmatpush.msra.mxu0 0.0
      %686 = vmatpush.msra.mxu0 0.0
      %687 = vmatpush.msra.mxu0 0.0
      %688 = vmatpush.msra.mxu0 0.0
      %689 = vmatpush.msra.mxu0 0.0
      %690 = vmatpush.msra.mxu0 0.0
      %691 = vmatpush.msra.mxu0 0.0
      %692 = vmatpush.msra.mxu0 0.0
      %693 = vmatpush.msra.mxu0 %v570
      %694 = vmatpush.msra.mxu0 %v568
      %695 = vmatmul.f32.gmra.mxu0 %v651
      %v696 = vpop.f32.mrf.mxu0
      %v697 = vadd.f32 %v645, %v696
      %698 = vmatmul.f32.gmra.mxu0 %v654
      %v699 = vpop.f32.mrf.mxu0
      %v700 = vadd.f32 %v648, %v699
      %701 = vdwg.mxu0
      %702 = vrot.lane.b32.xlu0 %v540, 15
      %v703 = vpop.permute.xlu0 %702
      %704 = vrot.lane.b32.xlu0 %v542, 15
      %v705 = vpop.permute.xlu0 %704
      %706 = vrot.lane.b32.xlu0 %v541, 15
      %v707 = vpop.permute.xlu0 %706
      %708 = vrot.lane.b32.xlu0 %v543, 15
      %v709 = vpop.permute.xlu0 %708
      %vm710 = vcmp.lt.s32.totalorder %v442, 15
      %v711 = vsel %vm710, %v703, %v707
      %v712 = vsel %vm710, %v705, %v709
      %v713 = vsel %vm710, %v707, %v703
      %v714 = vsel %vm710, %v709, %v705
      %v715 = vsel %vm548, 1, 0
      %v716 = vsel %vm549, 1, 0
      %vm717 = vcmp.eq.s32.totalorder %v715, 1
      %vm718 = vcmp.eq.s32.totalorder %v716, 1
      %v719 = vsel %vm717, %v713, 0.0
      %v720 = vsel %vm718, %v711, 0.0
      %v721 = vsel %vm717, %v714, 0.0
      %v722 = vsel %vm718, %v712, 0.0
      %s723 = scalar_lea.vmem %s1, 32
      %v724 = vld [vmem:[%s723] sm:$0xff]
      %v725 = vld [vmem:[%s723 + $0x8] sm:$0xff]
      %v727 = vsel %vm597, %v724, 0
      %v730 = vsel %vm597, %v725, 0
      %732 = vmatpush.msra.mxu0 0.0
      %733 = vmatpush.msra.mxu0 0.0
      %734 = vmatpush.msra.mxu0 0.0
      %735 = vmatpush.msra.mxu0 0.0
      %736 = vmatpush.msra.mxu0 0.0
      %737 = vmatpush.msra.mxu0 0.0
      %738 = vmatpush.msra.mxu0 0.0
      %739 = vmatpush.msra.mxu0 0.0
      %740 = vmatpush.msra.mxu0 0.0
      %741 = vmatpush.msra.mxu0 0.0
      %742 = vmatpush.msra.mxu0 0.0
      %743 = vmatpush.msra.mxu0 0.0
      %744 = vmatpush.msra.mxu0 0.0
      %745 = vmatpush.msra.mxu0 0.0
      %746 = vmatpush.msra.mxu0 %v721
      %747 = vmatpush.msra.mxu0 %v719
      %748 = vmatmul.f32.gmra.mxu0 %v727
      %v749 = vpop.f32.mrf.mxu0
      %v750 = vadd.f32 0.0, %v749
      %751 = vmatmul.f32.gmra.mxu0 %v730
      %v752 = vpop.f32.mrf.mxu0
      %v753 = vadd.f32 0.0, %v752
      %754 = vdwg.mxu0
      %755 = vmatpush.msra.mxu0 0.0
      %756 = vmatpush.msra.mxu0 0.0
      %757 = vmatpush.msra.mxu0 0.0
      %758 = vmatpush.msra.mxu0 0.0
      %759 = vmatpush.msra.mxu0 0.0
      %760 = vmatpush.msra.mxu0 0.0
      %761 = vmatpush.msra.mxu0 0.0
      %762 = vmatpush.msra.mxu0 0.0
      %763 = vmatpush.msra.mxu0 0.0
      %764 = vmatpush.msra.mxu0 0.0
      %765 = vmatpush.msra.mxu0 0.0
      %766 = vmatpush.msra.mxu0 0.0
      %767 = vmatpush.msra.mxu0 0.0
      %768 = vmatpush.msra.mxu0 0.0
      %769 = vmatpush.msra.mxu0 %v722
      %770 = vmatpush.msra.mxu0 %v720
      %771 = vmatmul.f32.gmra.mxu0 %v727
      %v772 = vpop.f32.mrf.mxu0
      %v773 = vadd.f32 0.0, %v772
      %774 = vmatmul.f32.gmra.mxu0 %v730
      %v775 = vpop.f32.mrf.mxu0
      %v776 = vadd.f32 0.0, %v775
      %777 = vdwg.mxu0
      %v778 = vadd.f32 %v674, %v750
      %v779 = vadd.f32 %v697, %v773
      %v780 = vadd.f32 %v677, %v753
      %v781 = vadd.f32 %v700, %v776
      %782 = vrot.lane.b32.xlu0 %v540, 1
      %v783 = vpop.permute.xlu0 %782
      %784 = vrot.lane.b32.xlu0 %v542, 1
      %v785 = vpop.permute.xlu0 %784
      %786 = vrot.lane.b32.xlu0 %v541, 1
      %v787 = vpop.permute.xlu0 %786
      %788 = vrot.lane.b32.xlu0 %v543, 1
      %v789 = vpop.permute.xlu0 %788
      %vm790 = vcmp.lt.s32.totalorder %v442, 1
      %v791 = vsel %vm790, %v783, %v787
      %v792 = vsel %vm790, %v785, %v789
      %v793 = vsel %vm790, %v787, %v783
      %v794 = vsel %vm790, %v789, %v785
      %v795 = vsel %vm498, 1, 0
      %v796 = vsel %vm499, 1, 0
      %vm797 = vcmp.eq.s32.totalorder %v795, 1
      %vm798 = vcmp.eq.s32.totalorder %v796, 1
      %v799 = vsel %vm797, %v793, 0.0
      %v800 = vsel %vm798, %v791, 0.0
      %v801 = vsel %vm797, %v794, 0.0
      %v802 = vsel %vm798, %v792, 0.0
      %s803 = scalar_lea.vmem %s1, 48
      %v804 = vld [vmem:[%s803] sm:$0xff]
      %v805 = vld [vmem:[%s803 + $0x8] sm:$0xff]
      %v807 = vsel %vm597, %v804, 0
      %v810 = vsel %vm597, %v805, 0
      %812 = vmatpush.msra.mxu0 0.0
      %813 = vmatpush.msra.mxu0 0.0
      %814 = vmatpush.msra.mxu0 0.0
      %815 = vmatpush.msra.mxu0 0.0
      %816 = vmatpush.msra.mxu0 0.0
      %817 = vmatpush.msra.mxu0 0.0
      %818 = vmatpush.msra.mxu0 0.0
      %819 = vmatpush.msra.mxu0 0.0
      %820 = vmatpush.msra.mxu0 0.0
      %821 = vmatpush.msra.mxu0 0.0
      %822 = vmatpush.msra.mxu0 0.0
      %823 = vmatpush.msra.mxu0 0.0
      %824 = vmatpush.msra.mxu0 0.0
      %825 = vmatpush.msra.mxu0 0.0
      %826 = vmatpush.msra.mxu0 %v801
      %827 = vmatpush.msra.mxu0 %v799
      %828 = vmatmul.f32.gmra.mxu0 %v807
      %v829 = vpop.f32.mrf.mxu0
      %v830 = vadd.f32 0.0, %v829
      %831 = vmatmul.f32.gmra.mxu0 %v810
      %v832 = vpop.f32.mrf.mxu0
      %v833 = vadd.f32 0.0, %v832
      %834 = vdwg.mxu0
      %835 = vmatpush.msra.mxu0 0.0
      %836 = vmatpush.msra.mxu0 0.0
      %837 = vmatpush.msra.mxu0 0.0
      %838 = vmatpush.msra.mxu0 0.0
      %839 = vmatpush.msra.mxu0 0.0
      %840 = vmatpush.msra.mxu0 0.0
      %841 = vmatpush.msra.mxu0 0.0
      %842 = vmatpush.msra.mxu0 0.0
      %843 = vmatpush.msra.mxu0 0.0
      %844 = vmatpush.msra.mxu0 0.0
      %845 = vmatpush.msra.mxu0 0.0
      %846 = vmatpush.msra.mxu0 0.0
      %847 = vmatpush.msra.mxu0 0.0
      %848 = vmatpush.msra.mxu0 0.0
      %849 = vmatpush.msra.mxu0 %v802
      %850 = vmatpush.msra.mxu0 %v800
      %851 = vmatmul.f32.gmra.mxu0 %v807
      %v852 = vpop.f32.mrf.mxu0
      %v853 = vadd.f32 0.0, %v852
      %854 = vmatmul.f32.gmra.mxu0 %v810
      %v855 = vpop.f32.mrf.mxu0
      %v856 = vadd.f32 0.0, %v855
      %857 = vdwg.mxu0
      %v858 = vadd.f32 %v778, %v830
      %v859 = vadd.f32 %v779, %v853
      %v860 = vadd.f32 %v780, %v833
      %v861 = vadd.f32 %v781, %v856
      %s862 = scalar_lea.vmem %s1, 64
      %v863 = vld [vmem:[%s862] sm:$0xff]
      %v864 = vld [vmem:[%s862 + $0x8] sm:$0xff]
      %v866 = vsel %vm597, %v863, 0
      %v869 = vsel %vm597, %v864, 0
      %871 = vmatpush.msra.mxu0 0.0
      %872 = vmatpush.msra.mxu0 0.0
      %873 = vmatpush.msra.mxu0 0.0
      %874 = vmatpush.msra.mxu0 0.0
      %875 = vmatpush.msra.mxu0 0.0
      %876 = vmatpush.msra.mxu0 0.0
      %877 = vmatpush.msra.mxu0 0.0
      %878 = vmatpush.msra.mxu0 0.0
      %879 = vmatpush.msra.mxu0 0.0
      %880 = vmatpush.msra.mxu0 0.0
      %881 = vmatpush.msra.mxu0 0.0
      %882 = vmatpush.msra.mxu0 0.0
      %883 = vmatpush.msra.mxu0 0.0
      %884 = vmatpush.msra.mxu0 0.0
      %885 = vmatpush.msra.mxu0 %v542
      %886 = vmatpush.msra.mxu0 %v540
      %887 = vmatmul.f32.gmra.mxu0 %v866
      %v888 = vpop.f32.mrf.mxu0
      %v889 = vadd.f32 0.0, %v888
      %890 = vmatmul.f32.gmra.mxu0 %v869
      %v891 = vpop.f32.mrf.mxu0
      %v892 = vadd.f32 0.0, %v891
      %893 = vdwg.mxu0
      %894 = vmatpush.msra.mxu0 0.0
      %895 = vmatpush.msra.mxu0 0.0
      %896 = vmatpush.msra.mxu0 0.0
      %897 = vmatpush.msra.mxu0 0.0
      %898 = vmatpush.msra.mxu0 0.0
      %899 = vmatpush.msra.mxu0 0.0
      %900 = vmatpush.msra.mxu0 0.0
      %901 = vmatpush.msra.mxu0 0.0
      %902 = vmatpush.msra.mxu0 0.0
      %903 = vmatpush.msra.mxu0 0.0
      %904 = vmatpush.msra.mxu0 0.0
      %905 = vmatpush.msra.mxu0 0.0
      %906 = vmatpush.msra.mxu0 0.0
      %907 = vmatpush.msra.mxu0 0.0
      %908 = vmatpush.msra.mxu0 %v543
      %909 = vmatpush.msra.mxu0 %v541
      %910 = vmatmul.f32.gmra.mxu0 %v866
      %v911 = vpop.f32.mrf.mxu0
      %v912 = vadd.f32 0.0, %v911
      %913 = vmatmul.f32.gmra.mxu0 %v869
      %v914 = vpop.f32.mrf.mxu0
      %v915 = vadd.f32 0.0, %v914
      %916 = vdwg.mxu0
      %v917 = vadd.f32 %v858, %v889
      %v918 = vadd.f32 %v859, %v912
      %v919 = vadd.f32 %v860, %v892
      %v920 = vadd.f32 %v861, %v915
      %921 = vrot.lane.b32.xlu0 %v540, 127
      %v922 = vpop.permute.xlu0 %921
      %923 = vrot.lane.b32.xlu0 %v542, 127
      %v924 = vpop.permute.xlu0 %923
      %925 = vrot.lane.b32.xlu0 %v541, 127
      %v926 = vpop.permute.xlu0 %925
      %927 = vrot.lane.b32.xlu0 %v543, 127
      %v928 = vpop.permute.xlu0 %927
      %vm929 = vcmp.lt.s32.totalorder %v442, 127
      %v930 = vsel %vm929, %v922, %v926
      %v931 = vsel %vm929, %v924, %v928
      %v932 = vsel %vm929, %v926, %v922
      %v933 = vsel %vm929, %v928, %v924
      %v934 = vsel %vm506, 1, 0
      %v935 = vsel %vm507, 1, 0
      %vm936 = vcmp.eq.s32.totalorder %v934, 1
      %vm937 = vcmp.eq.s32.totalorder %v935, 1
      %v938 = vsel %vm936, %v930, 0.0
      %v939 = vsel %vm937, %v932, 0.0
      %v940 = vsel %vm936, %v931, 0.0
      %v941 = vsel %vm937, %v933, 0.0
      %s942 = scalar_lea.vmem %s1, 80
      %v943 = vld [vmem:[%s942] sm:$0xff]
      %v944 = vld [vmem:[%s942 + $0x8] sm:$0xff]
      %v946 = vsel %vm597, %v943, 0
      %v949 = vsel %vm597, %v944, 0
      %951 = vmatpush.msra.mxu0 0.0
      %952 = vmatpush.msra.mxu0 0.0
      %953 = vmatpush.msra.mxu0 0.0
      %954 = vmatpush.msra.mxu0 0.0
      %955 = vmatpush.msra.mxu0 0.0
      %956 = vmatpush.msra.mxu0 0.0
      %957 = vmatpush.msra.mxu0 0.0
      %958 = vmatpush.msra.mxu0 0.0
      %959 = vmatpush.msra.mxu0 0.0
      %960 = vmatpush.msra.mxu0 0.0
      %961 = vmatpush.msra.mxu0 0.0
      %962 = vmatpush.msra.mxu0 0.0
      %963 = vmatpush.msra.mxu0 0.0
      %964 = vmatpush.msra.mxu0 0.0
      %965 = vmatpush.msra.mxu0 %v940
      %966 = vmatpush.msra.mxu0 %v938
      %967 = vmatmul.f32.gmra.mxu0 %v946
      %v968 = vpop.f32.mrf.mxu0
      %v969 = vadd.f32 0.0, %v968
      %970 = vmatmul.f32.gmra.mxu0 %v949
      %v971 = vpop.f32.mrf.mxu0
      %v972 = vadd.f32 0.0, %v971
      %973 = vdwg.mxu0
      %974 = vmatpush.msra.mxu0 0.0
      %975 = vmatpush.msra.mxu0 0.0
      %976 = vmatpush.msra.mxu0 0.0
      %977 = vmatpush.msra.mxu0 0.0
      %978 = vmatpush.msra.mxu0 0.0
      %979 = vmatpush.msra.mxu0 0.0
      %980 = vmatpush.msra.mxu0 0.0
      %981 = vmatpush.msra.mxu0 0.0
      %982 = vmatpush.msra.mxu0 0.0
      %983 = vmatpush.msra.mxu0 0.0
      %984 = vmatpush.msra.mxu0 0.0
      %985 = vmatpush.msra.mxu0 0.0
      %986 = vmatpush.msra.mxu0 0.0
      %987 = vmatpush.msra.mxu0 0.0
      %988 = vmatpush.msra.mxu0 %v941
      %989 = vmatpush.msra.mxu0 %v939
      %990 = vmatmul.f32.gmra.mxu0 %v946
      %v991 = vpop.f32.mrf.mxu0
      %v992 = vadd.f32 0.0, %v991
      %993 = vmatmul.f32.gmra.mxu0 %v949
      %v994 = vpop.f32.mrf.mxu0
      %v995 = vadd.f32 0.0, %v994
      %996 = vdwg.mxu0
      %v997 = vadd.f32 %v917, %v969
      %v998 = vadd.f32 %v918, %v992
      %v999 = vadd.f32 %v919, %v972
      %v1000 = vadd.f32 %v920, %v995
      %v1001 = vadd.f32 %v997, %v998
      %1002 = vadd.xlane.f32.xlu0 %v1001
      %v1003 = vpop.xlane.xlu0 %1002
      %v1004 = vadd.f32 %v999, %v1000
      %1005 = vadd.xlane.f32.xlu0 %v1004
      %v1006 = vpop.xlane.xlu0 %1005
      %v1007 = vmul.f32 %v997, %v997
      %v1008 = vmul.f32 %v998, %v998
      %v1009 = vmul.f32 %v999, %v999
      %v1010 = vmul.f32 %v1000, %v1000
      %v1011 = vadd.f32 %v1007, %v1008
      %1012 = vadd.xlane.f32.xlu0 %v1011
      %v1013 = vpop.xlane.xlu0 %1012
      %v1014 = vadd.f32 %v1009, %v1010
      %1015 = vadd.xlane.f32.xlu0 %v1014
      %v1016 = vpop.xlane.xlu0 %1015
      %v1017 = vmul.f32 %v1003, 0.00390625
      %v1018 = vmul.f32 %v1006, 0.00390625
      %v1019 = vmul.f32 %v1013, 0.00390625
      %v1020 = vmul.f32 %v1016, 0.00390625
      %v1021 = vmul.f32 %v1017, %v1017
      %v1022 = vmul.f32 %v1018, %v1018
      %v1023 = vsub.f32 %v1019, %v1021
      %v1024 = vsub.f32 %v1020, %v1022
      %v1025 = vld [vmem:[%s3] sm:$0xff]
      %v1026 = vld [vmem:[%s3 + $0x8] sm:$0xff]
      %v1027 = vadd.f32 %v1023, 1e-05
      %v1028 = vadd.f32 %v1024, 1e-05
      %v1029 = vrsqrt.pop %v1027
      %v1030 = vmul.f32 %v1029, %v1027
      %v1031 = vmul.f32 %v1030, %v1029
      %v1032 = vmul.f32 0.5, %v1031
      %v1033 = vsub.f32 1.5, %v1032
      %v1034 = vmul.f32 %v1029, %v1033
      %vm1035 = vweird.f32 %v1027
      %vm1036 = vweird.f32 %v1029
      %vm1037 = vmor %vm1035, %vm1036
      %v1038 = vsel %vm1037, %v1029, %v1034
      %v1039 = vrsqrt.pop %v1028
      %v1040 = vmul.f32 %v1039, %v1028
      %v1041 = vmul.f32 %v1040, %v1039
      %v1042 = vmul.f32 0.5, %v1041
      %v1043 = vsub.f32 1.5, %v1042
      %v1044 = vmul.f32 %v1039, %v1043
      %vm1045 = vweird.f32 %v1028
      %vm1046 = vweird.f32 %v1039
      %vm1047 = vmor %vm1045, %vm1046
      %v1048 = vsel %vm1047, %v1039, %v1044
      %v1049 = vmul.f32 %v1025, %v1038
      %v1050 = vmul.f32 %v1026, %v1048
      %v1051 = vmul.f32 %v1017, %v1049
      %v1052 = vmul.f32 %v1018, %v1050
      %1055 = vrot.lane.b32.xlu0 %v1051, 1
      %v1056 = vpop.permute.xlu0 %1055
      %1057 = vrot.lane.b32.xlu0 %v1052, 1
      %v1058 = vpop.permute.xlu0 %1057
      %v1061 = vsub.f32 %v1025, %v1056
      %v1062 = vsub.f32 %v1026, %v1058
      %1064 = vset.pattern.permute.xlu0 0
      %1065 = vperm.xlu0 %1064, %v1049
      %v1066 = vpop.permute.xlu0 %1065
      %1069 = vset.pattern.permute.xlu0 0
      %1070 = vperm.xlu0 %1069, %v1050
      %v1071 = vpop.permute.xlu0 %1070
      %v1073 = vmul.f32 %v997, %v1066
      %v1074 = vmul.f32 %v998, %v1066
      %v1075 = vmul.f32 %v999, %v1071
      %v1076 = vmul.f32 %v1000, %v1071
      %1078 = vset.pattern.permute.xlu0 1
      %1079 = vperm.xlu0 %1078, %v1061
      %v1080 = vpop.permute.xlu0 %1079
      %1083 = vset.pattern.permute.xlu0 1
      %1084 = vperm.xlu0 %1083, %v1062
      %v1085 = vpop.permute.xlu0 %1084
      %v1087 = vadd.f32 %v1073, %v1080
      %v1088 = vadd.f32 %v1074, %v1080
      %v1089 = vadd.f32 %v1075, %v1085
      %v1090 = vadd.f32 %v1076, %v1085
      %vm1091 = vcmp.ge.f32.partialorder %v1087, 0.0
      %vm1092 = vcmp.ge.f32.partialorder %v1088, 0.0
      %vm1093 = vcmp.ge.f32.partialorder %v1089, 0.0
      %vm1094 = vcmp.ge.f32.partialorder %v1090, 0.0
      %1096 = vset.pattern.permute.xlu0 2
      %1097 = vperm.xlu0 %1096, %v1025
      %v1098 = vpop.permute.xlu0 %1097
      %1101 = vset.pattern.permute.xlu0 2
      %1102 = vperm.xlu0 %1101, %v1026
      %v1103 = vpop.permute.xlu0 %1102
      %v1105 = vmul.f32 %v1098, %v1087
      %v1106 = vmul.f32 %v1098, %v1088
      %v1107 = vmul.f32 %v1103, %v1089
      %v1108 = vmul.f32 %v1103, %v1090
      %v1109 = vsel %vm1091, %v1087, %v1105
      %v1110 = vsel %vm1092, %v1088, %v1106
      %v1111 = vsel %vm1093, %v1089, %v1107
      %v1112 = vsel %vm1094, %v1090, %v1108
      %v1113 = vld [vmem:[%s2] sm:$0xff]
      %v1114 = vld [vmem:[%s2 + $0x8] sm:$0xff]
      %1115 = vset.pattern.permute.xlu0 3
      %1116 = vperm.xlu0 %1115, %v1025
      %v1117 = vpop.permute.xlu0 %1116
      %1119 = vset.pattern.permute.xlu0 3
      %1120 = vperm.xlu0 %1119, %v1026
      %v1121 = vpop.permute.xlu0 %1120
      %v1124 = vsel %vm597, %v1113, 0
      %v1127 = vsel %vm597, %v1114, 0
      %1129 = vmatpush.msra.mxu0 0.0
      %1130 = vmatpush.msra.mxu0 0.0
      %1131 = vmatpush.msra.mxu0 0.0
      %1132 = vmatpush.msra.mxu0 0.0
      %1133 = vmatpush.msra.mxu0 0.0
      %1134 = vmatpush.msra.mxu0 0.0
      %1135 = vmatpush.msra.mxu0 0.0
      %1136 = vmatpush.msra.mxu0 0.0
      %1137 = vmatpush.msra.mxu0 0.0
      %1138 = vmatpush.msra.mxu0 0.0
      %1139 = vmatpush.msra.mxu0 0.0
      %1140 = vmatpush.msra.mxu0 0.0
      %1141 = vmatpush.msra.mxu0 0.0
      %1142 = vmatpush.msra.mxu0 0.0
      %1143 = vmatpush.msra.mxu0 %v1111
      %1144 = vmatpush.msra.mxu0 %v1109
      %1145 = vmatmul.f32.gmra.mxu0 %v1124
      %v1146 = vpop.f32.mrf.mxu0
      %v1147 = vadd.f32 %v1117, %v1146
      %1148 = vmatmul.f32.gmra.mxu0 %v1127
      %v1149 = vpop.f32.mrf.mxu0
      %v1150 = vadd.f32 %v1121, %v1149
      %1151 = vdwg.mxu0
      %1152 = vmatpush.msra.mxu0 0.0
      %1153 = vmatpush.msra.mxu0 0.0
      %1154 = vmatpush.msra.mxu0 0.0
      %1155 = vmatpush.msra.mxu0 0.0
      %1156 = vmatpush.msra.mxu0 0.0
      %1157 = vmatpush.msra.mxu0 0.0
      %1158 = vmatpush.msra.mxu0 0.0
      %1159 = vmatpush.msra.mxu0 0.0
      %1160 = vmatpush.msra.mxu0 0.0
      %1161 = vmatpush.msra.mxu0 0.0
      %1162 = vmatpush.msra.mxu0 0.0
      %1163 = vmatpush.msra.mxu0 0.0
      %1164 = vmatpush.msra.mxu0 0.0
      %1165 = vmatpush.msra.mxu0 0.0
      %1166 = vmatpush.msra.mxu0 %v1112
      %1167 = vmatpush.msra.mxu0 %v1110
      %1168 = vmatmul.f32.gmra.mxu0 %v1124
      %v1169 = vpop.f32.mrf.mxu0
      %v1170 = vadd.f32 %v1117, %v1169
      %1171 = vmatmul.f32.gmra.mxu0 %v1127
      %v1172 = vpop.f32.mrf.mxu0
      %v1173 = vadd.f32 %v1121, %v1172
      %1174 = vdwg.mxu0
      %v1175 = vmax.f32 %v1147, 0.0
      %v1176 = vmax.f32 %v1170, 0.0
      %v1177 = vmax.f32 %v1150, 0.0
      %v1178 = vmax.f32 %v1173, 0.0
      %s1179 = scalar_lea.vmem %s2, 16
      %v1180 = vld [vmem:[%s1179] sm:$0xff]
      %v1181 = vld [vmem:[%s1179 + $0x8] sm:$0xff]
      %v1183 = vsel %vm597, %v1180, 0
      %v1186 = vsel %vm597, %v1181, 0
      %1188 = vmatpush.msra.mxu0 0.0
      %1189 = vmatpush.msra.mxu0 0.0
      %1190 = vmatpush.msra.mxu0 0.0
      %1191 = vmatpush.msra.mxu0 0.0
      %1192 = vmatpush.msra.mxu0 0.0
      %1193 = vmatpush.msra.mxu0 0.0
      %1194 = vmatpush.msra.mxu0 0.0
      %1195 = vmatpush.msra.mxu0 0.0
      %1196 = vmatpush.msra.mxu0 0.0
      %1197 = vmatpush.msra.mxu0 0.0
      %1198 = vmatpush.msra.mxu0 0.0
      %1199 = vmatpush.msra.mxu0 0.0
      %1200 = vmatpush.msra.mxu0 0.0
      %1201 = vmatpush.msra.mxu0 0.0
      %1202 = vmatpush.msra.mxu0 %v1177
      %1203 = vmatpush.msra.mxu0 %v1175
      %1204 = vmatmul.f32.gmra.mxu0 %v1183
      %v1205 = vpop.f32.mrf.mxu0
      %v1206 = vadd.f32 0.0, %v1205
      %1207 = vmatmul.f32.gmra.mxu0 %v1186
      %v1208 = vpop.f32.mrf.mxu0
      %v1209 = vadd.f32 0.0, %v1208
      %1210 = vdwg.mxu0
      %1211 = vmatpush.msra.mxu0 0.0
      %1212 = vmatpush.msra.mxu0 0.0
      %1213 = vmatpush.msra.mxu0 0.0
      %1214 = vmatpush.msra.mxu0 0.0
      %1215 = vmatpush.msra.mxu0 0.0
      %1216 = vmatpush.msra.mxu0 0.0
      %1217 = vmatpush.msra.mxu0 0.0
      %1218 = vmatpush.msra.mxu0 0.0
      %1219 = vmatpush.msra.mxu0 0.0
      %1220 = vmatpush.msra.mxu0 0.0
      %1221 = vmatpush.msra.mxu0 0.0
      %1222 = vmatpush.msra.mxu0 0.0
      %1223 = vmatpush.msra.mxu0 0.0
      %1224 = vmatpush.msra.mxu0 0.0
      %1225 = vmatpush.msra.mxu0 %v1178
      %1226 = vmatpush.msra.mxu0 %v1176
      %1227 = vmatmul.f32.gmra.mxu0 %v1183
      %v1228 = vpop.f32.mrf.mxu0
      %v1229 = vadd.f32 0.0, %v1228
      %1230 = vmatmul.f32.gmra.mxu0 %v1186
      %v1231 = vpop.f32.mrf.mxu0
      %v1232 = vadd.f32 0.0, %v1231
      %1233 = vdwg.mxu0
      %1234 = vrot.lane.b32.xlu0 %v1206, 4
      %v1235 = vpop.permute.xlu0 %1234
      %1236 = vrot.lane.b32.xlu0 %v1209, 4
      %v1237 = vpop.permute.xlu0 %1236
      %1238 = vrot.lane.b32.xlu0 %v1229, 4
      %v1239 = vpop.permute.xlu0 %1238
      %1240 = vrot.lane.b32.xlu0 %v1232, 4
      %v1241 = vpop.permute.xlu0 %1240
      %vm1242 = vcmp.lt.s32.totalorder %v442, 4
      %v1243 = vsel %vm1242, %v1235, %v1239
      %v1244 = vsel %vm1242, %v1237, %v1241
      %v1245 = vsel %vm1242, %v1239, %v1235
      %v1246 = vsel %vm1242, %v1241, %v1237
      %v1247 = vsel %vm474, 1, 0
      %v1248 = vsel %vm475, 1, 0
      %vm1249 = vcmp.eq.s32.totalorder %v1247, 1
      %vm1250 = vcmp.eq.s32.totalorder %v1248, 1
      %v1251 = vsel %vm1249, %v1245, 0.0
      %v1252 = vsel %vm1250, %v1243, 0.0
      %v1253 = vsel %vm1249, %v1246, 0.0
      %v1254 = vsel %vm1250, %v1244, 0.0
      %1255 = vset.pattern.permute.xlu0 4
      %1256 = vperm.xlu0 %1255, %v1025
      %v1257 = vpop.permute.xlu0 %1256
      %1259 = vset.pattern.permute.xlu0 4
      %1260 = vperm.xlu0 %1259, %v1026
      %v1261 = vpop.permute.xlu0 %1260
      %v1263 = vmul.f32 %v1257, %v1251
      %v1264 = vmul.f32 %v1257, %v1252
      %v1265 = vmul.f32 %v1261, %v1253
      %v1266 = vmul.f32 %v1261, %v1254
      %1267 = vrot.lane.b32.xlu0 %v1206, 3
      %v1268 = vpop.permute.xlu0 %1267
      %1269 = vrot.lane.b32.xlu0 %v1209, 3
      %v1270 = vpop.permute.xlu0 %1269
      %1271 = vrot.lane.b32.xlu0 %v1229, 3
      %v1272 = vpop.permute.xlu0 %1271
      %1273 = vrot.lane.b32.xlu0 %v1232, 3
      %v1274 = vpop.permute.xlu0 %1273
      %vm1275 = vcmp.lt.s32.totalorder %v442, 3
      %v1276 = vsel %vm1275, %v1268, %v1272
      %v1277 = vsel %vm1275, %v1270, %v1274
      %v1278 = vsel %vm1275, %v1272, %v1268
      %v1279 = vsel %vm1275, %v1274, %v1270
      %v1280 = vsel %vm482, 1, 0
      %v1281 = vsel %vm483, 1, 0
      %vm1282 = vcmp.eq.s32.totalorder %v1280, 1
      %vm1283 = vcmp.eq.s32.totalorder %v1281, 1
      %v1284 = vsel %vm1282, %v1278, 0.0
      %v1285 = vsel %vm1283, %v1276, 0.0
      %v1286 = vsel %vm1282, %v1279, 0.0
      %v1287 = vsel %vm1283, %v1277, 0.0
      %1288 = vset.pattern.permute.xlu0 5
      %1289 = vperm.xlu0 %1288, %v1025
      %v1290 = vpop.permute.xlu0 %1289
      %1292 = vset.pattern.permute.xlu0 5
      %1293 = vperm.xlu0 %1292, %v1026
      %v1294 = vpop.permute.xlu0 %1293
      %v1296 = vmul.f32 %v1290, %v1284
      %v1297 = vmul.f32 %v1290, %v1285
      %v1298 = vmul.f32 %v1294, %v1286
      %v1299 = vmul.f32 %v1294, %v1287
      %v1300 = vadd.f32 %v1263, %v1296
      %v1301 = vadd.f32 %v1264, %v1297
      %v1302 = vadd.f32 %v1265, %v1298
      %v1303 = vadd.f32 %v1266, %v1299
      %1304 = vrot.lane.b32.xlu0 %v1206, 2
      %v1305 = vpop.permute.xlu0 %1304
      %1306 = vrot.lane.b32.xlu0 %v1209, 2
      %v1307 = vpop.permute.xlu0 %1306
      %1308 = vrot.lane.b32.xlu0 %v1229, 2
      %v1309 = vpop.permute.xlu0 %1308
      %1310 = vrot.lane.b32.xlu0 %v1232, 2
      %v1311 = vpop.permute.xlu0 %1310
      %vm1312 = vcmp.lt.s32.totalorder %v442, 2
      %v1313 = vsel %vm1312, %v1305, %v1309
      %v1314 = vsel %vm1312, %v1307, %v1311
      %v1315 = vsel %vm1312, %v1309, %v1305
      %v1316 = vsel %vm1312, %v1311, %v1307
      %v1317 = vsel %vm490, 1, 0
      %v1318 = vsel %vm491, 1, 0
      %vm1319 = vcmp.eq.s32.totalorder %v1317, 1
      %vm1320 = vcmp.eq.s32.totalorder %v1318, 1
      %v1321 = vsel %vm1319, %v1315, 0.0
      %v1322 = vsel %vm1320, %v1313, 0.0
      %v1323 = vsel %vm1319, %v1316, 0.0
      %v1324 = vsel %vm1320, %v1314, 0.0
      %1325 = vset.pattern.permute.xlu0 6
      %1326 = vperm.xlu0 %1325, %v1025
      %v1327 = vpop.permute.xlu0 %1326
      %1329 = vset.pattern.permute.xlu0 6
      %1330 = vperm.xlu0 %1329, %v1026
      %v1331 = vpop.permute.xlu0 %1330
      %v1333 = vmul.f32 %v1327, %v1321
      %v1334 = vmul.f32 %v1327, %v1322
      %v1335 = vmul.f32 %v1331, %v1323
      %v1336 = vmul.f32 %v1331, %v1324
      %v1337 = vadd.f32 %v1300, %v1333
      %v1338 = vadd.f32 %v1301, %v1334
      %v1339 = vadd.f32 %v1302, %v1335
      %v1340 = vadd.f32 %v1303, %v1336
      %1341 = vrot.lane.b32.xlu0 %v1206, 1
      %v1342 = vpop.permute.xlu0 %1341
      %1343 = vrot.lane.b32.xlu0 %v1209, 1
      %v1344 = vpop.permute.xlu0 %1343
      %1345 = vrot.lane.b32.xlu0 %v1229, 1
      %v1346 = vpop.permute.xlu0 %1345
      %1347 = vrot.lane.b32.xlu0 %v1232, 1
      %v1348 = vpop.permute.xlu0 %1347
      %v1349 = vsel %vm790, %v1342, %v1346
      %v1350 = vsel %vm790, %v1344, %v1348
      %v1351 = vsel %vm790, %v1346, %v1342
      %v1352 = vsel %vm790, %v1348, %v1344
      %v1353 = vsel %vm797, %v1351, 0.0
      %v1354 = vsel %vm798, %v1349, 0.0
      %v1355 = vsel %vm797, %v1352, 0.0
      %v1356 = vsel %vm798, %v1350, 0.0
      %1357 = vset.pattern.permute.xlu0 7
      %1358 = vperm.xlu0 %1357, %v1025
      %v1359 = vpop.permute.xlu0 %1358
      %1361 = vset.pattern.permute.xlu0 7
      %1362 = vperm.xlu0 %1361, %v1026
      %v1363 = vpop.permute.xlu0 %1362
      %v1365 = vmul.f32 %v1359, %v1353
      %v1366 = vmul.f32 %v1359, %v1354
      %v1367 = vmul.f32 %v1363, %v1355
      %v1368 = vmul.f32 %v1363, %v1356
      %v1369 = vadd.f32 %v1337, %v1365
      %v1370 = vadd.f32 %v1338, %v1366
      %v1371 = vadd.f32 %v1339, %v1367
      %v1372 = vadd.f32 %v1340, %v1368
      %1373 = vset.pattern.permute.xlu0 8
      %1374 = vperm.xlu0 %1373, %v1025
      %v1375 = vpop.permute.xlu0 %1374
      %1377 = vset.pattern.permute.xlu0 8
      %1378 = vperm.xlu0 %1377, %v1026
      %v1379 = vpop.permute.xlu0 %1378
      %v1381 = vmul.f32 %v1375, %v1206
      %v1382 = vmul.f32 %v1375, %v1229
      %v1383 = vmul.f32 %v1379, %v1209
      %v1384 = vmul.f32 %v1379, %v1232
      %v1385 = vadd.f32 %v1369, %v1381
      %v1386 = vadd.f32 %v1370, %v1382
      %v1387 = vadd.f32 %v1371, %v1383
      %v1388 = vadd.f32 %v1372, %v1384
      %1389 = vrot.lane.b32.xlu0 %v1206, 127
      %v1390 = vpop.permute.xlu0 %1389
      %1391 = vrot.lane.b32.xlu0 %v1209, 127
      %v1392 = vpop.permute.xlu0 %1391
      %1393 = vrot.lane.b32.xlu0 %v1229, 127
      %v1394 = vpop.permute.xlu0 %1393
      %1395 = vrot.lane.b32.xlu0 %v1232, 127
      %v1396 = vpop.permute.xlu0 %1395
      %v1397 = vsel %vm929, %v1390, %v1394
      %v1398 = vsel %vm929, %v1392, %v1396
      %v1399 = vsel %vm929, %v1394, %v1390
      %v1400 = vsel %vm929, %v1396, %v1392
      %v1401 = vsel %vm936, %v1397, 0.0
      %v1402 = vsel %vm937, %v1399, 0.0
      %v1403 = vsel %vm936, %v1398, 0.0
      %v1404 = vsel %vm937, %v1400, 0.0
      %1405 = vset.pattern.permute.xlu0 9
      %1406 = vperm.xlu0 %1405, %v1025
      %v1407 = vpop.permute.xlu0 %1406
      %1409 = vset.pattern.permute.xlu0 9
      %1410 = vperm.xlu0 %1409, %v1026
      %v1411 = vpop.permute.xlu0 %1410
      %v1413 = vmul.f32 %v1407, %v1401
      %v1414 = vmul.f32 %v1407, %v1402
      %v1415 = vmul.f32 %v1411, %v1403
      %v1416 = vmul.f32 %v1411, %v1404
      %v1417 = vadd.f32 %v1385, %v1413
      %v1418 = vadd.f32 %v1386, %v1414
      %v1419 = vadd.f32 %v1387, %v1415
      %v1420 = vadd.f32 %v1388, %v1416
      %1421 = vrot.lane.b32.xlu0 %v1206, 126
      %v1422 = vpop.permute.xlu0 %1421
      %1423 = vrot.lane.b32.xlu0 %v1209, 126
      %v1424 = vpop.permute.xlu0 %1423
      %1425 = vrot.lane.b32.xlu0 %v1229, 126
      %v1426 = vpop.permute.xlu0 %1425
      %1427 = vrot.lane.b32.xlu0 %v1232, 126
      %v1428 = vpop.permute.xlu0 %1427
      %vm1429 = vcmp.lt.s32.totalorder %v442, 126
      %v1430 = vsel %vm1429, %v1422, %v1426
      %v1431 = vsel %vm1429, %v1424, %v1428
      %v1432 = vsel %vm1429, %v1426, %v1422
      %v1433 = vsel %vm1429, %v1428, %v1424
      %v1434 = vsel %vm514, 1, 0
      %v1435 = vsel %vm515, 1, 0
      %vm1436 = vcmp.eq.s32.totalorder %v1434, 1
      %vm1437 = vcmp.eq.s32.totalorder %v1435, 1
      %v1438 = vsel %vm1436, %v1430, 0.0
      %v1439 = vsel %vm1437, %v1432, 0.0
      %v1440 = vsel %vm1436, %v1431, 0.0
      %v1441 = vsel %vm1437, %v1433, 0.0
      %1442 = vset.pattern.permute.xlu0 10
      %1443 = vperm.xlu0 %1442, %v1025
      %v1444 = vpop.permute.xlu0 %1443
      %1446 = vset.pattern.permute.xlu0 10
      %1447 = vperm.xlu0 %1446, %v1026
      %v1448 = vpop.permute.xlu0 %1447
      %v1450 = vmul.f32 %v1444, %v1438
      %v1451 = vmul.f32 %v1444, %v1439
      %v1452 = vmul.f32 %v1448, %v1440
      %v1453 = vmul.f32 %v1448, %v1441
      %v1454 = vadd.f32 %v1417, %v1450
      %v1455 = vadd.f32 %v1418, %v1451
      %v1456 = vadd.f32 %v1419, %v1452
      %v1457 = vadd.f32 %v1420, %v1453
      %1458 = vrot.lane.b32.xlu0 %v1206, 125
      %v1459 = vpop.permute.xlu0 %1458
      %1460 = vrot.lane.b32.xlu0 %v1209, 125
      %v1461 = vpop.permute.xlu0 %1460
      %1462 = vrot.lane.b32.xlu0 %v1229, 125
      %v1463 = vpop.permute.xlu0 %1462
      %1464 = vrot.lane.b32.xlu0 %v1232, 125
      %v1465 = vpop.permute.xlu0 %1464
      %vm1466 = vcmp.lt.s32.totalorder %v442, 125
      %v1467 = vsel %vm1466, %v1459, %v1463
      %v1468 = vsel %vm1466, %v1461, %v1465
      %v1469 = vsel %vm1466, %v1463, %v1459
      %v1470 = vsel %vm1466, %v1465, %v1461
      %v1471 = vsel %vm522, 1, 0
      %v1472 = vsel %vm523, 1, 0
      %vm1473 = vcmp.eq.s32.totalorder %v1471, 1
      %vm1474 = vcmp.eq.s32.totalorder %v1472, 1
      %v1475 = vsel %vm1473, %v1467, 0.0
      %v1476 = vsel %vm1474, %v1469, 0.0
      %v1477 = vsel %vm1473, %v1468, 0.0
      %v1478 = vsel %vm1474, %v1470, 0.0
      %1479 = vset.pattern.permute.xlu0 11
      %1480 = vperm.xlu0 %1479, %v1025
      %v1481 = vpop.permute.xlu0 %1480
      %1483 = vset.pattern.permute.xlu0 11
      %1484 = vperm.xlu0 %1483, %v1026
      %v1485 = vpop.permute.xlu0 %1484
      %v1487 = vmul.f32 %v1481, %v1475
      %v1488 = vmul.f32 %v1481, %v1476
      %v1489 = vmul.f32 %v1485, %v1477
      %v1490 = vmul.f32 %v1485, %v1478
      %v1491 = vadd.f32 %v1454, %v1487
      %v1492 = vadd.f32 %v1455, %v1488
      %v1493 = vadd.f32 %v1456, %v1489
      %v1494 = vadd.f32 %v1457, %v1490
      %1495 = vrot.lane.b32.xlu0 %v1206, 124
      %v1496 = vpop.permute.xlu0 %1495
      %1497 = vrot.lane.b32.xlu0 %v1209, 124
      %v1498 = vpop.permute.xlu0 %1497
      %1499 = vrot.lane.b32.xlu0 %v1229, 124
      %v1500 = vpop.permute.xlu0 %1499
      %1501 = vrot.lane.b32.xlu0 %v1232, 124
      %v1502 = vpop.permute.xlu0 %1501
      %vm1503 = vcmp.lt.s32.totalorder %v442, 124
      %v1504 = vsel %vm1503, %v1496, %v1500
      %v1505 = vsel %vm1503, %v1498, %v1502
      %v1506 = vsel %vm1503, %v1500, %v1496
      %v1507 = vsel %vm1503, %v1502, %v1498
      %v1508 = vsel %vm530, 1, 0
      %v1509 = vsel %vm531, 1, 0
      %vm1510 = vcmp.eq.s32.totalorder %v1508, 1
      %vm1511 = vcmp.eq.s32.totalorder %v1509, 1
      %v1512 = vsel %vm1510, %v1504, 0.0
      %v1513 = vsel %vm1511, %v1506, 0.0
      %v1514 = vsel %vm1510, %v1505, 0.0
      %v1515 = vsel %vm1511, %v1507, 0.0
      %1516 = vset.pattern.permute.xlu0 12
      %1517 = vperm.xlu0 %1516, %v1025
      %v1518 = vpop.permute.xlu0 %1517
      %1520 = vset.pattern.permute.xlu0 12
      %1521 = vperm.xlu0 %1520, %v1026
      %v1522 = vpop.permute.xlu0 %1521
      %v1524 = vmul.f32 %v1518, %v1512
      %v1525 = vmul.f32 %v1518, %v1513
      %v1526 = vmul.f32 %v1522, %v1514
      %v1527 = vmul.f32 %v1522, %v1515
      %v1528 = vadd.f32 %v1491, %v1524
      %v1529 = vadd.f32 %v1492, %v1525
      %v1530 = vadd.f32 %v1493, %v1526
      %v1531 = vadd.f32 %v1494, %v1527
      %v1532 = vadd.f32 %v1109, %v1206
      %v1533 = vadd.f32 %v1110, %v1229
      %v1534 = vadd.f32 %v1111, %v1209
      %v1535 = vadd.f32 %v1112, %v1232
      %v1536 = vadd.f32 %v1532, %v1528
      %v1537 = vadd.f32 %v1533, %v1529
      %v1538 = vadd.f32 %v1534, %v1530
      %v1539 = vadd.f32 %v1535, %v1531
      %1540 = vst [vmem:[#allocation2 + $0x40] sm:$0xff] %v1536
      %1541 = vst [vmem:[#allocation2 + $0x48] sm:$0xff] %v1537
      %1542 = vst [vmem:[#allocation2 + $0x50] sm:$0xff] %v1538
      %1543 = vst [vmem:[#allocation2 + $0x58] sm:$0xff] %v1539
      %v1544 = vld [vmem:[#allocation2 + $0x40] sm:$0xff]
      %v1545 = vld [vmem:[#allocation2 + $0x48] sm:$0xff]
      %v1546 = vld [vmem:[#allocation2 + $0x50] sm:$0xff]
      %v1547 = vld [vmem:[#allocation2 + $0x58] sm:$0xff]
      %v1548 = vld [vmem:[#allocation2 + $0x60] sm:$0xff]
      %v1549 = vld [vmem:[#allocation2 + $0x68] sm:$0xff]
      %v1550 = vld [vmem:[#allocation2 + $0x70] sm:$0xff]
      %v1551 = vld [vmem:[#allocation2 + $0x78] sm:$0xff]
      %vm1552 = vcmp.ge.s32.totalorder %v442, 32
      %vm1553 = vcmp.ge.s32.totalorder %v443, 32
      %vm1554 = vmand %vm1552, %vm498
      %vm1555 = vmand %vm1553, %vm499
      %vm1556 = vmand %vm1552, %vm506
      %vm1557 = vmand %vm1553, %vm507
      %1558 = vrot.lane.b32.xlu0 %v1544, 33
      %v1559 = vpop.permute.xlu0 %1558
      %1560 = vrot.lane.b32.xlu0 %v1546, 33
      %v1561 = vpop.permute.xlu0 %1560
      %1562 = vrot.lane.b32.xlu0 %v1548, 33
      %v1563 = vpop.permute.xlu0 %1562
      %1564 = vrot.lane.b32.xlu0 %v1550, 33
      %v1565 = vpop.permute.xlu0 %1564
      %1566 = vrot.lane.b32.xlu0 %v1545, 33
      %v1567 = vpop.permute.xlu0 %1566
      %1568 = vrot.lane.b32.xlu0 %v1547, 33
      %v1569 = vpop.permute.xlu0 %1568
      %1570 = vrot.lane.b32.xlu0 %v1549, 33
      %v1571 = vpop.permute.xlu0 %1570
      %1572 = vrot.lane.b32.xlu0 %v1551, 33
      %v1573 = vpop.permute.xlu0 %1572
      %vm1574 = vcmp.lt.s32.totalorder %v442, 33
      %v1575 = vsel %vm1574, %v1559, %v1567
      %v1576 = vsel %vm1574, %v1561, %v1569
      %v1577 = vsel %vm1574, %v1563, %v1571
      %v1578 = vsel %vm1574, %v1565, %v1573
      %v1579 = vsel %vm1574, %v1567, %v1559
      %v1580 = vsel %vm1574, %v1569, %v1561
      %v1581 = vsel %vm1574, %v1571, %v1563
      %v1582 = vsel %vm1574, %v1573, %v1565
      %v1583 = vsel %vm1554, 1, 0
      %v1584 = vsel %vm1555, 1, 0
      %vm1585 = vcmp.eq.s32.totalorder %v1583, 1
      %vm1586 = vcmp.eq.s32.totalorder %v1584, 1
      %v1587 = vsel %vm1585, %v1579, 0.0
      %v1588 = vsel %vm1586, %v1575, 0.0
      %v1589 = vsel %vm1585, %v1580, 0.0
      %v1590 = vsel %vm1586, %v1576, 0.0
      %v1591 = vsel %vm1585, %v1581, 0.0
      %v1592 = vsel %vm1586, %v1577, 0.0
      %v1593 = vsel %vm1585, %v1582, 0.0
      %v1594 = vsel %vm1586, %v1578, 0.0
      %v1595 = vld [vmem:[%s4] sm:$0xff]
      %v1596 = vld [vmem:[%s4 + $0x8] sm:$0xff]
      %1597 = vrot.lane.b32.xlu0 %v1544, 32
      %v1598 = vpop.permute.xlu0 %1597
      %1599 = vrot.lane.b32.xlu0 %v1546, 32
      %v1600 = vpop.permute.xlu0 %1599
      %1601 = vrot.lane.b32.xlu0 %v1548, 32
      %v1602 = vpop.permute.xlu0 %1601
      %1603 = vrot.lane.b32.xlu0 %v1550, 32
      %v1604 = vpop.permute.xlu0 %1603
      %1605 = vrot.lane.b32.xlu0 %v1545, 32
      %v1606 = vpop.permute.xlu0 %1605
      %1607 = vrot.lane.b32.xlu0 %v1547, 32
      %v1608 = vpop.permute.xlu0 %1607
      %1609 = vrot.lane.b32.xlu0 %v1549, 32
      %v1610 = vpop.permute.xlu0 %1609
      %1611 = vrot.lane.b32.xlu0 %v1551, 32
      %v1612 = vpop.permute.xlu0 %1611
      %vm1613 = vcmp.lt.s32.totalorder %v442, 32
      %v1614 = vsel %vm1613, %v1598, %v1606
      %v1615 = vsel %vm1613, %v1600, %v1608
      %v1616 = vsel %vm1613, %v1602, %v1610
      %v1617 = vsel %vm1613, %v1604, %v1612
      %v1618 = vsel %vm1613, %v1606, %v1598
      %v1619 = vsel %vm1613, %v1608, %v1600
      %v1620 = vsel %vm1613, %v1610, %v1602
      %v1621 = vsel %vm1613, %v1612, %v1604
      %v1622 = vsel %vm1552, 1, 0
      %v1623 = vsel %vm1553, 1, 0
      %vm1624 = vcmp.eq.s32.totalorder %v1622, 1
      %vm1625 = vcmp.eq.s32.totalorder %v1623, 1
      %v1626 = vsel %vm1624, %v1618, 0.0
      %v1627 = vsel %vm1625, %v1614, 0.0
      %v1628 = vsel %vm1624, %v1619, 0.0
      %v1629 = vsel %vm1625, %v1615, 0.0
      %v1630 = vsel %vm1624, %v1620, 0.0
      %v1631 = vsel %vm1625, %v1616, 0.0
      %v1632 = vsel %vm1624, %v1621, 0.0
      %v1633 = vsel %vm1625, %v1617, 0.0
      %s1634 = scalar_lea.vmem %s4, 16
      %v1635 = vld [vmem:[%s1634] sm:$0xff]
      %v1636 = vld [vmem:[%s1634 + $0x8] sm:$0xff]
      %vm1637 = vcmask 261120
      %v1639 = vsel %vm1637, %v1635, 0
      %v1642 = vsel %vm1637, %v1636, 0
      %1644 = vmatpush.msra.mxu0 0.0
      %1645 = vmatpush.msra.mxu0 0.0
      %1646 = vmatpush.msra.mxu0 0.0
      %1647 = vmatpush.msra.mxu0 0.0
      %1648 = vmatpush.msra.mxu0 0.0
      %1649 = vmatpush.msra.mxu0 0.0
      %1650 = vmatpush.msra.mxu0 0.0
      %1651 = vmatpush.msra.mxu0 0.0
      %1652 = vmatpush.msra.mxu0 0.0
      %1653 = vmatpush.msra.mxu0 0.0
      %1654 = vmatpush.msra.mxu0 0.0
      %1655 = vmatpush.msra.mxu0 0.0
      %1656 = vmatpush.msra.mxu0 %v1632
      %1657 = vmatpush.msra.mxu0 %v1630
      %1658 = vmatpush.msra.mxu0 %v1628
      %1659 = vmatpush.msra.mxu0 %v1626
      %1660 = vmatmul.f32.gmra.mxu0 %v1639
      %v1661 = vpop.f32.mrf.mxu0
      %v1662 = vadd.f32 0.0, %v1661
      %1663 = vmatmul.f32.gmra.mxu0 %v1642
      %v1664 = vpop.f32.mrf.mxu0
      %v1665 = vadd.f32 0.0, %v1664
      %1666 = vdwg.mxu0
      %1667 = vmatpush.msra.mxu0 0.0
      %1668 = vmatpush.msra.mxu0 0.0
      %1669 = vmatpush.msra.mxu0 0.0
      %1670 = vmatpush.msra.mxu0 0.0
      %1671 = vmatpush.msra.mxu0 0.0
      %1672 = vmatpush.msra.mxu0 0.0
      %1673 = vmatpush.msra.mxu0 0.0
      %1674 = vmatpush.msra.mxu0 0.0
      %1675 = vmatpush.msra.mxu0 0.0
      %1676 = vmatpush.msra.mxu0 0.0
      %1677 = vmatpush.msra.mxu0 0.0
      %1678 = vmatpush.msra.mxu0 0.0
      %1679 = vmatpush.msra.mxu0 %v1633
      %1680 = vmatpush.msra.mxu0 %v1631
      %1681 = vmatpush.msra.mxu0 %v1629
      %1682 = vmatpush.msra.mxu0 %v1627
      %1683 = vmatmul.f32.gmra.mxu0 %v1639
      %v1684 = vpop.f32.mrf.mxu0
      %v1685 = vadd.f32 0.0, %v1684
      %1686 = vmatmul.f32.gmra.mxu0 %v1642
      %v1687 = vpop.f32.mrf.mxu0
      %v1688 = vadd.f32 0.0, %v1687
      %1689 = vdwg.mxu0
      %v1691 = vsel %vm1637, %v1595, 0
      %v1694 = vsel %vm1637, %v1596, 0
      %1696 = vmatpush.msra.mxu0 0.0
      %1697 = vmatpush.msra.mxu0 0.0
      %1698 = vmatpush.msra.mxu0 0.0
      %1699 = vmatpush.msra.mxu0 0.0
      %1700 = vmatpush.msra.mxu0 0.0
      %1701 = vmatpush.msra.mxu0 0.0
      %1702 = vmatpush.msra.mxu0 0.0
      %1703 = vmatpush.msra.mxu0 0.0
      %1704 = vmatpush.msra.mxu0 0.0
      %1705 = vmatpush.msra.mxu0 0.0
      %1706 = vmatpush.msra.mxu0 0.0
      %1707 = vmatpush.msra.mxu0 0.0
      %1708 = vmatpush.msra.mxu0 %v1593
      %1709 = vmatpush.msra.mxu0 %v1591
      %1710 = vmatpush.msra.mxu0 %v1589
      %1711 = vmatpush.msra.mxu0 %v1587
      %1712 = vmatmul.f32.gmra.mxu0 %v1691
      %v1713 = vpop.f32.mrf.mxu0
      %v1714 = vadd.f32 %v1662, %v1713
      %1715 = vmatmul.f32.gmra.mxu0 %v1694
      %v1716 = vpop.f32.mrf.mxu0
      %v1717 = vadd.f32 %v1665, %v1716
      %1718 = vdwg.mxu0
      %1719 = vmatpush.msra.mxu0 0.0
      %1720 = vmatpush.msra.mxu0 0.0
      %1721 = vmatpush.msra.mxu0 0.0
      %1722 = vmatpush.msra.mxu0 0.0
      %1723 = vmatpush.msra.mxu0 0.0
      %1724 = vmatpush.msra.mxu0 0.0
      %1725 = vmatpush.msra.mxu0 0.0
      %1726 = vmatpush.msra.mxu0 0.0
      %1727 = vmatpush.msra.mxu0 0.0
      %1728 = vmatpush.msra.mxu0 0.0
      %1729 = vmatpush.msra.mxu0 0.0
      %1730 = vmatpush.msra.mxu0 0.0
      %1731 = vmatpush.msra.mxu0 %v1594
      %1732 = vmatpush.msra.mxu0 %v1592
      %1733 = vmatpush.msra.mxu0 %v1590
      %1734 = vmatpush.msra.mxu0 %v1588
      %1735 = vmatmul.f32.gmra.mxu0 %v1691
      %v1736 = vpop.f32.mrf.mxu0
      %v1737 = vadd.f32 %v1685, %v1736
      %1738 = vmatmul.f32.gmra.mxu0 %v1694
      %v1739 = vpop.f32.mrf.mxu0
      %v1740 = vadd.f32 %v1688, %v1739
      %1741 = vdwg.mxu0
      %1742 = vrot.lane.b32.xlu0 %v1544, 31
      %v1743 = vpop.permute.xlu0 %1742
      %1744 = vrot.lane.b32.xlu0 %v1546, 31
      %v1745 = vpop.permute.xlu0 %1744
      %1746 = vrot.lane.b32.xlu0 %v1548, 31
      %v1747 = vpop.permute.xlu0 %1746
      %1748 = vrot.lane.b32.xlu0 %v1550, 31
      %v1749 = vpop.permute.xlu0 %1748
      %1750 = vrot.lane.b32.xlu0 %v1545, 31
      %v1751 = vpop.permute.xlu0 %1750
      %1752 = vrot.lane.b32.xlu0 %v1547, 31
      %v1753 = vpop.permute.xlu0 %1752
      %1754 = vrot.lane.b32.xlu0 %v1549, 31
      %v1755 = vpop.permute.xlu0 %1754
      %1756 = vrot.lane.b32.xlu0 %v1551, 31
      %v1757 = vpop.permute.xlu0 %1756
      %vm1758 = vcmp.lt.s32.totalorder %v442, 31
      %v1759 = vsel %vm1758, %v1743, %v1751
      %v1760 = vsel %vm1758, %v1745, %v1753
      %v1761 = vsel %vm1758, %v1747, %v1755
      %v1762 = vsel %vm1758, %v1749, %v1757
      %v1763 = vsel %vm1758, %v1751, %v1743
      %v1764 = vsel %vm1758, %v1753, %v1745
      %v1765 = vsel %vm1758, %v1755, %v1747
      %v1766 = vsel %vm1758, %v1757, %v1749
      %v1767 = vsel %vm1556, 1, 0
      %v1768 = vsel %vm1557, 1, 0
      %vm1769 = vcmp.eq.s32.totalorder %v1767, 1
      %vm1770 = vcmp.eq.s32.totalorder %v1768, 1
      %v1771 = vsel %vm1769, %v1763, 0.0
      %v1772 = vsel %vm1770, %v1759, 0.0
      %v1773 = vsel %vm1769, %v1764, 0.0
      %v1774 = vsel %vm1770, %v1760, 0.0
      %v1775 = vsel %vm1769, %v1765, 0.0
      %v1776 = vsel %vm1770, %v1761, 0.0
      %v1777 = vsel %vm1769, %v1766, 0.0
      %v1778 = vsel %vm1770, %v1762, 0.0
      %s1779 = scalar_lea.vmem %s4, 32
      %v1780 = vld [vmem:[%s1779] sm:$0xff]
      %v1781 = vld [vmem:[%s1779 + $0x8] sm:$0xff]
      %v1783 = vsel %vm1637, %v1780, 0
      %v1786 = vsel %vm1637, %v1781, 0
      %1788 = vmatpush.msra.mxu0 0.0
      %1789 = vmatpush.msra.mxu0 0.0
      %1790 = vmatpush.msra.mxu0 0.0
      %1791 = vmatpush.msra.mxu0 0.0
      %1792 = vmatpush.msra.mxu0 0.0
      %1793 = vmatpush.msra.mxu0 0.0
      %1794 = vmatpush.msra.mxu0 0.0
      %1795 = vmatpush.msra.mxu0 0.0
      %1796 = vmatpush.msra.mxu0 0.0
      %1797 = vmatpush.msra.mxu0 0.0
      %1798 = vmatpush.msra.mxu0 0.0
      %1799 = vmatpush.msra.mxu0 0.0
      %1800 = vmatpush.msra.mxu0 %v1777
      %1801 = vmatpush.msra.mxu0 %v1775
      %1802 = vmatpush.msra.mxu0 %v1773
      %1803 = vmatpush.msra.mxu0 %v1771
      %1804 = vmatmul.f32.gmra.mxu0 %v1783
      %v1805 = vpop.f32.mrf.mxu0
      %v1806 = vadd.f32 0.0, %v1805
      %1807 = vmatmul.f32.gmra.mxu0 %v1786
      %v1808 = vpop.f32.mrf.mxu0
      %v1809 = vadd.f32 0.0, %v1808
      %1810 = vdwg.mxu0
      %1811 = vmatpush.msra.mxu0 0.0
      %1812 = vmatpush.msra.mxu0 0.0
      %1813 = vmatpush.msra.mxu0 0.0
      %1814 = vmatpush.msra.mxu0 0.0
      %1815 = vmatpush.msra.mxu0 0.0
      %1816 = vmatpush.msra.mxu0 0.0
      %1817 = vmatpush.msra.mxu0 0.0
      %1818 = vmatpush.msra.mxu0 0.0
      %1819 = vmatpush.msra.mxu0 0.0
      %1820 = vmatpush.msra.mxu0 0.0
      %1821 = vmatpush.msra.mxu0 0.0
      %1822 = vmatpush.msra.mxu0 0.0
      %1823 = vmatpush.msra.mxu0 %v1778
      %1824 = vmatpush.msra.mxu0 %v1776
      %1825 = vmatpush.msra.mxu0 %v1774
      %1826 = vmatpush.msra.mxu0 %v1772
      %1827 = vmatmul.f32.gmra.mxu0 %v1783
      %v1828 = vpop.f32.mrf.mxu0
      %v1829 = vadd.f32 0.0, %v1828
      %1830 = vmatmul.f32.gmra.mxu0 %v1786
      %v1831 = vpop.f32.mrf.mxu0
      %v1832 = vadd.f32 0.0, %v1831
      %1833 = vdwg.mxu0
      %v1834 = vadd.f32 %v1714, %v1806
      %v1835 = vadd.f32 %v1737, %v1829
      %v1836 = vadd.f32 %v1717, %v1809
      %v1837 = vadd.f32 %v1740, %v1832
      %1838 = vrot.lane.b32.xlu0 %v1544, 1
      %v1839 = vpop.permute.xlu0 %1838
      %1840 = vrot.lane.b32.xlu0 %v1546, 1
      %v1841 = vpop.permute.xlu0 %1840
      %1842 = vrot.lane.b32.xlu0 %v1548, 1
      %v1843 = vpop.permute.xlu0 %1842
      %1844 = vrot.lane.b32.xlu0 %v1550, 1
      %v1845 = vpop.permute.xlu0 %1844
      %1846 = vrot.lane.b32.xlu0 %v1545, 1
      %v1847 = vpop.permute.xlu0 %1846
      %1848 = vrot.lane.b32.xlu0 %v1547, 1
      %v1849 = vpop.permute.xlu0 %1848
      %1850 = vrot.lane.b32.xlu0 %v1549, 1
      %v1851 = vpop.permute.xlu0 %1850
      %1852 = vrot.lane.b32.xlu0 %v1551, 1
      %v1853 = vpop.permute.xlu0 %1852
      %v1854 = vsel %vm790, %v1839, %v1847
      %v1855 = vsel %vm790, %v1841, %v1849
      %v1856 = vsel %vm790, %v1843, %v1851
      %v1857 = vsel %vm790, %v1845, %v1853
      %v1858 = vsel %vm790, %v1847, %v1839
      %v1859 = vsel %vm790, %v1849, %v1841
      %v1860 = vsel %vm790, %v1851, %v1843
      %v1861 = vsel %vm790, %v1853, %v1845
      %v1862 = vsel %vm797, %v1858, 0.0
      %v1863 = vsel %vm798, %v1854, 0.0
      %v1864 = vsel %vm797, %v1859, 0.0
      %v1865 = vsel %vm798, %v1855, 0.0
      %v1866 = vsel %vm797, %v1860, 0.0
      %v1867 = vsel %vm798, %v1856, 0.0
      %v1868 = vsel %vm797, %v1861, 0.0
      %v1869 = vsel %vm798, %v1857, 0.0
      %s1870 = scalar_lea.vmem %s4, 48
      %v1871 = vld [vmem:[%s1870] sm:$0xff]
      %v1872 = vld [vmem:[%s1870 + $0x8] sm:$0xff]
      %v1874 = vsel %vm1637, %v1871, 0
      %v1877 = vsel %vm1637, %v1872, 0
      %1879 = vmatpush.msra.mxu0 0.0
      %1880 = vmatpush.msra.mxu0 0.0
      %1881 = vmatpush.msra.mxu0 0.0
      %1882 = vmatpush.msra.mxu0 0.0
      %1883 = vmatpush.msra.mxu0 0.0
      %1884 = vmatpush.msra.mxu0 0.0
      %1885 = vmatpush.msra.mxu0 0.0
      %1886 = vmatpush.msra.mxu0 0.0
      %1887 = vmatpush.msra.mxu0 0.0
      %1888 = vmatpush.msra.mxu0 0.0
      %1889 = vmatpush.msra.mxu0 0.0
      %1890 = vmatpush.msra.mxu0 0.0
      %1891 = vmatpush.msra.mxu0 %v1868
      %1892 = vmatpush.msra.mxu0 %v1866
      %1893 = vmatpush.msra.mxu0 %v1864
      %1894 = vmatpush.msra.mxu0 %v1862
      %1895 = vmatmul.f32.gmra.mxu0 %v1874
      %v1896 = vpop.f32.mrf.mxu0
      %v1897 = vadd.f32 0.0, %v1896
      %1898 = vmatmul.f32.gmra.mxu0 %v1877
      %v1899 = vpop.f32.mrf.mxu0
      %v1900 = vadd.f32 0.0, %v1899
      %1901 = vdwg.mxu0
      %1902 = vmatpush.msra.mxu0 0.0
      %1903 = vmatpush.msra.mxu0 0.0
      %1904 = vmatpush.msra.mxu0 0.0
      %1905 = vmatpush.msra.mxu0 0.0
      %1906 = vmatpush.msra.mxu0 0.0
      %1907 = vmatpush.msra.mxu0 0.0
      %1908 = vmatpush.msra.mxu0 0.0
      %1909 = vmatpush.msra.mxu0 0.0
      %1910 = vmatpush.msra.mxu0 0.0
      %1911 = vmatpush.msra.mxu0 0.0
      %1912 = vmatpush.msra.mxu0 0.0
      %1913 = vmatpush.msra.mxu0 0.0
      %1914 = vmatpush.msra.mxu0 %v1869
      %1915 = vmatpush.msra.mxu0 %v1867
      %1916 = vmatpush.msra.mxu0 %v1865
      %1917 = vmatpush.msra.mxu0 %v1863
      %1918 = vmatmul.f32.gmra.mxu0 %v1874
      %v1919 = vpop.f32.mrf.mxu0
      %v1920 = vadd.f32 0.0, %v1919
      %1921 = vmatmul.f32.gmra.mxu0 %v1877
      %v1922 = vpop.f32.mrf.mxu0
      %v1923 = vadd.f32 0.0, %v1922
      %1924 = vdwg.mxu0
      %v1925 = vadd.f32 %v1834, %v1897
      %v1926 = vadd.f32 %v1835, %v1920
      %v1927 = vadd.f32 %v1836, %v1900
      %v1928 = vadd.f32 %v1837, %v1923
      %s1929 = scalar_lea.vmem %s4, 64
      %v1930 = vld [vmem:[%s1929] sm:$0xff]
      %v1931 = vld [vmem:[%s1929 + $0x8] sm:$0xff]
      %v1933 = vsel %vm1637, %v1930, 0
      %v1936 = vsel %vm1637, %v1931, 0
      %1938 = vmatpush.msra.mxu0 0.0
      %1939 = vmatpush.msra.mxu0 0.0
      %1940 = vmatpush.msra.mxu0 0.0
      %1941 = vmatpush.msra.mxu0 0.0
      %1942 = vmatpush.msra.mxu0 0.0
      %1943 = vmatpush.msra.mxu0 0.0
      %1944 = vmatpush.msra.mxu0 0.0
      %1945 = vmatpush.msra.mxu0 0.0
      %1946 = vmatpush.msra.mxu0 0.0
      %1947 = vmatpush.msra.mxu0 0.0
      %1948 = vmatpush.msra.mxu0 0.0
      %1949 = vmatpush.msra.mxu0 0.0
      %1950 = vmatpush.msra.mxu0 %v1550
      %1951 = vmatpush.msra.mxu0 %v1548
      %1952 = vmatpush.msra.mxu0 %v1546
      %1953 = vmatpush.msra.mxu0 %v1544
      %1954 = vmatmul.f32.gmra.mxu0 %v1933
      %v1955 = vpop.f32.mrf.mxu0
      %v1956 = vadd.f32 0.0, %v1955
      %1957 = vmatmul.f32.gmra.mxu0 %v1936
      %v1958 = vpop.f32.mrf.mxu0
      %v1959 = vadd.f32 0.0, %v1958
      %1960 = vdwg.mxu0
      %1961 = vmatpush.msra.mxu0 0.0
      %1962 = vmatpush.msra.mxu0 0.0
      %1963 = vmatpush.msra.mxu0 0.0
      %1964 = vmatpush.msra.mxu0 0.0
      %1965 = vmatpush.msra.mxu0 0.0
      %1966 = vmatpush.msra.mxu0 0.0
      %1967 = vmatpush.msra.mxu0 0.0
      %1968 = vmatpush.msra.mxu0 0.0
      %1969 = vmatpush.msra.mxu0 0.0
      %1970 = vmatpush.msra.mxu0 0.0
      %1971 = vmatpush.msra.mxu0 0.0
      %1972 = vmatpush.msra.mxu0 0.0
      %1973 = vmatpush.msra.mxu0 %v1551
      %1974 = vmatpush.msra.mxu0 %v1549
      %1975 = vmatpush.msra.mxu0 %v1547
      %1976 = vmatpush.msra.mxu0 %v1545
      %1977 = vmatmul.f32.gmra.mxu0 %v1933
      %v1978 = vpop.f32.mrf.mxu0
      %v1979 = vadd.f32 0.0, %v1978
      %1980 = vmatmul.f32.gmra.mxu0 %v1936
      %v1981 = vpop.f32.mrf.mxu0
      %v1982 = vadd.f32 0.0, %v1981
      %1983 = vdwg.mxu0
      %v1984 = vadd.f32 %v1925, %v1956
      %v1985 = vadd.f32 %v1926, %v1979
      %v1986 = vadd.f32 %v1927, %v1959
      %v1987 = vadd.f32 %v1928, %v1982
      %1988 = vrot.lane.b32.xlu0 %v1544, 127
      %v1989 = vpop.permute.xlu0 %1988
      %1990 = vrot.lane.b32.xlu0 %v1546, 127
      %v1991 = vpop.permute.xlu0 %1990
      %1992 = vrot.lane.b32.xlu0 %v1548, 127
      %v1993 = vpop.permute.xlu0 %1992
      %1994 = vrot.lane.b32.xlu0 %v1550, 127
      %v1995 = vpop.permute.xlu0 %1994
      %1996 = vrot.lane.b32.xlu0 %v1545, 127
      %v1997 = vpop.permute.xlu0 %1996
      %1998 = vrot.lane.b32.xlu0 %v1547, 127
      %v1999 = vpop.permute.xlu0 %1998
      %2000 = vrot.lane.b32.xlu0 %v1549, 127
      %v2001 = vpop.permute.xlu0 %2000
      %2002 = vrot.lane.b32.xlu0 %v1551, 127
      %v2003 = vpop.permute.xlu0 %2002
      %v2004 = vsel %vm929, %v1989, %v1997
      %v2005 = vsel %vm929, %v1991, %v1999
      %v2006 = vsel %vm929, %v1993, %v2001
      %v2007 = vsel %vm929, %v1995, %v2003
      %v2008 = vsel %vm929, %v1997, %v1989
      %v2009 = vsel %vm929, %v1999, %v1991
      %v2010 = vsel %vm929, %v2001, %v1993
      %v2011 = vsel %vm929, %v2003, %v1995
      %v2012 = vsel %vm936, %v2004, 0.0
      %v2013 = vsel %vm937, %v2008, 0.0
      %v2014 = vsel %vm936, %v2005, 0.0
      %v2015 = vsel %vm937, %v2009, 0.0
      %v2016 = vsel %vm936, %v2006, 0.0
      %v2017 = vsel %vm937, %v2010, 0.0
      %v2018 = vsel %vm936, %v2007, 0.0
      %v2019 = vsel %vm937, %v2011, 0.0
      %s2020 = scalar_lea.vmem %s4, 80
      %v2021 = vld [vmem:[%s2020] sm:$0xff]
      %v2022 = vld [vmem:[%s2020 + $0x8] sm:$0xff]
      %v2024 = vsel %vm1637, %v2021, 0
      %v2027 = vsel %vm1637, %v2022, 0
      %2029 = vmatpush.msra.mxu0 0.0
      %2030 = vmatpush.msra.mxu0 0.0
      %2031 = vmatpush.msra.mxu0 0.0
      %2032 = vmatpush.msra.mxu0 0.0
      %2033 = vmatpush.msra.mxu0 0.0
      %2034 = vmatpush.msra.mxu0 0.0
      %2035 = vmatpush.msra.mxu0 0.0
      %2036 = vmatpush.msra.mxu0 0.0
      %2037 = vmatpush.msra.mxu0 0.0
      %2038 = vmatpush.msra.mxu0 0.0
      %2039 = vmatpush.msra.mxu0 0.0
      %2040 = vmatpush.msra.mxu0 0.0
      %2041 = vmatpush.msra.mxu0 %v2018
      %2042 = vmatpush.msra.mxu0 %v2016
      %2043 = vmatpush.msra.mxu0 %v2014
      %2044 = vmatpush.msra.mxu0 %v2012
      %2045 = vmatmul.f32.gmra.mxu0 %v2024
      %v2046 = vpop.f32.mrf.mxu0
      %v2047 = vadd.f32 0.0, %v2046
      %2048 = vmatmul.f32.gmra.mxu0 %v2027
      %v2049 = vpop.f32.mrf.mxu0
      %v2050 = vadd.f32 0.0, %v2049
      %2051 = vdwg.mxu0
      %2052 = vmatpush.msra.mxu0 0.0
      %2053 = vmatpush.msra.mxu0 0.0
      %2054 = vmatpush.msra.mxu0 0.0
      %2055 = vmatpush.msra.mxu0 0.0
      %2056 = vmatpush.msra.mxu0 0.0
      %2057 = vmatpush.msra.mxu0 0.0
      %2058 = vmatpush.msra.mxu0 0.0
      %2059 = vmatpush.msra.mxu0 0.0
      %2060 = vmatpush.msra.mxu0 0.0
      %2061 = vmatpush.msra.mxu0 0.0
      %2062 = vmatpush.msra.mxu0 0.0
      %2063 = vmatpush.msra.mxu0 0.0
      %2064 = vmatpush.msra.mxu0 %v2019
      %2065 = vmatpush.msra.mxu0 %v2017
      %2066 = vmatpush.msra.mxu0 %v2015
      %2067 = vmatpush.msra.mxu0 %v2013
      %2068 = vmatmul.f32.gmra.mxu0 %v2024
      %v2069 = vpop.f32.mrf.mxu0
      %v2070 = vadd.f32 0.0, %v2069
      %2071 = vmatmul.f32.gmra.mxu0 %v2027
      %v2072 = vpop.f32.mrf.mxu0
      %v2073 = vadd.f32 0.0, %v2072
      %2074 = vdwg.mxu0
      %v2075 = vadd.f32 %v1984, %v2047
      %v2076 = vadd.f32 %v1985, %v2070
      %v2077 = vadd.f32 %v1986, %v2050
      %v2078 = vadd.f32 %v1987, %v2073
      %v2079 = vadd.f32 %v2075, %v2076
      %2080 = vadd.xlane.f32.xlu0 %v2079
      %v2081 = vpop.xlane.xlu0 %2080
      %v2082 = vadd.f32 %v2077, %v2078
      %2083 = vadd.xlane.f32.xlu0 %v2082
      %v2084 = vpop.xlane.xlu0 %2083
      %v2085 = vmul.f32 %v2075, %v2075
      %v2086 = vmul.f32 %v2076, %v2076
      %v2087 = vmul.f32 %v2077, %v2077
      %v2088 = vmul.f32 %v2078, %v2078
      %v2089 = vadd.f32 %v2085, %v2086
      %2090 = vadd.xlane.f32.xlu0 %v2089
      %v2091 = vpop.xlane.xlu0 %2090
      %v2092 = vadd.f32 %v2087, %v2088
      %2093 = vadd.xlane.f32.xlu0 %v2092
      %v2094 = vpop.xlane.xlu0 %2093
      %v2095 = vmul.f32 %v2081, 0.00390625
      %v2096 = vmul.f32 %v2084, 0.00390625
      %v2097 = vmul.f32 %v2091, 0.00390625
      %v2098 = vmul.f32 %v2094, 0.00390625
      %v2099 = vmul.f32 %v2095, %v2095
      %v2100 = vmul.f32 %v2096, %v2096
      %v2101 = vsub.f32 %v2097, %v2099
      %v2102 = vsub.f32 %v2098, %v2100
      %v2103 = vld [vmem:[%s6] sm:$0xff]
      %v2104 = vld [vmem:[%s6 + $0x8] sm:$0xff]
      %v2105 = vadd.f32 %v2101, 1e-05
      %v2106 = vadd.f32 %v2102, 1e-05
      %v2107 = vrsqrt.pop %v2105
      %v2108 = vmul.f32 %v2107, %v2105
      %v2109 = vmul.f32 %v2108, %v2107
      %v2110 = vmul.f32 0.5, %v2109
      %v2111 = vsub.f32 1.5, %v2110
      %v2112 = vmul.f32 %v2107, %v2111
      %vm2113 = vweird.f32 %v2105
      %vm2114 = vweird.f32 %v2107
      %vm2115 = vmor %vm2113, %vm2114
      %v2116 = vsel %vm2115, %v2107, %v2112
      %v2117 = vrsqrt.pop %v2106
      %v2118 = vmul.f32 %v2117, %v2106
      %v2119 = vmul.f32 %v2118, %v2117
      %v2120 = vmul.f32 0.5, %v2119
      %v2121 = vsub.f32 1.5, %v2120
      %v2122 = vmul.f32 %v2117, %v2121
      %vm2123 = vweird.f32 %v2106
      %vm2124 = vweird.f32 %v2117
      %vm2125 = vmor %vm2123, %vm2124
      %v2126 = vsel %vm2125, %v2117, %v2122
      %v2127 = vmul.f32 %v2103, %v2116
      %v2128 = vmul.f32 %v2104, %v2126
      %v2129 = vmul.f32 %v2095, %v2127
      %v2130 = vmul.f32 %v2096, %v2128
      %2133 = vrot.lane.b32.xlu0 %v2129, 1
      %v2134 = vpop.permute.xlu0 %2133
      %2135 = vrot.lane.b32.xlu0 %v2130, 1
      %v2136 = vpop.permute.xlu0 %2135
      %v2139 = vsub.f32 %v2103, %v2134
      %v2140 = vsub.f32 %v2104, %v2136
      %2142 = vset.pattern.permute.xlu0 0
      %2143 = vperm.xlu0 %2142, %v2127
      %v2144 = vpop.permute.xlu0 %2143
      %2147 = vset.pattern.permute.xlu0 0
      %2148 = vperm.xlu0 %2147, %v2128
      %v2149 = vpop.permute.xlu0 %2148
      %v2151 = vmul.f32 %v2075, %v2144
      %v2152 = vmul.f32 %v2076, %v2144
      %v2153 = vmul.f32 %v2077, %v2149
      %v2154 = vmul.f32 %v2078, %v2149
      %2156 = vset.pattern.permute.xlu0 1
      %2157 = vperm.xlu0 %2156, %v2139
      %v2158 = vpop.permute.xlu0 %2157
      %2161 = vset.pattern.permute.xlu0 1
      %2162 = vperm.xlu0 %2161, %v2140
      %v2163 = vpop.permute.xlu0 %2162
      %v2165 = vadd.f32 %v2151, %v2158
      %v2166 = vadd.f32 %v2152, %v2158
      %v2167 = vadd.f32 %v2153, %v2163
      %v2168 = vadd.f32 %v2154, %v2163
      %vm2169 = vcmp.ge.f32.partialorder %v2165, 0.0
      %vm2170 = vcmp.ge.f32.partialorder %v2166, 0.0
      %vm2171 = vcmp.ge.f32.partialorder %v2167, 0.0
      %vm2172 = vcmp.ge.f32.partialorder %v2168, 0.0
      %2174 = vset.pattern.permute.xlu0 2
      %2175 = vperm.xlu0 %2174, %v2103
      %v2176 = vpop.permute.xlu0 %2175
      %2179 = vset.pattern.permute.xlu0 2
      %2180 = vperm.xlu0 %2179, %v2104
      %v2181 = vpop.permute.xlu0 %2180
      %v2183 = vmul.f32 %v2176, %v2165
      %v2184 = vmul.f32 %v2176, %v2166
      %v2185 = vmul.f32 %v2181, %v2167
      %v2186 = vmul.f32 %v2181, %v2168
      %v2187 = vsel %vm2169, %v2165, %v2183
      %v2188 = vsel %vm2170, %v2166, %v2184
      %v2189 = vsel %vm2171, %v2167, %v2185
      %v2190 = vsel %vm2172, %v2168, %v2186
      %v2191 = vld [vmem:[%s5] sm:$0xff]
      %v2192 = vld [vmem:[%s5 + $0x8] sm:$0xff]
      %2193 = vset.pattern.permute.xlu0 3
      %2194 = vperm.xlu0 %2193, %v2103
      %v2195 = vpop.permute.xlu0 %2194
      %2197 = vset.pattern.permute.xlu0 3
      %2198 = vperm.xlu0 %2197, %v2104
      %v2199 = vpop.permute.xlu0 %2198
      %v2202 = vsel %vm597, %v2191, 0
      %v2205 = vsel %vm597, %v2192, 0
      %2207 = vmatpush.msra.mxu0 0.0
      %2208 = vmatpush.msra.mxu0 0.0
      %2209 = vmatpush.msra.mxu0 0.0
      %2210 = vmatpush.msra.mxu0 0.0
      %2211 = vmatpush.msra.mxu0 0.0
      %2212 = vmatpush.msra.mxu0 0.0
      %2213 = vmatpush.msra.mxu0 0.0
      %2214 = vmatpush.msra.mxu0 0.0
      %2215 = vmatpush.msra.mxu0 0.0
      %2216 = vmatpush.msra.mxu0 0.0
      %2217 = vmatpush.msra.mxu0 0.0
      %2218 = vmatpush.msra.mxu0 0.0
      %2219 = vmatpush.msra.mxu0 0.0
      %2220 = vmatpush.msra.mxu0 0.0
      %2221 = vmatpush.msra.mxu0 %v2189
      %2222 = vmatpush.msra.mxu0 %v2187
      %2223 = vmatmul.f32.gmra.mxu0 %v2202
      %v2224 = vpop.f32.mrf.mxu0
      %v2225 = vadd.f32 %v2195, %v2224
      %2226 = vmatmul.f32.gmra.mxu0 %v2205
      %v2227 = vpop.f32.mrf.mxu0
      %v2228 = vadd.f32 %v2199, %v2227
      %2229 = vdwg.mxu0
      %2230 = vmatpush.msra.mxu0 0.0
      %2231 = vmatpush.msra.mxu0 0.0
      %2232 = vmatpush.msra.mxu0 0.0
      %2233 = vmatpush.msra.mxu0 0.0
      %2234 = vmatpush.msra.mxu0 0.0
      %2235 = vmatpush.msra.mxu0 0.0
      %2236 = vmatpush.msra.mxu0 0.0
      %2237 = vmatpush.msra.mxu0 0.0
      %2238 = vmatpush.msra.mxu0 0.0
      %2239 = vmatpush.msra.mxu0 0.0
      %2240 = vmatpush.msra.mxu0 0.0
      %2241 = vmatpush.msra.mxu0 0.0
      %2242 = vmatpush.msra.mxu0 0.0
      %2243 = vmatpush.msra.mxu0 0.0
      %2244 = vmatpush.msra.mxu0 %v2190
      %2245 = vmatpush.msra.mxu0 %v2188
      %2246 = vmatmul.f32.gmra.mxu0 %v2202
      %v2247 = vpop.f32.mrf.mxu0
      %v2248 = vadd.f32 %v2195, %v2247
      %2249 = vmatmul.f32.gmra.mxu0 %v2205
      %v2250 = vpop.f32.mrf.mxu0
      %v2251 = vadd.f32 %v2199, %v2250
      %2252 = vdwg.mxu0
      %v2253 = vmax.f32 %v2225, 0.0
      %v2254 = vmax.f32 %v2248, 0.0
      %v2255 = vmax.f32 %v2228, 0.0
      %v2256 = vmax.f32 %v2251, 0.0
      %s2257 = scalar_lea.vmem %s5, 16
      %v2258 = vld [vmem:[%s2257] sm:$0xff]
      %v2259 = vld [vmem:[%s2257 + $0x8] sm:$0xff]
      %v2261 = vsel %vm597, %v2258, 0
      %v2264 = vsel %vm597, %v2259, 0
      %2266 = vmatpush.msra.mxu0 0.0
      %2267 = vmatpush.msra.mxu0 0.0
      %2268 = vmatpush.msra.mxu0 0.0
      %2269 = vmatpush.msra.mxu0 0.0
      %2270 = vmatpush.msra.mxu0 0.0
      %2271 = vmatpush.msra.mxu0 0.0
      %2272 = vmatpush.msra.mxu0 0.0
      %2273 = vmatpush.msra.mxu0 0.0
      %2274 = vmatpush.msra.mxu0 0.0
      %2275 = vmatpush.msra.mxu0 0.0
      %2276 = vmatpush.msra.mxu0 0.0
      %2277 = vmatpush.msra.mxu0 0.0
      %2278 = vmatpush.msra.mxu0 0.0
      %2279 = vmatpush.msra.mxu0 0.0
      %2280 = vmatpush.msra.mxu0 %v2255
      %2281 = vmatpush.msra.mxu0 %v2253
      %2282 = vmatmul.f32.gmra.mxu0 %v2261
      %v2283 = vpop.f32.mrf.mxu0
      %v2284 = vadd.f32 0.0, %v2283
      %2285 = vmatmul.f32.gmra.mxu0 %v2264
      %v2286 = vpop.f32.mrf.mxu0
      %v2287 = vadd.f32 0.0, %v2286
      %2288 = vdwg.mxu0
      %2289 = vmatpush.msra.mxu0 0.0
      %2290 = vmatpush.msra.mxu0 0.0
      %2291 = vmatpush.msra.mxu0 0.0
      %2292 = vmatpush.msra.mxu0 0.0
      %2293 = vmatpush.msra.mxu0 0.0
      %2294 = vmatpush.msra.mxu0 0.0
      %2295 = vmatpush.msra.mxu0 0.0
      %2296 = vmatpush.msra.mxu0 0.0
      %2297 = vmatpush.msra.mxu0 0.0
      %2298 = vmatpush.msra.mxu0 0.0
      %2299 = vmatpush.msra.mxu0 0.0
      %2300 = vmatpush.msra.mxu0 0.0
      %2301 = vmatpush.msra.mxu0 0.0
      %2302 = vmatpush.msra.mxu0 0.0
      %2303 = vmatpush.msra.mxu0 %v2256
      %2304 = vmatpush.msra.mxu0 %v2254
      %2305 = vmatmul.f32.gmra.mxu0 %v2261
      %v2306 = vpop.f32.mrf.mxu0
      %v2307 = vadd.f32 0.0, %v2306
      %2308 = vmatmul.f32.gmra.mxu0 %v2264
      %v2309 = vpop.f32.mrf.mxu0
      %v2310 = vadd.f32 0.0, %v2309
      %2311 = vdwg.mxu0
      %2312 = vrot.lane.b32.xlu0 %v2284, 4
      %v2313 = vpop.permute.xlu0 %2312
      %2314 = vrot.lane.b32.xlu0 %v2287, 4
      %v2315 = vpop.permute.xlu0 %2314
      %2316 = vrot.lane.b32.xlu0 %v2307, 4
      %v2317 = vpop.permute.xlu0 %2316
      %2318 = vrot.lane.b32.xlu0 %v2310, 4
      %v2319 = vpop.permute.xlu0 %2318
      %v2320 = vsel %vm1242, %v2313, %v2317
      %v2321 = vsel %vm1242, %v2315, %v2319
      %v2322 = vsel %vm1242, %v2317, %v2313
      %v2323 = vsel %vm1242, %v2319, %v2315
      %v2324 = vsel %vm1249, %v2322, 0.0
      %v2325 = vsel %vm1250, %v2320, 0.0
      %v2326 = vsel %vm1249, %v2323, 0.0
      %v2327 = vsel %vm1250, %v2321, 0.0
      %2328 = vset.pattern.permute.xlu0 4
      %2329 = vperm.xlu0 %2328, %v2103
      %v2330 = vpop.permute.xlu0 %2329
      %2332 = vset.pattern.permute.xlu0 4
      %2333 = vperm.xlu0 %2332, %v2104
      %v2334 = vpop.permute.xlu0 %2333
      %v2336 = vmul.f32 %v2330, %v2324
      %v2337 = vmul.f32 %v2330, %v2325
      %v2338 = vmul.f32 %v2334, %v2326
      %v2339 = vmul.f32 %v2334, %v2327
      %2340 = vrot.lane.b32.xlu0 %v2284, 3
      %v2341 = vpop.permute.xlu0 %2340
      %2342 = vrot.lane.b32.xlu0 %v2287, 3
      %v2343 = vpop.permute.xlu0 %2342
      %2344 = vrot.lane.b32.xlu0 %v2307, 3
      %v2345 = vpop.permute.xlu0 %2344
      %2346 = vrot.lane.b32.xlu0 %v2310, 3
      %v2347 = vpop.permute.xlu0 %2346
      %v2348 = vsel %vm1275, %v2341, %v2345
      %v2349 = vsel %vm1275, %v2343, %v2347
      %v2350 = vsel %vm1275, %v2345, %v2341
      %v2351 = vsel %vm1275, %v2347, %v2343
      %v2352 = vsel %vm1282, %v2350, 0.0
      %v2353 = vsel %vm1283, %v2348, 0.0
      %v2354 = vsel %vm1282, %v2351, 0.0
      %v2355 = vsel %vm1283, %v2349, 0.0
      %2356 = vset.pattern.permute.xlu0 5
      %2357 = vperm.xlu0 %2356, %v2103
      %v2358 = vpop.permute.xlu0 %2357
      %2360 = vset.pattern.permute.xlu0 5
      %2361 = vperm.xlu0 %2360, %v2104
      %v2362 = vpop.permute.xlu0 %2361
      %v2364 = vmul.f32 %v2358, %v2352
      %v2365 = vmul.f32 %v2358, %v2353
      %v2366 = vmul.f32 %v2362, %v2354
      %v2367 = vmul.f32 %v2362, %v2355
      %v2368 = vadd.f32 %v2336, %v2364
      %v2369 = vadd.f32 %v2337, %v2365
      %v2370 = vadd.f32 %v2338, %v2366
      %v2371 = vadd.f32 %v2339, %v2367
      %2372 = vrot.lane.b32.xlu0 %v2284, 2
      %v2373 = vpop.permute.xlu0 %2372
      %2374 = vrot.lane.b32.xlu0 %v2287, 2
      %v2375 = vpop.permute.xlu0 %2374
      %2376 = vrot.lane.b32.xlu0 %v2307, 2
      %v2377 = vpop.permute.xlu0 %2376
      %2378 = vrot.lane.b32.xlu0 %v2310, 2
      %v2379 = vpop.permute.xlu0 %2378
      %v2380 = vsel %vm1312, %v2373, %v2377
      %v2381 = vsel %vm1312, %v2375, %v2379
      %v2382 = vsel %vm1312, %v2377, %v2373
      %v2383 = vsel %vm1312, %v2379, %v2375
      %v2384 = vsel %vm1319, %v2382, 0.0
      %v2385 = vsel %vm1320, %v2380, 0.0
      %v2386 = vsel %vm1319, %v2383, 0.0
      %v2387 = vsel %vm1320, %v2381, 0.0
      %2388 = vset.pattern.permute.xlu0 6
      %2389 = vperm.xlu0 %2388, %v2103
      %v2390 = vpop.permute.xlu0 %2389
      %2392 = vset.pattern.permute.xlu0 6
      %2393 = vperm.xlu0 %2392, %v2104
      %v2394 = vpop.permute.xlu0 %2393
      %v2396 = vmul.f32 %v2390, %v2384
      %v2397 = vmul.f32 %v2390, %v2385
      %v2398 = vmul.f32 %v2394, %v2386
      %v2399 = vmul.f32 %v2394, %v2387
      %v2400 = vadd.f32 %v2368, %v2396
      %v2401 = vadd.f32 %v2369, %v2397
      %v2402 = vadd.f32 %v2370, %v2398
      %v2403 = vadd.f32 %v2371, %v2399
      %2404 = vrot.lane.b32.xlu0 %v2284, 1
      %v2405 = vpop.permute.xlu0 %2404
      %2406 = vrot.lane.b32.xlu0 %v2287, 1
      %v2407 = vpop.permute.xlu0 %2406
      %2408 = vrot.lane.b32.xlu0 %v2307, 1
      %v2409 = vpop.permute.xlu0 %2408
      %2410 = vrot.lane.b32.xlu0 %v2310, 1
      %v2411 = vpop.permute.xlu0 %2410
      %v2412 = vsel %vm790, %v2405, %v2409
      %v2413 = vsel %vm790, %v2407, %v2411
      %v2414 = vsel %vm790, %v2409, %v2405
      %v2415 = vsel %vm790, %v2411, %v2407
      %v2416 = vsel %vm797, %v2414, 0.0
      %v2417 = vsel %vm798, %v2412, 0.0
      %v2418 = vsel %vm797, %v2415, 0.0
      %v2419 = vsel %vm798, %v2413, 0.0
      %2420 = vset.pattern.permute.xlu0 7
      %2421 = vperm.xlu0 %2420, %v2103
      %v2422 = vpop.permute.xlu0 %2421
      %2424 = vset.pattern.permute.xlu0 7
      %2425 = vperm.xlu0 %2424, %v2104
      %v2426 = vpop.permute.xlu0 %2425
      %v2428 = vmul.f32 %v2422, %v2416
      %v2429 = vmul.f32 %v2422, %v2417
      %v2430 = vmul.f32 %v2426, %v2418
      %v2431 = vmul.f32 %v2426, %v2419
      %v2432 = vadd.f32 %v2400, %v2428
      %v2433 = vadd.f32 %v2401, %v2429
      %v2434 = vadd.f32 %v2402, %v2430
      %v2435 = vadd.f32 %v2403, %v2431
      %2436 = vset.pattern.permute.xlu0 8
      %2437 = vperm.xlu0 %2436, %v2103
      %v2438 = vpop.permute.xlu0 %2437
      %2440 = vset.pattern.permute.xlu0 8
      %2441 = vperm.xlu0 %2440, %v2104
      %v2442 = vpop.permute.xlu0 %2441
      %v2444 = vmul.f32 %v2438, %v2284
      %v2445 = vmul.f32 %v2438, %v2307
      %v2446 = vmul.f32 %v2442, %v2287
      %v2447 = vmul.f32 %v2442, %v2310
      %v2448 = vadd.f32 %v2432, %v2444
      %v2449 = vadd.f32 %v2433, %v2445
      %v2450 = vadd.f32 %v2434, %v2446
      %v2451 = vadd.f32 %v2435, %v2447
      %2452 = vrot.lane.b32.xlu0 %v2284, 127
      %v2453 = vpop.permute.xlu0 %2452
      %2454 = vrot.lane.b32.xlu0 %v2287, 127
      %v2455 = vpop.permute.xlu0 %2454
      %2456 = vrot.lane.b32.xlu0 %v2307, 127
      %v2457 = vpop.permute.xlu0 %2456
      %2458 = vrot.lane.b32.xlu0 %v2310, 127
      %v2459 = vpop.permute.xlu0 %2458
      %v2460 = vsel %vm929, %v2453, %v2457
      %v2461 = vsel %vm929, %v2455, %v2459
      %v2462 = vsel %vm929, %v2457, %v2453
      %v2463 = vsel %vm929, %v2459, %v2455
      %v2464 = vsel %vm936, %v2460, 0.0
      %v2465 = vsel %vm937, %v2462, 0.0
      %v2466 = vsel %vm936, %v2461, 0.0
      %v2467 = vsel %vm937, %v2463, 0.0
      %2468 = vset.pattern.permute.xlu0 9
      %2469 = vperm.xlu0 %2468, %v2103
      %v2470 = vpop.permute.xlu0 %2469
      %2472 = vset.pattern.permute.xlu0 9
      %2473 = vperm.xlu0 %2472, %v2104
      %v2474 = vpop.permute.xlu0 %2473
      %v2476 = vmul.f32 %v2470, %v2464
      %v2477 = vmul.f32 %v2470, %v2465
      %v2478 = vmul.f32 %v2474, %v2466
      %v2479 = vmul.f32 %v2474, %v2467
      %v2480 = vadd.f32 %v2448, %v2476
      %v2481 = vadd.f32 %v2449, %v2477
      %v2482 = vadd.f32 %v2450, %v2478
      %v2483 = vadd.f32 %v2451, %v2479
      %2484 = vrot.lane.b32.xlu0 %v2284, 126
      %v2485 = vpop.permute.xlu0 %2484
      %2486 = vrot.lane.b32.xlu0 %v2287, 126
      %v2487 = vpop.permute.xlu0 %2486
      %2488 = vrot.lane.b32.xlu0 %v2307, 126
      %v2489 = vpop.permute.xlu0 %2488
      %2490 = vrot.lane.b32.xlu0 %v2310, 126
      %v2491 = vpop.permute.xlu0 %2490
      %v2492 = vsel %vm1429, %v2485, %v2489
      %v2493 = vsel %vm1429, %v2487, %v2491
      %v2494 = vsel %vm1429, %v2489, %v2485
      %v2495 = vsel %vm1429, %v2491, %v2487
      %v2496 = vsel %vm1436, %v2492, 0.0
      %v2497 = vsel %vm1437, %v2494, 0.0
      %v2498 = vsel %vm1436, %v2493, 0.0
      %v2499 = vsel %vm1437, %v2495, 0.0
      %2500 = vset.pattern.permute.xlu0 10
      %2501 = vperm.xlu0 %2500, %v2103
      %v2502 = vpop.permute.xlu0 %2501
      %2504 = vset.pattern.permute.xlu0 10
      %2505 = vperm.xlu0 %2504, %v2104
      %v2506 = vpop.permute.xlu0 %2505
      %v2508 = vmul.f32 %v2502, %v2496
      %v2509 = vmul.f32 %v2502, %v2497
      %v2510 = vmul.f32 %v2506, %v2498
      %v2511 = vmul.f32 %v2506, %v2499
      %v2512 = vadd.f32 %v2480, %v2508
      %v2513 = vadd.f32 %v2481, %v2509
      %v2514 = vadd.f32 %v2482, %v2510
      %v2515 = vadd.f32 %v2483, %v2511
      %2516 = vrot.lane.b32.xlu0 %v2284, 125
      %v2517 = vpop.permute.xlu0 %2516
      %2518 = vrot.lane.b32.xlu0 %v2287, 125
      %v2519 = vpop.permute.xlu0 %2518
      %2520 = vrot.lane.b32.xlu0 %v2307, 125
      %v2521 = vpop.permute.xlu0 %2520
      %2522 = vrot.lane.b32.xlu0 %v2310, 125
      %v2523 = vpop.permute.xlu0 %2522
      %v2524 = vsel %vm1466, %v2517, %v2521
      %v2525 = vsel %vm1466, %v2519, %v2523
      %v2526 = vsel %vm1466, %v2521, %v2517
      %v2527 = vsel %vm1466, %v2523, %v2519
      %v2528 = vsel %vm1473, %v2524, 0.0
      %v2529 = vsel %vm1474, %v2526, 0.0
      %v2530 = vsel %vm1473, %v2525, 0.0
      %v2531 = vsel %vm1474, %v2527, 0.0
      %2532 = vset.pattern.permute.xlu0 11
      %2533 = vperm.xlu0 %2532, %v2103
      %v2534 = vpop.permute.xlu0 %2533
      %2536 = vset.pattern.permute.xlu0 11
      %2537 = vperm.xlu0 %2536, %v2104
      %v2538 = vpop.permute.xlu0 %2537
      %v2540 = vmul.f32 %v2534, %v2528
      %v2541 = vmul.f32 %v2534, %v2529
      %v2542 = vmul.f32 %v2538, %v2530
      %v2543 = vmul.f32 %v2538, %v2531
      %v2544 = vadd.f32 %v2512, %v2540
      %v2545 = vadd.f32 %v2513, %v2541
      %v2546 = vadd.f32 %v2514, %v2542
      %v2547 = vadd.f32 %v2515, %v2543
      %2548 = vrot.lane.b32.xlu0 %v2284, 124
      %v2549 = vpop.permute.xlu0 %2548
      %2550 = vrot.lane.b32.xlu0 %v2287, 124
      %v2551 = vpop.permute.xlu0 %2550
      %2552 = vrot.lane.b32.xlu0 %v2307, 124
      %v2553 = vpop.permute.xlu0 %2552
      %2554 = vrot.lane.b32.xlu0 %v2310, 124
      %v2555 = vpop.permute.xlu0 %2554
      %v2556 = vsel %vm1503, %v2549, %v2553
      %v2557 = vsel %vm1503, %v2551, %v2555
      %v2558 = vsel %vm1503, %v2553, %v2549
      %v2559 = vsel %vm1503, %v2555, %v2551
      %v2560 = vsel %vm1510, %v2556, 0.0
      %v2561 = vsel %vm1511, %v2558, 0.0
      %v2562 = vsel %vm1510, %v2557, 0.0
      %v2563 = vsel %vm1511, %v2559, 0.0
      %2564 = vset.pattern.permute.xlu0 12
      %2565 = vperm.xlu0 %2564, %v2103
      %v2566 = vpop.permute.xlu0 %2565
      %2568 = vset.pattern.permute.xlu0 12
      %2569 = vperm.xlu0 %2568, %v2104
      %v2570 = vpop.permute.xlu0 %2569
      %v2572 = vmul.f32 %v2566, %v2560
      %v2573 = vmul.f32 %v2566, %v2561
      %v2574 = vmul.f32 %v2570, %v2562
      %v2575 = vmul.f32 %v2570, %v2563
      %v2576 = vadd.f32 %v2544, %v2572
      %v2577 = vadd.f32 %v2545, %v2573
      %v2578 = vadd.f32 %v2546, %v2574
      %v2579 = vadd.f32 %v2547, %v2575
      %v2580 = vadd.f32 %v2187, %v2284
      %v2581 = vadd.f32 %v2188, %v2307
      %v2582 = vadd.f32 %v2189, %v2287
      %v2583 = vadd.f32 %v2190, %v2310
      %v2584 = vadd.f32 %v2580, %v2576
      %v2585 = vadd.f32 %v2581, %v2577
      %v2586 = vadd.f32 %v2582, %v2578
      %v2587 = vadd.f32 %v2583, %v2579
      %2588 = vst [vmem:[#allocation2 + $0x20] sm:$0xff] %v2584
      %2589 = vst [vmem:[#allocation2 + $0x28] sm:$0xff] %v2585
      %2590 = vst [vmem:[#allocation2 + $0x30] sm:$0xff] %v2586
      %2591 = vst [vmem:[#allocation2 + $0x38] sm:$0xff] %v2587
      %v2592 = vld [vmem:[#allocation2 + $0x20] sm:$0xff]
      %v2593 = vld [vmem:[#allocation2 + $0x28] sm:$0xff]
      %v2594 = vld [vmem:[#allocation2 + $0x30] sm:$0xff]
      %v2595 = vld [vmem:[#allocation2 + $0x38] sm:$0xff]
      %v2596 = vld [vmem:[#allocation2 + $0x40] sm:$0xff]
      %v2597 = vld [vmem:[#allocation2 + $0x48] sm:$0xff]
      %v2598 = vld [vmem:[#allocation2 + $0x50] sm:$0xff]
      %v2599 = vld [vmem:[#allocation2 + $0x58] sm:$0xff]
      %v2600 = vld [vmem:[#allocation2 + $0x60] sm:$0xff]
      %v2601 = vld [vmem:[#allocation2 + $0x68] sm:$0xff]
      %v2602 = vld [vmem:[#allocation2 + $0x70] sm:$0xff]
      %v2603 = vld [vmem:[#allocation2 + $0x78] sm:$0xff]
      %vm2604 = vcmp.ge.s32.totalorder %v442, 64
      %vm2605 = vcmp.ge.s32.totalorder %v443, 64
      %vm2606 = vmand %vm2604, %vm498
      %vm2607 = vmand %vm2605, %vm499
      %vm2608 = vmand %vm2604, %vm506
      %vm2609 = vmand %vm2605, %vm507
      %2610 = vrot.lane.b32.xlu0 %v2592, 65
      %v2611 = vpop.permute.xlu0 %2610
      %2612 = vrot.lane.b32.xlu0 %v2594, 65
      %v2613 = vpop.permute.xlu0 %2612
      %2614 = vrot.lane.b32.xlu0 %v2596, 65
      %v2615 = vpop.permute.xlu0 %2614
      %2616 = vrot.lane.b32.xlu0 %v2598, 65
      %v2617 = vpop.permute.xlu0 %2616
      %2618 = vrot.lane.b32.xlu0 %v2600, 65
      %v2619 = vpop.permute.xlu0 %2618
      %2620 = vrot.lane.b32.xlu0 %v2602, 65
      %v2621 = vpop.permute.xlu0 %2620
      %2622 = vrot.lane.b32.xlu0 %v2593, 65
      %v2623 = vpop.permute.xlu0 %2622
      %2624 = vrot.lane.b32.xlu0 %v2595, 65
      %v2625 = vpop.permute.xlu0 %2624
      %2626 = vrot.lane.b32.xlu0 %v2597, 65
      %v2627 = vpop.permute.xlu0 %2626
      %2628 = vrot.lane.b32.xlu0 %v2599, 65
      %v2629 = vpop.permute.xlu0 %2628
      %2630 = vrot.lane.b32.xlu0 %v2601, 65
      %v2631 = vpop.permute.xlu0 %2630
      %2632 = vrot.lane.b32.xlu0 %v2603, 65
      %v2633 = vpop.permute.xlu0 %2632
      %vm2634 = vcmp.lt.s32.totalorder %v442, 65
      %v2635 = vsel %vm2634, %v2611, %v2623
      %v2636 = vsel %vm2634, %v2613, %v2625
      %v2637 = vsel %vm2634, %v2615, %v2627
      %v2638 = vsel %vm2634, %v2617, %v2629
      %v2639 = vsel %vm2634, %v2619, %v2631
      %v2640 = vsel %vm2634, %v2621, %v2633
      %v2641 = vsel %vm2634, %v2623, %v2611
      %v2642 = vsel %vm2634, %v2625, %v2613
      %v2643 = vsel %vm2634, %v2627, %v2615
      %v2644 = vsel %vm2634, %v2629, %v2617
      %v2645 = vsel %vm2634, %v2631, %v2619
      %v2646 = vsel %vm2634, %v2633, %v2621
      %v2647 = vsel %vm2606, 1, 0
      %v2648 = vsel %vm2607, 1, 0
      %vm2649 = vcmp.eq.s32.totalorder %v2647, 1
      %vm2650 = vcmp.eq.s32.totalorder %v2648, 1
      %v2651 = vsel %vm2649, %v2641, 0.0
      %v2652 = vsel %vm2650, %v2635, 0.0
      %v2653 = vsel %vm2649, %v2642, 0.0
      %v2654 = vsel %vm2650, %v2636, 0.0
      %v2655 = vsel %vm2649, %v2643, 0.0
      %v2656 = vsel %vm2650, %v2637, 0.0
      %v2657 = vsel %vm2649, %v2644, 0.0
      %v2658 = vsel %vm2650, %v2638, 0.0
      %v2659 = vsel %vm2649, %v2645, 0.0
      %v2660 = vsel %vm2650, %v2639, 0.0
      %v2661 = vsel %vm2649, %v2646, 0.0
      %v2662 = vsel %vm2650, %v2640, 0.0
      %v2663 = vld [vmem:[%s7] sm:$0xff]
      %v2664 = vld [vmem:[%s7 + $0x8] sm:$0xff]
      %2665 = vrot.lane.b32.xlu0 %v2592, 64
      %v2666 = vpop.permute.xlu0 %2665
      %2667 = vrot.lane.b32.xlu0 %v2594, 64
      %v2668 = vpop.permute.xlu0 %2667
      %2669 = vrot.lane.b32.xlu0 %v2596, 64
      %v2670 = vpop.permute.xlu0 %2669
      %2671 = vrot.lane.b32.xlu0 %v2598, 64
      %v2672 = vpop.permute.xlu0 %2671
      %2673 = vrot.lane.b32.xlu0 %v2600, 64
      %v2674 = vpop.permute.xlu0 %2673
      %2675 = vrot.lane.b32.xlu0 %v2602, 64
      %v2676 = vpop.permute.xlu0 %2675
      %2677 = vrot.lane.b32.xlu0 %v2593, 64
      %v2678 = vpop.permute.xlu0 %2677
      %2679 = vrot.lane.b32.xlu0 %v2595, 64
      %v2680 = vpop.permute.xlu0 %2679
      %2681 = vrot.lane.b32.xlu0 %v2597, 64
      %v2682 = vpop.permute.xlu0 %2681
      %2683 = vrot.lane.b32.xlu0 %v2599, 64
      %v2684 = vpop.permute.xlu0 %2683
      %2685 = vrot.lane.b32.xlu0 %v2601, 64
      %v2686 = vpop.permute.xlu0 %2685
      %2687 = vrot.lane.b32.xlu0 %v2603, 64
      %v2688 = vpop.permute.xlu0 %2687
      %vm2689 = vcmp.lt.s32.totalorder %v442, 64
      %v2690 = vsel %vm2689, %v2666, %v2678
      %v2691 = vsel %vm2689, %v2668, %v2680
      %v2692 = vsel %vm2689, %v2670, %v2682
      %v2693 = vsel %vm2689, %v2672, %v2684
      %v2694 = vsel %vm2689, %v2674, %v2686
      %v2695 = vsel %vm2689, %v2676, %v2688
      %v2696 = vsel %vm2689, %v2678, %v2666
      %v2697 = vsel %vm2689, %v2680, %v2668
      %v2698 = vsel %vm2689, %v2682, %v2670
      %v2699 = vsel %vm2689, %v2684, %v2672
      %v2700 = vsel %vm2689, %v2686, %v2674
      %v2701 = vsel %vm2689, %v2688, %v2676
      %v2702 = vsel %vm2604, 1, 0
      %v2703 = vsel %vm2605, 1, 0
      %vm2704 = vcmp.eq.s32.totalorder %v2702, 1
      %vm2705 = vcmp.eq.s32.totalorder %v2703, 1
      %v2706 = vsel %vm2704, %v2696, 0.0
      %v2707 = vsel %vm2705, %v2690, 0.0
      %v2708 = vsel %vm2704, %v2697, 0.0
      %v2709 = vsel %vm2705, %v2691, 0.0
      %v2710 = vsel %vm2704, %v2698, 0.0
      %v2711 = vsel %vm2705, %v2692, 0.0
      %v2712 = vsel %vm2704, %v2699, 0.0
      %v2713 = vsel %vm2705, %v2693, 0.0
      %v2714 = vsel %vm2704, %v2700, 0.0
      %v2715 = vsel %vm2705, %v2694, 0.0
      %v2716 = vsel %vm2704, %v2701, 0.0
      %v2717 = vsel %vm2705, %v2695, 0.0
      %s2718 = scalar_lea.vmem %s7, 16
      %v2719 = vld [vmem:[%s2718] sm:$0xff]
      %v2720 = vld [vmem:[%s2718 + $0x8] sm:$0xff]
      %vm2721 = vcmask 392192
      %v2723 = vsel %vm2721, %v2719, 0
      %v2726 = vsel %vm2721, %v2720, 0
      %2728 = vmatpush.msra.mxu0 0.0
      %2729 = vmatpush.msra.mxu0 0.0
      %2730 = vmatpush.msra.mxu0 0.0
      %2731 = vmatpush.msra.mxu0 0.0
      %2732 = vmatpush.msra.mxu0 0.0
      %2733 = vmatpush.msra.mxu0 0.0
      %2734 = vmatpush.msra.mxu0 0.0
      %2735 = vmatpush.msra.mxu0 0.0
      %2736 = vmatpush.msra.mxu0 0.0
      %2737 = vmatpush.msra.mxu0 0.0
      %2738 = vmatpush.msra.mxu0 %v2716
      %2739 = vmatpush.msra.mxu0 %v2714
      %2740 = vmatpush.msra.mxu0 %v2712
      %2741 = vmatpush.msra.mxu0 %v2710
      %2742 = vmatpush.msra.mxu0 %v2708
      %2743 = vmatpush.msra.mxu0 %v2706
      %2744 = vmatmul.f32.gmra.mxu0 %v2723
      %v2745 = vpop.f32.mrf.mxu0
      %v2746 = vadd.f32 0.0, %v2745
      %2747 = vmatmul.f32.gmra.mxu0 %v2726
      %v2748 = vpop.f32.mrf.mxu0
      %v2749 = vadd.f32 0.0, %v2748
      %2750 = vdwg.mxu0
      %2751 = vmatpush.msra.mxu0 0.0
      %2752 = vmatpush.msra.mxu0 0.0
      %2753 = vmatpush.msra.mxu0 0.0
      %2754 = vmatpush.msra.mxu0 0.0
      %2755 = vmatpush.msra.mxu0 0.0
      %2756 = vmatpush.msra.mxu0 0.0
      %2757 = vmatpush.msra.mxu0 0.0
      %2758 = vmatpush.msra.mxu0 0.0
      %2759 = vmatpush.msra.mxu0 0.0
      %2760 = vmatpush.msra.mxu0 0.0
      %2761 = vmatpush.msra.mxu0 %v2717
      %2762 = vmatpush.msra.mxu0 %v2715
      %2763 = vmatpush.msra.mxu0 %v2713
      %2764 = vmatpush.msra.mxu0 %v2711
      %2765 = vmatpush.msra.mxu0 %v2709
      %2766 = vmatpush.msra.mxu0 %v2707
      %2767 = vmatmul.f32.gmra.mxu0 %v2723
      %v2768 = vpop.f32.mrf.mxu0
      %v2769 = vadd.f32 0.0, %v2768
      %2770 = vmatmul.f32.gmra.mxu0 %v2726
      %v2771 = vpop.f32.mrf.mxu0
      %v2772 = vadd.f32 0.0, %v2771
      %2773 = vdwg.mxu0
      %v2775 = vsel %vm2721, %v2663, 0
      %v2778 = vsel %vm2721, %v2664, 0
      %2780 = vmatpush.msra.mxu0 0.0
      %2781 = vmatpush.msra.mxu0 0.0
      %2782 = vmatpush.msra.mxu0 0.0
      %2783 = vmatpush.msra.mxu0 0.0
      %2784 = vmatpush.msra.mxu0 0.0
      %2785 = vmatpush.msra.mxu0 0.0
      %2786 = vmatpush.msra.mxu0 0.0
      %2787 = vmatpush.msra.mxu0 0.0
      %2788 = vmatpush.msra.mxu0 0.0
      %2789 = vmatpush.msra.mxu0 0.0
      %2790 = vmatpush.msra.mxu0 %v2661
      %2791 = vmatpush.msra.mxu0 %v2659
      %2792 = vmatpush.msra.mxu0 %v2657
      %2793 = vmatpush.msra.mxu0 %v2655
      %2794 = vmatpush.msra.mxu0 %v2653
      %2795 = vmatpush.msra.mxu0 %v2651
      %2796 = vmatmul.f32.gmra.mxu0 %v2775
      %v2797 = vpop.f32.mrf.mxu0
      %v2798 = vadd.f32 %v2746, %v2797
      %2799 = vmatmul.f32.gmra.mxu0 %v2778
      %v2800 = vpop.f32.mrf.mxu0
      %v2801 = vadd.f32 %v2749, %v2800
      %2802 = vdwg.mxu0
      %2803 = vmatpush.msra.mxu0 0.0
      %2804 = vmatpush.msra.mxu0 0.0
      %2805 = vmatpush.msra.mxu0 0.0
      %2806 = vmatpush.msra.mxu0 0.0
      %2807 = vmatpush.msra.mxu0 0.0
      %2808 = vmatpush.msra.mxu0 0.0
      %2809 = vmatpush.msra.mxu0 0.0
      %2810 = vmatpush.msra.mxu0 0.0
      %2811 = vmatpush.msra.mxu0 0.0
      %2812 = vmatpush.msra.mxu0 0.0
      %2813 = vmatpush.msra.mxu0 %v2662
      %2814 = vmatpush.msra.mxu0 %v2660
      %2815 = vmatpush.msra.mxu0 %v2658
      %2816 = vmatpush.msra.mxu0 %v2656
      %2817 = vmatpush.msra.mxu0 %v2654
      %2818 = vmatpush.msra.mxu0 %v2652
      %2819 = vmatmul.f32.gmra.mxu0 %v2775
      %v2820 = vpop.f32.mrf.mxu0
      %v2821 = vadd.f32 %v2769, %v2820
      %2822 = vmatmul.f32.gmra.mxu0 %v2778
      %v2823 = vpop.f32.mrf.mxu0
      %v2824 = vadd.f32 %v2772, %v2823
      %2825 = vdwg.mxu0
      %2826 = vrot.lane.b32.xlu0 %v2592, 63
      %v2827 = vpop.permute.xlu0 %2826
      %2828 = vrot.lane.b32.xlu0 %v2594, 63
      %v2829 = vpop.permute.xlu0 %2828
      %2830 = vrot.lane.b32.xlu0 %v2596, 63
      %v2831 = vpop.permute.xlu0 %2830
      %2832 = vrot.lane.b32.xlu0 %v2598, 63
      %v2833 = vpop.permute.xlu0 %2832
      %2834 = vrot.lane.b32.xlu0 %v2600, 63
      %v2835 = vpop.permute.xlu0 %2834
      %2836 = vrot.lane.b32.xlu0 %v2602, 63
      %v2837 = vpop.permute.xlu0 %2836
      %2838 = vrot.lane.b32.xlu0 %v2593, 63
      %v2839 = vpop.permute.xlu0 %2838
      %2840 = vrot.lane.b32.xlu0 %v2595, 63
      %v2841 = vpop.permute.xlu0 %2840
      %2842 = vrot.lane.b32.xlu0 %v2597, 63
      %v2843 = vpop.permute.xlu0 %2842
      %2844 = vrot.lane.b32.xlu0 %v2599, 63
      %v2845 = vpop.permute.xlu0 %2844
      %2846 = vrot.lane.b32.xlu0 %v2601, 63
      %v2847 = vpop.permute.xlu0 %2846
      %2848 = vrot.lane.b32.xlu0 %v2603, 63
      %v2849 = vpop.permute.xlu0 %2848
      %vm2850 = vcmp.lt.s32.totalorder %v442, 63
      %v2851 = vsel %vm2850, %v2827, %v2839
      %v2852 = vsel %vm2850, %v2829, %v2841
      %v2853 = vsel %vm2850, %v2831, %v2843
      %v2854 = vsel %vm2850, %v2833, %v2845
      %v2855 = vsel %vm2850, %v2835, %v2847
      %v2856 = vsel %vm2850, %v2837, %v2849
      %v2857 = vsel %vm2850, %v2839, %v2827
      %v2858 = vsel %vm2850, %v2841, %v2829
      %v2859 = vsel %vm2850, %v2843, %v2831
      %v2860 = vsel %vm2850, %v2845, %v2833
      %v2861 = vsel %vm2850, %v2847, %v2835
      %v2862 = vsel %vm2850, %v2849, %v2837
      %v2863 = vsel %vm2608, 1, 0
      %v2864 = vsel %vm2609, 1, 0
      %vm2865 = vcmp.eq.s32.totalorder %v2863, 1
      %vm2866 = vcmp.eq.s32.totalorder %v2864, 1
      %v2867 = vsel %vm2865, %v2857, 0.0
      %v2868 = vsel %vm2866, %v2851, 0.0
      %v2869 = vsel %vm2865, %v2858, 0.0
      %v2870 = vsel %vm2866, %v2852, 0.0
      %v2871 = vsel %vm2865, %v2859, 0.0
      %v2872 = vsel %vm2866, %v2853, 0.0
      %v2873 = vsel %vm2865, %v2860, 0.0
      %v2874 = vsel %vm2866, %v2854, 0.0
      %v2875 = vsel %vm2865, %v2861, 0.0
      %v2876 = vsel %vm2866, %v2855, 0.0
      %v2877 = vsel %vm2865, %v2862, 0.0
      %v2878 = vsel %vm2866, %v2856, 0.0
      %s2879 = scalar_lea.vmem %s7, 32
      %v2880 = vld [vmem:[%s2879] sm:$0xff]
      %v2881 = vld [vmem:[%s2879 + $0x8] sm:$0xff]
      %v2883 = vsel %vm2721, %v2880, 0
      %v2886 = vsel %vm2721, %v2881, 0
      %2888 = vmatpush.msra.mxu0 0.0
      %2889 = vmatpush.msra.mxu0 0.0
      %2890 = vmatpush.msra.mxu0 0.0
      %2891 = vmatpush.msra.mxu0 0.0
      %2892 = vmatpush.msra.mxu0 0.0
      %2893 = vmatpush.msra.mxu0 0.0
      %2894 = vmatpush.msra.mxu0 0.0
      %2895 = vmatpush.msra.mxu0 0.0
      %2896 = vmatpush.msra.mxu0 0.0
      %2897 = vmatpush.msra.mxu0 0.0
      %2898 = vmatpush.msra.mxu0 %v2877
      %2899 = vmatpush.msra.mxu0 %v2875
      %2900 = vmatpush.msra.mxu0 %v2873
      %2901 = vmatpush.msra.mxu0 %v2871
      %2902 = vmatpush.msra.mxu0 %v2869
      %2903 = vmatpush.msra.mxu0 %v2867
      %2904 = vmatmul.f32.gmra.mxu0 %v2883
      %v2905 = vpop.f32.mrf.mxu0
      %v2906 = vadd.f32 0.0, %v2905
      %2907 = vmatmul.f32.gmra.mxu0 %v2886
      %v2908 = vpop.f32.mrf.mxu0
      %v2909 = vadd.f32 0.0, %v2908
      %2910 = vdwg.mxu0
      %2911 = vmatpush.msra.mxu0 0.0
      %2912 = vmatpush.msra.mxu0 0.0
      %2913 = vmatpush.msra.mxu0 0.0
      %2914 = vmatpush.msra.mxu0 0.0
      %2915 = vmatpush.msra.mxu0 0.0
      %2916 = vmatpush.msra.mxu0 0.0
      %2917 = vmatpush.msra.mxu0 0.0
      %2918 = vmatpush.msra.mxu0 0.0
      %2919 = vmatpush.msra.mxu0 0.0
      %2920 = vmatpush.msra.mxu0 0.0
      %2921 = vmatpush.msra.mxu0 %v2878
      %2922 = vmatpush.msra.mxu0 %v2876
      %2923 = vmatpush.msra.mxu0 %v2874
      %2924 = vmatpush.msra.mxu0 %v2872
      %2925 = vmatpush.msra.mxu0 %v2870
      %2926 = vmatpush.msra.mxu0 %v2868
      %2927 = vmatmul.f32.gmra.mxu0 %v2883
      %v2928 = vpop.f32.mrf.mxu0
      %v2929 = vadd.f32 0.0, %v2928
      %2930 = vmatmul.f32.gmra.mxu0 %v2886
      %v2931 = vpop.f32.mrf.mxu0
      %v2932 = vadd.f32 0.0, %v2931
      %2933 = vdwg.mxu0
      %v2934 = vadd.f32 %v2798, %v2906
      %v2935 = vadd.f32 %v2821, %v2929
      %v2936 = vadd.f32 %v2801, %v2909
      %v2937 = vadd.f32 %v2824, %v2932
      %2938 = vrot.lane.b32.xlu0 %v2592, 1
      %v2939 = vpop.permute.xlu0 %2938
      %2940 = vrot.lane.b32.xlu0 %v2594, 1
      %v2941 = vpop.permute.xlu0 %2940
      %2942 = vrot.lane.b32.xlu0 %v2596, 1
      %v2943 = vpop.permute.xlu0 %2942
      %2944 = vrot.lane.b32.xlu0 %v2598, 1
      %v2945 = vpop.permute.xlu0 %2944
      %2946 = vrot.lane.b32.xlu0 %v2600, 1
      %v2947 = vpop.permute.xlu0 %2946
      %2948 = vrot.lane.b32.xlu0 %v2602, 1
      %v2949 = vpop.permute.xlu0 %2948
      %2950 = vrot.lane.b32.xlu0 %v2593, 1
      %v2951 = vpop.permute.xlu0 %2950
      %2952 = vrot.lane.b32.xlu0 %v2595, 1
      %v2953 = vpop.permute.xlu0 %2952
      %2954 = vrot.lane.b32.xlu0 %v2597, 1
      %v2955 = vpop.permute.xlu0 %2954
      %2956 = vrot.lane.b32.xlu0 %v2599, 1
      %v2957 = vpop.permute.xlu0 %2956
      %2958 = vrot.lane.b32.xlu0 %v2601, 1
      %v2959 = vpop.permute.xlu0 %2958
      %2960 = vrot.lane.b32.xlu0 %v2603, 1
      %v2961 = vpop.permute.xlu0 %2960
      %v2962 = vsel %vm790, %v2939, %v2951
      %v2963 = vsel %vm790, %v2941, %v2953
      %v2964 = vsel %vm790, %v2943, %v2955
      %v2965 = vsel %vm790, %v2945, %v2957
      %v2966 = vsel %vm790, %v2947, %v2959
      %v2967 = vsel %vm790, %v2949, %v2961
      %v2968 = vsel %vm790, %v2951, %v2939
      %v2969 = vsel %vm790, %v2953, %v2941
      %v2970 = vsel %vm790, %v2955, %v2943
      %v2971 = vsel %vm790, %v2957, %v2945
      %v2972 = vsel %vm790, %v2959, %v2947
      %v2973 = vsel %vm790, %v2961, %v2949
      %v2974 = vsel %vm797, %v2968, 0.0
      %v2975 = vsel %vm798, %v2962, 0.0
      %v2976 = vsel %vm797, %v2969, 0.0
      %v2977 = vsel %vm798, %v2963, 0.0
      %v2978 = vsel %vm797, %v2970, 0.0
      %v2979 = vsel %vm798, %v2964, 0.0
      %v2980 = vsel %vm797, %v2971, 0.0
      %v2981 = vsel %vm798, %v2965, 0.0
      %v2982 = vsel %vm797, %v2972, 0.0
      %v2983 = vsel %vm798, %v2966, 0.0
      %v2984 = vsel %vm797, %v2973, 0.0
      %v2985 = vsel %vm798, %v2967, 0.0
      %s2986 = scalar_lea.vmem %s7, 48
      %v2987 = vld [vmem:[%s2986] sm:$0xff]
      %v2988 = vld [vmem:[%s2986 + $0x8] sm:$0xff]
      %v2990 = vsel %vm2721, %v2987, 0
      %v2993 = vsel %vm2721, %v2988, 0
      %2995 = vmatpush.msra.mxu0 0.0
      %2996 = vmatpush.msra.mxu0 0.0
      %2997 = vmatpush.msra.mxu0 0.0
      %2998 = vmatpush.msra.mxu0 0.0
      %2999 = vmatpush.msra.mxu0 0.0
      %3000 = vmatpush.msra.mxu0 0.0
      %3001 = vmatpush.msra.mxu0 0.0
      %3002 = vmatpush.msra.mxu0 0.0
      %3003 = vmatpush.msra.mxu0 0.0
      %3004 = vmatpush.msra.mxu0 0.0
      %3005 = vmatpush.msra.mxu0 %v2984
      %3006 = vmatpush.msra.mxu0 %v2982
      %3007 = vmatpush.msra.mxu0 %v2980
      %3008 = vmatpush.msra.mxu0 %v2978
      %3009 = vmatpush.msra.mxu0 %v2976
      %3010 = vmatpush.msra.mxu0 %v2974
      %3011 = vmatmul.f32.gmra.mxu0 %v2990
      %v3012 = vpop.f32.mrf.mxu0
      %v3013 = vadd.f32 0.0, %v3012
      %3014 = vmatmul.f32.gmra.mxu0 %v2993
      %v3015 = vpop.f32.mrf.mxu0
      %v3016 = vadd.f32 0.0, %v3015
      %3017 = vdwg.mxu0
      %3018 = vmatpush.msra.mxu0 0.0
      %3019 = vmatpush.msra.mxu0 0.0
      %3020 = vmatpush.msra.mxu0 0.0
      %3021 = vmatpush.msra.mxu0 0.0
      %3022 = vmatpush.msra.mxu0 0.0
      %3023 = vmatpush.msra.mxu0 0.0
      %3024 = vmatpush.msra.mxu0 0.0
      %3025 = vmatpush.msra.mxu0 0.0
      %3026 = vmatpush.msra.mxu0 0.0
      %3027 = vmatpush.msra.mxu0 0.0
      %3028 = vmatpush.msra.mxu0 %v2985
      %3029 = vmatpush.msra.mxu0 %v2983
      %3030 = vmatpush.msra.mxu0 %v2981
      %3031 = vmatpush.msra.mxu0 %v2979
      %3032 = vmatpush.msra.mxu0 %v2977
      %3033 = vmatpush.msra.mxu0 %v2975
      %3034 = vmatmul.f32.gmra.mxu0 %v2990
      %v3035 = vpop.f32.mrf.mxu0
      %v3036 = vadd.f32 0.0, %v3035
      %3037 = vmatmul.f32.gmra.mxu0 %v2993
      %v3038 = vpop.f32.mrf.mxu0
      %v3039 = vadd.f32 0.0, %v3038
      %3040 = vdwg.mxu0
      %v3041 = vadd.f32 %v2934, %v3013
      %v3042 = vadd.f32 %v2935, %v3036
      %v3043 = vadd.f32 %v2936, %v3016
      %v3044 = vadd.f32 %v2937, %v3039
      %s3045 = scalar_lea.vmem %s7, 64
      %v3046 = vld [vmem:[%s3045] sm:$0xff]
      %v3047 = vld [vmem:[%s3045 + $0x8] sm:$0xff]
      %v3049 = vsel %vm2721, %v3046, 0
      %v3052 = vsel %vm2721, %v3047, 0
      %3054 = vmatpush.msra.mxu0 0.0
      %3055 = vmatpush.msra.mxu0 0.0
      %3056 = vmatpush.msra.mxu0 0.0
      %3057 = vmatpush.msra.mxu0 0.0
      %3058 = vmatpush.msra.mxu0 0.0
      %3059 = vmatpush.msra.mxu0 0.0
      %3060 = vmatpush.msra.mxu0 0.0
      %3061 = vmatpush.msra.mxu0 0.0
      %3062 = vmatpush.msra.mxu0 0.0
      %3063 = vmatpush.msra.mxu0 0.0
      %3064 = vmatpush.msra.mxu0 %v2602
      %3065 = vmatpush.msra.mxu0 %v2600
      %3066 = vmatpush.msra.mxu0 %v2598
      %3067 = vmatpush.msra.mxu0 %v2596
      %3068 = vmatpush.msra.mxu0 %v2594
      %3069 = vmatpush.msra.mxu0 %v2592
      %3070 = vmatmul.f32.gmra.mxu0 %v3049
      %v3071 = vpop.f32.mrf.mxu0
      %v3072 = vadd.f32 0.0, %v3071
      %3073 = vmatmul.f32.gmra.mxu0 %v3052
      %v3074 = vpop.f32.mrf.mxu0
      %v3075 = vadd.f32 0.0, %v3074
      %3076 = vdwg.mxu0
      %3077 = vmatpush.msra.mxu0 0.0
      %3078 = vmatpush.msra.mxu0 0.0
      %3079 = vmatpush.msra.mxu0 0.0
      %3080 = vmatpush.msra.mxu0 0.0
      %3081 = vmatpush.msra.mxu0 0.0
      %3082 = vmatpush.msra.mxu0 0.0
      %3083 = vmatpush.msra.mxu0 0.0
      %3084 = vmatpush.msra.mxu0 0.0
      %3085 = vmatpush.msra.mxu0 0.0
      %3086 = vmatpush.msra.mxu0 0.0
      %3087 = vmatpush.msra.mxu0 %v2603
      %3088 = vmatpush.msra.mxu0 %v2601
      %3089 = vmatpush.msra.mxu0 %v2599
      %3090 = vmatpush.msra.mxu0 %v2597
      %3091 = vmatpush.msra.mxu0 %v2595
      %3092 = vmatpush.msra.mxu0 %v2593
      %3093 = vmatmul.f32.gmra.mxu0 %v3049
      %v3094 = vpop.f32.mrf.mxu0
      %v3095 = vadd.f32 0.0, %v3094
      %3096 = vmatmul.f32.gmra.mxu0 %v3052
      %v3097 = vpop.f32.mrf.mxu0
      %v3098 = vadd.f32 0.0, %v3097
      %3099 = vdwg.mxu0
      %v3100 = vadd.f32 %v3041, %v3072
      %v3101 = vadd.f32 %v3042, %v3095
      %v3102 = vadd.f32 %v3043, %v3075
      %v3103 = vadd.f32 %v3044, %v3098
      %3104 = vrot.lane.b32.xlu0 %v2592, 127
      %v3105 = vpop.permute.xlu0 %3104
      %3106 = vrot.lane.b32.xlu0 %v2594, 127
      %v3107 = vpop.permute.xlu0 %3106
      %3108 = vrot.lane.b32.xlu0 %v2596, 127
      %v3109 = vpop.permute.xlu0 %3108
      %3110 = vrot.lane.b32.xlu0 %v2598, 127
      %v3111 = vpop.permute.xlu0 %3110
      %3112 = vrot.lane.b32.xlu0 %v2600, 127
      %v3113 = vpop.permute.xlu0 %3112
      %3114 = vrot.lane.b32.xlu0 %v2602, 127
      %v3115 = vpop.permute.xlu0 %3114
      %3116 = vrot.lane.b32.xlu0 %v2593, 127
      %v3117 = vpop.permute.xlu0 %3116
      %3118 = vrot.lane.b32.xlu0 %v2595, 127
      %v3119 = vpop.permute.xlu0 %3118
      %3120 = vrot.lane.b32.xlu0 %v2597, 127
      %v3121 = vpop.permute.xlu0 %3120
      %3122 = vrot.lane.b32.xlu0 %v2599, 127
      %v3123 = vpop.permute.xlu0 %3122
      %3124 = vrot.lane.b32.xlu0 %v2601, 127
      %v3125 = vpop.permute.xlu0 %3124
      %3126 = vrot.lane.b32.xlu0 %v2603, 127
      %v3127 = vpop.permute.xlu0 %3126
      %v3128 = vsel %vm929, %v3105, %v3117
      %v3129 = vsel %vm929, %v3107, %v3119
      %v3130 = vsel %vm929, %v3109, %v3121
      %v3131 = vsel %vm929, %v3111, %v3123
      %v3132 = vsel %vm929, %v3113, %v3125
      %v3133 = vsel %vm929, %v3115, %v3127
      %v3134 = vsel %vm929, %v3117, %v3105
      %v3135 = vsel %vm929, %v3119, %v3107
      %v3136 = vsel %vm929, %v3121, %v3109
      %v3137 = vsel %vm929, %v3123, %v3111
      %v3138 = vsel %vm929, %v3125, %v3113
      %v3139 = vsel %vm929, %v3127, %v3115
      %v3140 = vsel %vm936, %v3128, 0.0
      %v3141 = vsel %vm937, %v3134, 0.0
      %v3142 = vsel %vm936, %v3129, 0.0
      %v3143 = vsel %vm937, %v3135, 0.0
      %v3144 = vsel %vm936, %v3130, 0.0
      %v3145 = vsel %vm937, %v3136, 0.0
      %v3146 = vsel %vm936, %v3131, 0.0
      %v3147 = vsel %vm937, %v3137, 0.0
      %v3148 = vsel %vm936, %v3132, 0.0
      %v3149 = vsel %vm937, %v3138, 0.0
      %v3150 = vsel %vm936, %v3133, 0.0
      %v3151 = vsel %vm937, %v3139, 0.0
      %s3152 = scalar_lea.vmem %s7, 80
      %v3153 = vld [vmem:[%s3152] sm:$0xff]
      %v3154 = vld [vmem:[%s3152 + $0x8] sm:$0xff]
      %v3156 = vsel %vm2721, %v3153, 0
      %v3159 = vsel %vm2721, %v3154, 0
      %3161 = vmatpush.msra.mxu0 0.0
      %3162 = vmatpush.msra.mxu0 0.0
      %3163 = vmatpush.msra.mxu0 0.0
      %3164 = vmatpush.msra.mxu0 0.0
      %3165 = vmatpush.msra.mxu0 0.0
      %3166 = vmatpush.msra.mxu0 0.0
      %3167 = vmatpush.msra.mxu0 0.0
      %3168 = vmatpush.msra.mxu0 0.0
      %3169 = vmatpush.msra.mxu0 0.0
      %3170 = vmatpush.msra.mxu0 0.0
      %3171 = vmatpush.msra.mxu0 %v3150
      %3172 = vmatpush.msra.mxu0 %v3148
      %3173 = vmatpush.msra.mxu0 %v3146
      %3174 = vmatpush.msra.mxu0 %v3144
      %3175 = vmatpush.msra.mxu0 %v3142
      %3176 = vmatpush.msra.mxu0 %v3140
      %3177 = vmatmul.f32.gmra.mxu0 %v3156
      %v3178 = vpop.f32.mrf.mxu0
      %v3179 = vadd.f32 0.0, %v3178
      %3180 = vmatmul.f32.gmra.mxu0 %v3159
      %v3181 = vpop.f32.mrf.mxu0
      %v3182 = vadd.f32 0.0, %v3181
      %3183 = vdwg.mxu0
      %3184 = vmatpush.msra.mxu0 0.0
      %3185 = vmatpush.msra.mxu0 0.0
      %3186 = vmatpush.msra.mxu0 0.0
      %3187 = vmatpush.msra.mxu0 0.0
      %3188 = vmatpush.msra.mxu0 0.0
      %3189 = vmatpush.msra.mxu0 0.0
      %3190 = vmatpush.msra.mxu0 0.0
      %3191 = vmatpush.msra.mxu0 0.0
      %3192 = vmatpush.msra.mxu0 0.0
      %3193 = vmatpush.msra.mxu0 0.0
      %3194 = vmatpush.msra.mxu0 %v3151
      %3195 = vmatpush.msra.mxu0 %v3149
      %3196 = vmatpush.msra.mxu0 %v3147
      %3197 = vmatpush.msra.mxu0 %v3145
      %3198 = vmatpush.msra.mxu0 %v3143
      %3199 = vmatpush.msra.mxu0 %v3141
      %3200 = vmatmul.f32.gmra.mxu0 %v3156
      %v3201 = vpop.f32.mrf.mxu0
      %v3202 = vadd.f32 0.0, %v3201
      %3203 = vmatmul.f32.gmra.mxu0 %v3159
      %v3204 = vpop.f32.mrf.mxu0
      %v3205 = vadd.f32 0.0, %v3204
      %3206 = vdwg.mxu0
      %v3207 = vadd.f32 %v3100, %v3179
      %v3208 = vadd.f32 %v3101, %v3202
      %v3209 = vadd.f32 %v3102, %v3182
      %v3210 = vadd.f32 %v3103, %v3205
      %v3211 = vadd.f32 %v3207, %v3208
      %3212 = vadd.xlane.f32.xlu0 %v3211
      %v3213 = vpop.xlane.xlu0 %3212
      %v3214 = vadd.f32 %v3209, %v3210
      %3215 = vadd.xlane.f32.xlu0 %v3214
      %v3216 = vpop.xlane.xlu0 %3215
      %v3217 = vmul.f32 %v3207, %v3207
      %v3218 = vmul.f32 %v3208, %v3208
      %v3219 = vmul.f32 %v3209, %v3209
      %v3220 = vmul.f32 %v3210, %v3210
      %v3221 = vadd.f32 %v3217, %v3218
      %3222 = vadd.xlane.f32.xlu0 %v3221
      %v3223 = vpop.xlane.xlu0 %3222
      %v3224 = vadd.f32 %v3219, %v3220
      %3225 = vadd.xlane.f32.xlu0 %v3224
      %v3226 = vpop.xlane.xlu0 %3225
      %v3227 = vmul.f32 %v3213, 0.00390625
      %v3228 = vmul.f32 %v3216, 0.00390625
      %v3229 = vmul.f32 %v3223, 0.00390625
      %v3230 = vmul.f32 %v3226, 0.00390625
      %v3231 = vmul.f32 %v3227, %v3227
      %v3232 = vmul.f32 %v3228, %v3228
      %v3233 = vsub.f32 %v3229, %v3231
      %v3234 = vsub.f32 %v3230, %v3232
      %v3235 = vld [vmem:[%s9] sm:$0xff]
      %v3236 = vld [vmem:[%s9 + $0x8] sm:$0xff]
      %v3237 = vadd.f32 %v3233, 1e-05
      %v3238 = vadd.f32 %v3234, 1e-05
      %v3239 = vrsqrt.pop %v3237
      %v3240 = vmul.f32 %v3239, %v3237
      %v3241 = vmul.f32 %v3240, %v3239
      %v3242 = vmul.f32 0.5, %v3241
      %v3243 = vsub.f32 1.5, %v3242
      %v3244 = vmul.f32 %v3239, %v3243
      %vm3245 = vweird.f32 %v3237
      %vm3246 = vweird.f32 %v3239
      %vm3247 = vmor %vm3245, %vm3246
      %v3248 = vsel %vm3247, %v3239, %v3244
      %v3249 = vrsqrt.pop %v3238
      %v3250 = vmul.f32 %v3249, %v3238
      %v3251 = vmul.f32 %v3250, %v3249
      %v3252 = vmul.f32 0.5, %v3251
      %v3253 = vsub.f32 1.5, %v3252
      %v3254 = vmul.f32 %v3249, %v3253
      %vm3255 = vweird.f32 %v3238
      %vm3256 = vweird.f32 %v3249
      %vm3257 = vmor %vm3255, %vm3256
      %v3258 = vsel %vm3257, %v3249, %v3254
      %v3259 = vmul.f32 %v3235, %v3248
      %v3260 = vmul.f32 %v3236, %v3258
      %v3261 = vmul.f32 %v3227, %v3259
      %v3262 = vmul.f32 %v3228, %v3260
      %3265 = vrot.lane.b32.xlu0 %v3261, 1
      %v3266 = vpop.permute.xlu0 %3265
      %3267 = vrot.lane.b32.xlu0 %v3262, 1
      %v3268 = vpop.permute.xlu0 %3267
      %v3271 = vsub.f32 %v3235, %v3266
      %v3272 = vsub.f32 %v3236, %v3268
      %3274 = vset.pattern.permute.xlu0 0
      %3275 = vperm.xlu0 %3274, %v3259
      %v3276 = vpop.permute.xlu0 %3275
      %3279 = vset.pattern.permute.xlu0 0
      %3280 = vperm.xlu0 %3279, %v3260
      %v3281 = vpop.permute.xlu0 %3280
      %v3283 = vmul.f32 %v3207, %v3276
      %v3284 = vmul.f32 %v3208, %v3276
      %v3285 = vmul.f32 %v3209, %v3281
      %v3286 = vmul.f32 %v3210, %v3281
      %3288 = vset.pattern.permute.xlu0 1
      %3289 = vperm.xlu0 %3288, %v3271
      %v3290 = vpop.permute.xlu0 %3289
      %3293 = vset.pattern.permute.xlu0 1
      %3294 = vperm.xlu0 %3293, %v3272
      %v3295 = vpop.permute.xlu0 %3294
      %v3297 = vadd.f32 %v3283, %v3290
      %v3298 = vadd.f32 %v3284, %v3290
      %v3299 = vadd.f32 %v3285, %v3295
      %v3300 = vadd.f32 %v3286, %v3295
      %vm3301 = vcmp.ge.f32.partialorder %v3297, 0.0
      %vm3302 = vcmp.ge.f32.partialorder %v3298, 0.0
      %vm3303 = vcmp.ge.f32.partialorder %v3299, 0.0
      %vm3304 = vcmp.ge.f32.partialorder %v3300, 0.0
      %3306 = vset.pattern.permute.xlu0 2
      %3307 = vperm.xlu0 %3306, %v3235
      %v3308 = vpop.permute.xlu0 %3307
      %3311 = vset.pattern.permute.xlu0 2
      %3312 = vperm.xlu0 %3311, %v3236
      %v3313 = vpop.permute.xlu0 %3312
      %v3315 = vmul.f32 %v3308, %v3297
      %v3316 = vmul.f32 %v3308, %v3298
      %v3317 = vmul.f32 %v3313, %v3299
      %v3318 = vmul.f32 %v3313, %v3300
      %v3319 = vsel %vm3301, %v3297, %v3315
      %v3320 = vsel %vm3302, %v3298, %v3316
      %v3321 = vsel %vm3303, %v3299, %v3317
      %v3322 = vsel %vm3304, %v3300, %v3318
      %v3323 = vld [vmem:[%s8] sm:$0xff]
      %v3324 = vld [vmem:[%s8 + $0x8] sm:$0xff]
      %3325 = vset.pattern.permute.xlu0 3
      %3326 = vperm.xlu0 %3325, %v3235
      %v3327 = vpop.permute.xlu0 %3326
      %3329 = vset.pattern.permute.xlu0 3
      %3330 = vperm.xlu0 %3329, %v3236
      %v3331 = vpop.permute.xlu0 %3330
      %v3334 = vsel %vm597, %v3323, 0
      %v3337 = vsel %vm597, %v3324, 0
      %3339 = vmatpush.msra.mxu0 0.0
      %3340 = vmatpush.msra.mxu0 0.0
      %3341 = vmatpush.msra.mxu0 0.0
      %3342 = vmatpush.msra.mxu0 0.0
      %3343 = vmatpush.msra.mxu0 0.0
      %3344 = vmatpush.msra.mxu0 0.0
      %3345 = vmatpush.msra.mxu0 0.0
      %3346 = vmatpush.msra.mxu0 0.0
      %3347 = vmatpush.msra.mxu0 0.0
      %3348 = vmatpush.msra.mxu0 0.0
      %3349 = vmatpush.msra.mxu0 0.0
      %3350 = vmatpush.msra.mxu0 0.0
      %3351 = vmatpush.msra.mxu0 0.0
      %3352 = vmatpush.msra.mxu0 0.0
      %3353 = vmatpush.msra.mxu0 %v3321
      %3354 = vmatpush.msra.mxu0 %v3319
      %3355 = vmatmul.f32.gmra.mxu0 %v3334
      %v3356 = vpop.f32.mrf.mxu0
      %v3357 = vadd.f32 %v3327, %v3356
      %3358 = vmatmul.f32.gmra.mxu0 %v3337
      %v3359 = vpop.f32.mrf.mxu0
      %v3360 = vadd.f32 %v3331, %v3359
      %3361 = vdwg.mxu0
      %3362 = vmatpush.msra.mxu0 0.0
      %3363 = vmatpush.msra.mxu0 0.0
      %3364 = vmatpush.msra.mxu0 0.0
      %3365 = vmatpush.msra.mxu0 0.0
      %3366 = vmatpush.msra.mxu0 0.0
      %3367 = vmatpush.msra.mxu0 0.0
      %3368 = vmatpush.msra.mxu0 0.0
      %3369 = vmatpush.msra.mxu0 0.0
      %3370 = vmatpush.msra.mxu0 0.0
      %3371 = vmatpush.msra.mxu0 0.0
      %3372 = vmatpush.msra.mxu0 0.0
      %3373 = vmatpush.msra.mxu0 0.0
      %3374 = vmatpush.msra.mxu0 0.0
      %3375 = vmatpush.msra.mxu0 0.0
      %3376 = vmatpush.msra.mxu0 %v3322
      %3377 = vmatpush.msra.mxu0 %v3320
      %3378 = vmatmul.f32.gmra.mxu0 %v3334
      %v3379 = vpop.f32.mrf.mxu0
      %v3380 = vadd.f32 %v3327, %v3379
      %3381 = vmatmul.f32.gmra.mxu0 %v3337
      %v3382 = vpop.f32.mrf.mxu0
      %v3383 = vadd.f32 %v3331, %v3382
      %3384 = vdwg.mxu0
      %v3385 = vmax.f32 %v3357, 0.0
      %v3386 = vmax.f32 %v3380, 0.0
      %v3387 = vmax.f32 %v3360, 0.0
      %v3388 = vmax.f32 %v3383, 0.0
      %s3389 = scalar_lea.vmem %s8, 16
      %v3390 = vld [vmem:[%s3389] sm:$0xff]
      %v3391 = vld [vmem:[%s3389 + $0x8] sm:$0xff]
      %v3393 = vsel %vm597, %v3390, 0
      %v3396 = vsel %vm597, %v3391, 0
      %3398 = vmatpush.msra.mxu0 0.0
      %3399 = vmatpush.msra.mxu0 0.0
      %3400 = vmatpush.msra.mxu0 0.0
      %3401 = vmatpush.msra.mxu0 0.0
      %3402 = vmatpush.msra.mxu0 0.0
      %3403 = vmatpush.msra.mxu0 0.0
      %3404 = vmatpush.msra.mxu0 0.0
      %3405 = vmatpush.msra.mxu0 0.0
      %3406 = vmatpush.msra.mxu0 0.0
      %3407 = vmatpush.msra.mxu0 0.0
      %3408 = vmatpush.msra.mxu0 0.0
      %3409 = vmatpush.msra.mxu0 0.0
      %3410 = vmatpush.msra.mxu0 0.0
      %3411 = vmatpush.msra.mxu0 0.0
      %3412 = vmatpush.msra.mxu0 %v3387
      %3413 = vmatpush.msra.mxu0 %v3385
      %3414 = vmatmul.f32.gmra.mxu0 %v3393
      %v3415 = vpop.f32.mrf.mxu0
      %v3416 = vadd.f32 0.0, %v3415
      %3417 = vmatmul.f32.gmra.mxu0 %v3396
      %v3418 = vpop.f32.mrf.mxu0
      %v3419 = vadd.f32 0.0, %v3418
      %3420 = vdwg.mxu0
      %3421 = vmatpush.msra.mxu0 0.0
      %3422 = vmatpush.msra.mxu0 0.0
      %3423 = vmatpush.msra.mxu0 0.0
      %3424 = vmatpush.msra.mxu0 0.0
      %3425 = vmatpush.msra.mxu0 0.0
      %3426 = vmatpush.msra.mxu0 0.0
      %3427 = vmatpush.msra.mxu0 0.0
      %3428 = vmatpush.msra.mxu0 0.0
      %3429 = vmatpush.msra.mxu0 0.0
      %3430 = vmatpush.msra.mxu0 0.0
      %3431 = vmatpush.msra.mxu0 0.0
      %3432 = vmatpush.msra.mxu0 0.0
      %3433 = vmatpush.msra.mxu0 0.0
      %3434 = vmatpush.msra.mxu0 0.0
      %3435 = vmatpush.msra.mxu0 %v3388
      %3436 = vmatpush.msra.mxu0 %v3386
      %3437 = vmatmul.f32.gmra.mxu0 %v3393
      %v3438 = vpop.f32.mrf.mxu0
      %v3439 = vadd.f32 0.0, %v3438
      %3440 = vmatmul.f32.gmra.mxu0 %v3396
      %v3441 = vpop.f32.mrf.mxu0
      %v3442 = vadd.f32 0.0, %v3441
      %3443 = vdwg.mxu0
      %3444 = vrot.lane.b32.xlu0 %v3416, 4
      %v3445 = vpop.permute.xlu0 %3444
      %3446 = vrot.lane.b32.xlu0 %v3419, 4
      %v3447 = vpop.permute.xlu0 %3446
      %3448 = vrot.lane.b32.xlu0 %v3439, 4
      %v3449 = vpop.permute.xlu0 %3448
      %3450 = vrot.lane.b32.xlu0 %v3442, 4
      %v3451 = vpop.permute.xlu0 %3450
      %v3452 = vsel %vm1242, %v3445, %v3449
      %v3453 = vsel %vm1242, %v3447, %v3451
      %v3454 = vsel %vm1242, %v3449, %v3445
      %v3455 = vsel %vm1242, %v3451, %v3447
      %v3456 = vsel %vm1249, %v3454, 0.0
      %v3457 = vsel %vm1250, %v3452, 0.0
      %v3458 = vsel %vm1249, %v3455, 0.0
      %v3459 = vsel %vm1250, %v3453, 0.0
      %3460 = vset.pattern.permute.xlu0 4
      %3461 = vperm.xlu0 %3460, %v3235
      %v3462 = vpop.permute.xlu0 %3461
      %3464 = vset.pattern.permute.xlu0 4
      %3465 = vperm.xlu0 %3464, %v3236
      %v3466 = vpop.permute.xlu0 %3465
      %v3468 = vmul.f32 %v3462, %v3456
      %v3469 = vmul.f32 %v3462, %v3457
      %v3470 = vmul.f32 %v3466, %v3458
      %v3471 = vmul.f32 %v3466, %v3459
      %3472 = vrot.lane.b32.xlu0 %v3416, 3
      %v3473 = vpop.permute.xlu0 %3472
      %3474 = vrot.lane.b32.xlu0 %v3419, 3
      %v3475 = vpop.permute.xlu0 %3474
      %3476 = vrot.lane.b32.xlu0 %v3439, 3
      %v3477 = vpop.permute.xlu0 %3476
      %3478 = vrot.lane.b32.xlu0 %v3442, 3
      %v3479 = vpop.permute.xlu0 %3478
      %v3480 = vsel %vm1275, %v3473, %v3477
      %v3481 = vsel %vm1275, %v3475, %v3479
      %v3482 = vsel %vm1275, %v3477, %v3473
      %v3483 = vsel %vm1275, %v3479, %v3475
      %v3484 = vsel %vm1282, %v3482, 0.0
      %v3485 = vsel %vm1283, %v3480, 0.0
      %v3486 = vsel %vm1282, %v3483, 0.0
      %v3487 = vsel %vm1283, %v3481, 0.0
      %3488 = vset.pattern.permute.xlu0 5
      %3489 = vperm.xlu0 %3488, %v3235
      %v3490 = vpop.permute.xlu0 %3489
      %3492 = vset.pattern.permute.xlu0 5
      %3493 = vperm.xlu0 %3492, %v3236
      %v3494 = vpop.permute.xlu0 %3493
      %v3496 = vmul.f32 %v3490, %v3484
      %v3497 = vmul.f32 %v3490, %v3485
      %v3498 = vmul.f32 %v3494, %v3486
      %v3499 = vmul.f32 %v3494, %v3487
      %v3500 = vadd.f32 %v3468, %v3496
      %v3501 = vadd.f32 %v3469, %v3497
      %v3502 = vadd.f32 %v3470, %v3498
      %v3503 = vadd.f32 %v3471, %v3499
      %3504 = vrot.lane.b32.xlu0 %v3416, 2
      %v3505 = vpop.permute.xlu0 %3504
      %3506 = vrot.lane.b32.xlu0 %v3419, 2
      %v3507 = vpop.permute.xlu0 %3506
      %3508 = vrot.lane.b32.xlu0 %v3439, 2
      %v3509 = vpop.permute.xlu0 %3508
      %3510 = vrot.lane.b32.xlu0 %v3442, 2
      %v3511 = vpop.permute.xlu0 %3510
      %v3512 = vsel %vm1312, %v3505, %v3509
      %v3513 = vsel %vm1312, %v3507, %v3511
      %v3514 = vsel %vm1312, %v3509, %v3505
      %v3515 = vsel %vm1312, %v3511, %v3507
      %v3516 = vsel %vm1319, %v3514, 0.0
      %v3517 = vsel %vm1320, %v3512, 0.0
      %v3518 = vsel %vm1319, %v3515, 0.0
      %v3519 = vsel %vm1320, %v3513, 0.0
      %3520 = vset.pattern.permute.xlu0 6
      %3521 = vperm.xlu0 %3520, %v3235
      %v3522 = vpop.permute.xlu0 %3521
      %3524 = vset.pattern.permute.xlu0 6
      %3525 = vperm.xlu0 %3524, %v3236
      %v3526 = vpop.permute.xlu0 %3525
      %v3528 = vmul.f32 %v3522, %v3516
      %v3529 = vmul.f32 %v3522, %v3517
      %v3530 = vmul.f32 %v3526, %v3518
      %v3531 = vmul.f32 %v3526, %v3519
      %v3532 = vadd.f32 %v3500, %v3528
      %v3533 = vadd.f32 %v3501, %v3529
      %v3534 = vadd.f32 %v3502, %v3530
      %v3535 = vadd.f32 %v3503, %v3531
      %3536 = vrot.lane.b32.xlu0 %v3416, 1
      %v3537 = vpop.permute.xlu0 %3536
      %3538 = vrot.lane.b32.xlu0 %v3419, 1
      %v3539 = vpop.permute.xlu0 %3538
      %3540 = vrot.lane.b32.xlu0 %v3439, 1
      %v3541 = vpop.permute.xlu0 %3540
      %3542 = vrot.lane.b32.xlu0 %v3442, 1
      %v3543 = vpop.permute.xlu0 %3542
      %v3544 = vsel %vm790, %v3537, %v3541
      %v3545 = vsel %vm790, %v3539, %v3543
      %v3546 = vsel %vm790, %v3541, %v3537
      %v3547 = vsel %vm790, %v3543, %v3539
      %v3548 = vsel %vm797, %v3546, 0.0
      %v3549 = vsel %vm798, %v3544, 0.0
      %v3550 = vsel %vm797, %v3547, 0.0
      %v3551 = vsel %vm798, %v3545, 0.0
      %3552 = vset.pattern.permute.xlu0 7
      %3553 = vperm.xlu0 %3552, %v3235
      %v3554 = vpop.permute.xlu0 %3553
      %3556 = vset.pattern.permute.xlu0 7
      %3557 = vperm.xlu0 %3556, %v3236
      %v3558 = vpop.permute.xlu0 %3557
      %v3560 = vmul.f32 %v3554, %v3548
      %v3561 = vmul.f32 %v3554, %v3549
      %v3562 = vmul.f32 %v3558, %v3550
      %v3563 = vmul.f32 %v3558, %v3551
      %v3564 = vadd.f32 %v3532, %v3560
      %v3565 = vadd.f32 %v3533, %v3561
      %v3566 = vadd.f32 %v3534, %v3562
      %v3567 = vadd.f32 %v3535, %v3563
      %3568 = vset.pattern.permute.xlu0 8
      %3569 = vperm.xlu0 %3568, %v3235
      %v3570 = vpop.permute.xlu0 %3569
      %3572 = vset.pattern.permute.xlu0 8
      %3573 = vperm.xlu0 %3572, %v3236
      %v3574 = vpop.permute.xlu0 %3573
      %v3576 = vmul.f32 %v3570, %v3416
      %v3577 = vmul.f32 %v3570, %v3439
      %v3578 = vmul.f32 %v3574, %v3419
      %v3579 = vmul.f32 %v3574, %v3442
      %v3580 = vadd.f32 %v3564, %v3576
      %v3581 = vadd.f32 %v3565, %v3577
      %v3582 = vadd.f32 %v3566, %v3578
      %v3583 = vadd.f32 %v3567, %v3579
      %3584 = vrot.lane.b32.xlu0 %v3416, 127
      %v3585 = vpop.permute.xlu0 %3584
      %3586 = vrot.lane.b32.xlu0 %v3419, 127
      %v3587 = vpop.permute.xlu0 %3586
      %3588 = vrot.lane.b32.xlu0 %v3439, 127
      %v3589 = vpop.permute.xlu0 %3588
      %3590 = vrot.lane.b32.xlu0 %v3442, 127
      %v3591 = vpop.permute.xlu0 %3590
      %v3592 = vsel %vm929, %v3585, %v3589
      %v3593 = vsel %vm929, %v3587, %v3591
      %v3594 = vsel %vm929, %v3589, %v3585
      %v3595 = vsel %vm929, %v3591, %v3587
      %v3596 = vsel %vm936, %v3592, 0.0
      %v3597 = vsel %vm937, %v3594, 0.0
      %v3598 = vsel %vm936, %v3593, 0.0
      %v3599 = vsel %vm937, %v3595, 0.0
      %3600 = vset.pattern.permute.xlu0 9
      %3601 = vperm.xlu0 %3600, %v3235
      %v3602 = vpop.permute.xlu0 %3601
      %3604 = vset.pattern.permute.xlu0 9
      %3605 = vperm.xlu0 %3604, %v3236
      %v3606 = vpop.permute.xlu0 %3605
      %v3608 = vmul.f32 %v3602, %v3596
      %v3609 = vmul.f32 %v3602, %v3597
      %v3610 = vmul.f32 %v3606, %v3598
      %v3611 = vmul.f32 %v3606, %v3599
      %v3612 = vadd.f32 %v3580, %v3608
      %v3613 = vadd.f32 %v3581, %v3609
      %v3614 = vadd.f32 %v3582, %v3610
      %v3615 = vadd.f32 %v3583, %v3611
      %3616 = vrot.lane.b32.xlu0 %v3416, 126
      %v3617 = vpop.permute.xlu0 %3616
      %3618 = vrot.lane.b32.xlu0 %v3419, 126
      %v3619 = vpop.permute.xlu0 %3618
      %3620 = vrot.lane.b32.xlu0 %v3439, 126
      %v3621 = vpop.permute.xlu0 %3620
      %3622 = vrot.lane.b32.xlu0 %v3442, 126
      %v3623 = vpop.permute.xlu0 %3622
      %v3624 = vsel %vm1429, %v3617, %v3621
      %v3625 = vsel %vm1429, %v3619, %v3623
      %v3626 = vsel %vm1429, %v3621, %v3617
      %v3627 = vsel %vm1429, %v3623, %v3619
      %v3628 = vsel %vm1436, %v3624, 0.0
      %v3629 = vsel %vm1437, %v3626, 0.0
      %v3630 = vsel %vm1436, %v3625, 0.0
      %v3631 = vsel %vm1437, %v3627, 0.0
      %3632 = vset.pattern.permute.xlu0 10
      %3633 = vperm.xlu0 %3632, %v3235
      %v3634 = vpop.permute.xlu0 %3633
      %3636 = vset.pattern.permute.xlu0 10
      %3637 = vperm.xlu0 %3636, %v3236
      %v3638 = vpop.permute.xlu0 %3637
      %v3640 = vmul.f32 %v3634, %v3628
      %v3641 = vmul.f32 %v3634, %v3629
      %v3642 = vmul.f32 %v3638, %v3630
      %v3643 = vmul.f32 %v3638, %v3631
      %v3644 = vadd.f32 %v3612, %v3640
      %v3645 = vadd.f32 %v3613, %v3641
      %v3646 = vadd.f32 %v3614, %v3642
      %v3647 = vadd.f32 %v3615, %v3643
      %3648 = vrot.lane.b32.xlu0 %v3416, 125
      %v3649 = vpop.permute.xlu0 %3648
      %3650 = vrot.lane.b32.xlu0 %v3419, 125
      %v3651 = vpop.permute.xlu0 %3650
      %3652 = vrot.lane.b32.xlu0 %v3439, 125
      %v3653 = vpop.permute.xlu0 %3652
      %3654 = vrot.lane.b32.xlu0 %v3442, 125
      %v3655 = vpop.permute.xlu0 %3654
      %v3656 = vsel %vm1466, %v3649, %v3653
      %v3657 = vsel %vm1466, %v3651, %v3655
      %v3658 = vsel %vm1466, %v3653, %v3649
      %v3659 = vsel %vm1466, %v3655, %v3651
      %v3660 = vsel %vm1473, %v3656, 0.0
      %v3661 = vsel %vm1474, %v3658, 0.0
      %v3662 = vsel %vm1473, %v3657, 0.0
      %v3663 = vsel %vm1474, %v3659, 0.0
      %3664 = vset.pattern.permute.xlu0 11
      %3665 = vperm.xlu0 %3664, %v3235
      %v3666 = vpop.permute.xlu0 %3665
      %3668 = vset.pattern.permute.xlu0 11
      %3669 = vperm.xlu0 %3668, %v3236
      %v3670 = vpop.permute.xlu0 %3669
      %v3672 = vmul.f32 %v3666, %v3660
      %v3673 = vmul.f32 %v3666, %v3661
      %v3674 = vmul.f32 %v3670, %v3662
      %v3675 = vmul.f32 %v3670, %v3663
      %v3676 = vadd.f32 %v3644, %v3672
      %v3677 = vadd.f32 %v3645, %v3673
      %v3678 = vadd.f32 %v3646, %v3674
      %v3679 = vadd.f32 %v3647, %v3675
      %3680 = vrot.lane.b32.xlu0 %v3416, 124
      %v3681 = vpop.permute.xlu0 %3680
      %3682 = vrot.lane.b32.xlu0 %v3419, 124
      %v3683 = vpop.permute.xlu0 %3682
      %3684 = vrot.lane.b32.xlu0 %v3439, 124
      %v3685 = vpop.permute.xlu0 %3684
      %3686 = vrot.lane.b32.xlu0 %v3442, 124
      %v3687 = vpop.permute.xlu0 %3686
      %v3688 = vsel %vm1503, %v3681, %v3685
      %v3689 = vsel %vm1503, %v3683, %v3687
      %v3690 = vsel %vm1503, %v3685, %v3681
      %v3691 = vsel %vm1503, %v3687, %v3683
      %v3692 = vsel %vm1510, %v3688, 0.0
      %v3693 = vsel %vm1511, %v3690, 0.0
      %v3694 = vsel %vm1510, %v3689, 0.0
      %v3695 = vsel %vm1511, %v3691, 0.0
      %3696 = vset.pattern.permute.xlu0 12
      %3697 = vperm.xlu0 %3696, %v3235
      %v3698 = vpop.permute.xlu0 %3697
      %3700 = vset.pattern.permute.xlu0 12
      %3701 = vperm.xlu0 %3700, %v3236
      %v3702 = vpop.permute.xlu0 %3701
      %v3704 = vmul.f32 %v3698, %v3692
      %v3705 = vmul.f32 %v3698, %v3693
      %v3706 = vmul.f32 %v3702, %v3694
      %v3707 = vmul.f32 %v3702, %v3695
      %v3708 = vadd.f32 %v3676, %v3704
      %v3709 = vadd.f32 %v3677, %v3705
      %v3710 = vadd.f32 %v3678, %v3706
      %v3711 = vadd.f32 %v3679, %v3707
      %v3712 = vadd.f32 %v3319, %v3416
      %v3713 = vadd.f32 %v3320, %v3439
      %v3714 = vadd.f32 %v3321, %v3419
      %v3715 = vadd.f32 %v3322, %v3442
      %v3716 = vadd.f32 %v3712, %v3708
      %v3717 = vadd.f32 %v3713, %v3709
      %v3718 = vadd.f32 %v3714, %v3710
      %v3719 = vadd.f32 %v3715, %v3711
      %3720 = vst [vmem:[#allocation2] sm:$0xff] %v3716
      %3721 = vst [vmem:[#allocation2 + $0x8] sm:$0xff] %v3717
      %3722 = vst [vmem:[#allocation2 + $0x10] sm:$0xff] %v3718
      %3723 = vst [vmem:[#allocation2 + $0x18] sm:$0xff] %v3719
      %v3724 = vld [vmem:[#allocation2] sm:$0xff]
      %v3725 = vld [vmem:[#allocation2 + $0x8] sm:$0xff]
      %v3726 = vld [vmem:[#allocation2 + $0x10] sm:$0xff]
      %v3727 = vld [vmem:[#allocation2 + $0x18] sm:$0xff]
      %v3728 = vld [vmem:[#allocation2 + $0x20] sm:$0xff]
      %v3729 = vld [vmem:[#allocation2 + $0x28] sm:$0xff]
      %v3730 = vld [vmem:[#allocation2 + $0x30] sm:$0xff]
      %v3731 = vld [vmem:[#allocation2 + $0x38] sm:$0xff]
      %v3732 = vld [vmem:[#allocation2 + $0x40] sm:$0xff]
      %v3733 = vld [vmem:[#allocation2 + $0x48] sm:$0xff]
      %v3734 = vld [vmem:[#allocation2 + $0x50] sm:$0xff]
      %v3735 = vld [vmem:[#allocation2 + $0x58] sm:$0xff]
      %v3736 = vld [vmem:[#allocation2 + $0x60] sm:$0xff]
      %v3737 = vld [vmem:[#allocation2 + $0x68] sm:$0xff]
      %v3738 = vld [vmem:[#allocation2 + $0x70] sm:$0xff]
      %v3739 = vld [vmem:[#allocation2 + $0x78] sm:$0xff]
      %vm3740 = vcmp.ge.s32.totalorder %v442, 128
      %vm3741 = vcmp.ge.s32.totalorder %v443, 128
      %vm3742 = vmand %vm3740, %vm498
      %vm3743 = vmand %vm3741, %vm499
      %vm3744 = vmand %vm3740, %vm506
      %vm3745 = vmand %vm3741, %vm507
      %3746 = vrot.lane.b32.xlu0 %v3724, 1
      %v3747 = vpop.permute.xlu0 %3746
      %3748 = vrot.lane.b32.xlu0 %v3726, 1
      %v3749 = vpop.permute.xlu0 %3748
      %3750 = vrot.lane.b32.xlu0 %v3728, 1
      %v3751 = vpop.permute.xlu0 %3750
      %3752 = vrot.lane.b32.xlu0 %v3730, 1
      %v3753 = vpop.permute.xlu0 %3752
      %3754 = vrot.lane.b32.xlu0 %v3732, 1
      %v3755 = vpop.permute.xlu0 %3754
      %3756 = vrot.lane.b32.xlu0 %v3734, 1
      %v3757 = vpop.permute.xlu0 %3756
      %3758 = vrot.lane.b32.xlu0 %v3736, 1
      %v3759 = vpop.permute.xlu0 %3758
      %3760 = vrot.lane.b32.xlu0 %v3738, 1
      %v3761 = vpop.permute.xlu0 %3760
      %3762 = vrot.lane.b32.xlu0 %v3725, 1
      %v3763 = vpop.permute.xlu0 %3762
      %3764 = vrot.lane.b32.xlu0 %v3727, 1
      %v3765 = vpop.permute.xlu0 %3764
      %3766 = vrot.lane.b32.xlu0 %v3729, 1
      %v3767 = vpop.permute.xlu0 %3766
      %3768 = vrot.lane.b32.xlu0 %v3731, 1
      %v3769 = vpop.permute.xlu0 %3768
      %3770 = vrot.lane.b32.xlu0 %v3733, 1
      %v3771 = vpop.permute.xlu0 %3770
      %3772 = vrot.lane.b32.xlu0 %v3735, 1
      %v3773 = vpop.permute.xlu0 %3772
      %3774 = vrot.lane.b32.xlu0 %v3737, 1
      %v3775 = vpop.permute.xlu0 %3774
      %3776 = vrot.lane.b32.xlu0 %v3739, 1
      %v3777 = vpop.permute.xlu0 %3776
      %v3778 = vsel %vm790, %v3747, %v3763
      %v3779 = vsel %vm790, %v3749, %v3765
      %v3780 = vsel %vm790, %v3751, %v3767
      %v3781 = vsel %vm790, %v3753, %v3769
      %v3782 = vsel %vm790, %v3755, %v3771
      %v3783 = vsel %vm790, %v3757, %v3773
      %v3784 = vsel %vm790, %v3759, %v3775
      %v3785 = vsel %vm790, %v3761, %v3777
      %v3786 = vsel %vm790, %v3763, %v3747
      %v3787 = vsel %vm790, %v3765, %v3749
      %v3788 = vsel %vm790, %v3767, %v3751
      %v3789 = vsel %vm790, %v3769, %v3753
      %v3790 = vsel %vm790, %v3771, %v3755
      %v3791 = vsel %vm790, %v3773, %v3757
      %v3792 = vsel %vm790, %v3775, %v3759
      %v3793 = vsel %vm790, %v3777, %v3761
      %v3794 = vsel %vm3742, 1, 0
      %v3795 = vsel %vm3743, 1, 0
      %vm3796 = vcmp.eq.s32.totalorder %v3794, 1
      %vm3797 = vcmp.eq.s32.totalorder %v3795, 1
      %v3798 = vsel %vm3796, %v3778, 0.0
      %v3799 = vsel %vm3797, %v3786, 0.0
      %v3800 = vsel %vm3796, %v3779, 0.0
      %v3801 = vsel %vm3797, %v3787, 0.0
      %v3802 = vsel %vm3796, %v3780, 0.0
      %v3803 = vsel %vm3797, %v3788, 0.0
      %v3804 = vsel %vm3796, %v3781, 0.0
      %v3805 = vsel %vm3797, %v3789, 0.0
      %v3806 = vsel %vm3796, %v3782, 0.0
      %v3807 = vsel %vm3797, %v3790, 0.0
      %v3808 = vsel %vm3796, %v3783, 0.0
      %v3809 = vsel %vm3797, %v3791, 0.0
      %v3810 = vsel %vm3796, %v3784, 0.0
      %v3811 = vsel %vm3797, %v3792, 0.0
      %v3812 = vsel %vm3796, %v3785, 0.0
      %v3813 = vsel %vm3797, %v3793, 0.0
      %v3814 = vld [vmem:[%s10] sm:$0xff]
      %v3815 = vld [vmem:[%s10 + $0x8] sm:$0xff]
      %v3816 = vsel %vm3740, 1, 0
      %v3817 = vsel %vm3741, 1, 0
      %vm3818 = vcmp.eq.s32.totalorder %v3816, 1
      %vm3819 = vcmp.eq.s32.totalorder %v3817, 1
      %v3820 = vsel %vm3818, %v3725, 0.0
      %v3821 = vsel %vm3819, %v3724, 0.0
      %v3822 = vsel %vm3818, %v3727, 0.0
      %v3823 = vsel %vm3819, %v3726, 0.0
      %v3824 = vsel %vm3818, %v3729, 0.0
      %v3825 = vsel %vm3819, %v3728, 0.0
      %v3826 = vsel %vm3818, %v3731, 0.0
      %v3827 = vsel %vm3819, %v3730, 0.0
      %v3828 = vsel %vm3818, %v3733, 0.0
      %v3829 = vsel %vm3819, %v3732, 0.0
      %v3830 = vsel %vm3818, %v3735, 0.0
      %v3831 = vsel %vm3819, %v3734, 0.0
      %v3832 = vsel %vm3818, %v3737, 0.0
      %v3833 = vsel %vm3819, %v3736, 0.0
      %v3834 = vsel %vm3818, %v3739, 0.0
      %v3835 = vsel %vm3819, %v3738, 0.0
      %s3836 = scalar_lea.vmem %s10, 16
      %v3837 = vld [vmem:[%s3836] sm:$0xff]
      %v3838 = vld [vmem:[%s3836 + $0x8] sm:$0xff]
      %vm3839 = vcmask 523264
      %v3841 = vsel %vm3839, %v3837, 0
      %v3844 = vsel %vm3839, %v3838, 0
      %3846 = vmatpush.msra.mxu0 0.0
      %3847 = vmatpush.msra.mxu0 0.0
      %3848 = vmatpush.msra.mxu0 0.0
      %3849 = vmatpush.msra.mxu0 0.0
      %3850 = vmatpush.msra.mxu0 0.0
      %3851 = vmatpush.msra.mxu0 0.0
      %3852 = vmatpush.msra.mxu0 0.0
      %3853 = vmatpush.msra.mxu0 0.0
      %3854 = vmatpush.msra.mxu0 %v3834
      %3855 = vmatpush.msra.mxu0 %v3832
      %3856 = vmatpush.msra.mxu0 %v3830
      %3857 = vmatpush.msra.mxu0 %v3828
      %3858 = vmatpush.msra.mxu0 %v3826
      %3859 = vmatpush.msra.mxu0 %v3824
      %3860 = vmatpush.msra.mxu0 %v3822
      %3861 = vmatpush.msra.mxu0 %v3820
      %3862 = vmatmul.f32.gmra.mxu0 %v3841
      %v3863 = vpop.f32.mrf.mxu0
      %v3864 = vadd.f32 0.0, %v3863
      %3865 = vmatmul.f32.gmra.mxu0 %v3844
      %v3866 = vpop.f32.mrf.mxu0
      %v3867 = vadd.f32 0.0, %v3866
      %3868 = vdwg.mxu0
      %3869 = vmatpush.msra.mxu0 0.0
      %3870 = vmatpush.msra.mxu0 0.0
      %3871 = vmatpush.msra.mxu0 0.0
      %3872 = vmatpush.msra.mxu0 0.0
      %3873 = vmatpush.msra.mxu0 0.0
      %3874 = vmatpush.msra.mxu0 0.0
      %3875 = vmatpush.msra.mxu0 0.0
      %3876 = vmatpush.msra.mxu0 0.0
      %3877 = vmatpush.msra.mxu0 %v3835
      %3878 = vmatpush.msra.mxu0 %v3833
      %3879 = vmatpush.msra.mxu0 %v3831
      %3880 = vmatpush.msra.mxu0 %v3829
      %3881 = vmatpush.msra.mxu0 %v3827
      %3882 = vmatpush.msra.mxu0 %v3825
      %3883 = vmatpush.msra.mxu0 %v3823
      %3884 = vmatpush.msra.mxu0 %v3821
      %3885 = vmatmul.f32.gmra.mxu0 %v3841
      %v3886 = vpop.f32.mrf.mxu0
      %v3887 = vadd.f32 0.0, %v3886
      %3888 = vmatmul.f32.gmra.mxu0 %v3844
      %v3889 = vpop.f32.mrf.mxu0
      %v3890 = vadd.f32 0.0, %v3889
      %3891 = vdwg.mxu0
      %v3893 = vsel %vm3839, %v3814, 0
      %v3896 = vsel %vm3839, %v3815, 0
      %3898 = vmatpush.msra.mxu0 0.0
      %3899 = vmatpush.msra.mxu0 0.0
      %3900 = vmatpush.msra.mxu0 0.0
      %3901 = vmatpush.msra.mxu0 0.0
      %3902 = vmatpush.msra.mxu0 0.0
      %3903 = vmatpush.msra.mxu0 0.0
      %3904 = vmatpush.msra.mxu0 0.0
      %3905 = vmatpush.msra.mxu0 0.0
      %3906 = vmatpush.msra.mxu0 %v3812
      %3907 = vmatpush.msra.mxu0 %v3810
      %3908 = vmatpush.msra.mxu0 %v3808
      %3909 = vmatpush.msra.mxu0 %v3806
      %3910 = vmatpush.msra.mxu0 %v3804
      %3911 = vmatpush.msra.mxu0 %v3802
      %3912 = vmatpush.msra.mxu0 %v3800
      %3913 = vmatpush.msra.mxu0 %v3798
      %3914 = vmatmul.f32.gmra.mxu0 %v3893
      %v3915 = vpop.f32.mrf.mxu0
      %v3916 = vadd.f32 %v3864, %v3915
      %3917 = vmatmul.f32.gmra.mxu0 %v3896
      %v3918 = vpop.f32.mrf.mxu0
      %v3919 = vadd.f32 %v3867, %v3918
      %3920 = vdwg.mxu0
      %3921 = vmatpush.msra.mxu0 0.0
      %3922 = vmatpush.msra.mxu0 0.0
      %3923 = vmatpush.msra.mxu0 0.0
      %3924 = vmatpush.msra.mxu0 0.0
      %3925 = vmatpush.msra.mxu0 0.0
      %3926 = vmatpush.msra.mxu0 0.0
      %3927 = vmatpush.msra.mxu0 0.0
      %3928 = vmatpush.msra.mxu0 0.0
      %3929 = vmatpush.msra.mxu0 %v3813
      %3930 = vmatpush.msra.mxu0 %v3811
      %3931 = vmatpush.msra.mxu0 %v3809
      %3932 = vmatpush.msra.mxu0 %v3807
      %3933 = vmatpush.msra.mxu0 %v3805
      %3934 = vmatpush.msra.mxu0 %v3803
      %3935 = vmatpush.msra.mxu0 %v3801
      %3936 = vmatpush.msra.mxu0 %v3799
      %3937 = vmatmul.f32.gmra.mxu0 %v3893
      %v3938 = vpop.f32.mrf.mxu0
      %v3939 = vadd.f32 %v3887, %v3938
      %3940 = vmatmul.f32.gmra.mxu0 %v3896
      %v3941 = vpop.f32.mrf.mxu0
      %v3942 = vadd.f32 %v3890, %v3941
      %3943 = vdwg.mxu0
      %3944 = vrot.lane.b32.xlu0 %v3724, 127
      %v3945 = vpop.permute.xlu0 %3944
      %3946 = vrot.lane.b32.xlu0 %v3726, 127
      %v3947 = vpop.permute.xlu0 %3946
      %3948 = vrot.lane.b32.xlu0 %v3728, 127
      %v3949 = vpop.permute.xlu0 %3948
      %3950 = vrot.lane.b32.xlu0 %v3730, 127
      %v3951 = vpop.permute.xlu0 %3950
      %3952 = vrot.lane.b32.xlu0 %v3732, 127
      %v3953 = vpop.permute.xlu0 %3952
      %3954 = vrot.lane.b32.xlu0 %v3734, 127
      %v3955 = vpop.permute.xlu0 %3954
      %3956 = vrot.lane.b32.xlu0 %v3736, 127
      %v3957 = vpop.permute.xlu0 %3956
      %3958 = vrot.lane.b32.xlu0 %v3738, 127
      %v3959 = vpop.permute.xlu0 %3958
      %3960 = vrot.lane.b32.xlu0 %v3725, 127
      %v3961 = vpop.permute.xlu0 %3960
      %3962 = vrot.lane.b32.xlu0 %v3727, 127
      %v3963 = vpop.permute.xlu0 %3962
      %3964 = vrot.lane.b32.xlu0 %v3729, 127
      %v3965 = vpop.permute.xlu0 %3964
      %3966 = vrot.lane.b32.xlu0 %v3731, 127
      %v3967 = vpop.permute.xlu0 %3966
      %3968 = vrot.lane.b32.xlu0 %v3733, 127
      %v3969 = vpop.permute.xlu0 %3968
      %3970 = vrot.lane.b32.xlu0 %v3735, 127
      %v3971 = vpop.permute.xlu0 %3970
      %3972 = vrot.lane.b32.xlu0 %v3737, 127
      %v3973 = vpop.permute.xlu0 %3972
      %3974 = vrot.lane.b32.xlu0 %v3739, 127
      %v3975 = vpop.permute.xlu0 %3974
      %v3976 = vsel %vm929, %v3945, %v3961
      %v3977 = vsel %vm929, %v3947, %v3963
      %v3978 = vsel %vm929, %v3949, %v3965
      %v3979 = vsel %vm929, %v3951, %v3967
      %v3980 = vsel %vm929, %v3953, %v3969
      %v3981 = vsel %vm929, %v3955, %v3971
      %v3982 = vsel %vm929, %v3957, %v3973
      %v3983 = vsel %vm929, %v3959, %v3975
      %v3984 = vsel %vm929, %v3961, %v3945
      %v3985 = vsel %vm929, %v3963, %v3947
      %v3986 = vsel %vm929, %v3965, %v3949
      %v3987 = vsel %vm929, %v3967, %v3951
      %v3988 = vsel %vm929, %v3969, %v3953
      %v3989 = vsel %vm929, %v3971, %v3955
      %v3990 = vsel %vm929, %v3973, %v3957
      %v3991 = vsel %vm929, %v3975, %v3959
      %v3992 = vsel %vm3744, 1, 0
      %v3993 = vsel %vm3745, 1, 0
      %vm3994 = vcmp.eq.s32.totalorder %v3992, 1
      %vm3995 = vcmp.eq.s32.totalorder %v3993, 1
      %v3996 = vsel %vm3994, %v3984, 0.0
      %v3997 = vsel %vm3995, %v3976, 0.0
      %v3998 = vsel %vm3994, %v3985, 0.0
      %v3999 = vsel %vm3995, %v3977, 0.0
      %v4000 = vsel %vm3994, %v3986, 0.0
      %v4001 = vsel %vm3995, %v3978, 0.0
      %v4002 = vsel %vm3994, %v3987, 0.0
      %v4003 = vsel %vm3995, %v3979, 0.0
      %v4004 = vsel %vm3994, %v3988, 0.0
      %v4005 = vsel %vm3995, %v3980, 0.0
      %v4006 = vsel %vm3994, %v3989, 0.0
      %v4007 = vsel %vm3995, %v3981, 0.0
      %v4008 = vsel %vm3994, %v3990, 0.0
      %v4009 = vsel %vm3995, %v3982, 0.0
      %v4010 = vsel %vm3994, %v3991, 0.0
      %v4011 = vsel %vm3995, %v3983, 0.0
      %s4012 = scalar_lea.vmem %s10, 32
      %v4013 = vld [vmem:[%s4012] sm:$0xff]
      %v4014 = vld [vmem:[%s4012 + $0x8] sm:$0xff]
      %v4016 = vsel %vm3839, %v4013, 0
      %v4019 = vsel %vm3839, %v4014, 0
      %4021 = vmatpush.msra.mxu0 0.0
      %4022 = vmatpush.msra.mxu0 0.0
      %4023 = vmatpush.msra.mxu0 0.0
      %4024 = vmatpush.msra.mxu0 0.0
      %4025 = vmatpush.msra.mxu0 0.0
      %4026 = vmatpush.msra.mxu0 0.0
      %4027 = vmatpush.msra.mxu0 0.0
      %4028 = vmatpush.msra.mxu0 0.0
      %4029 = vmatpush.msra.mxu0 %v4010
      %4030 = vmatpush.msra.mxu0 %v4008
      %4031 = vmatpush.msra.mxu0 %v4006
      %4032 = vmatpush.msra.mxu0 %v4004
      %4033 = vmatpush.msra.mxu0 %v4002
      %4034 = vmatpush.msra.mxu0 %v4000
      %4035 = vmatpush.msra.mxu0 %v3998
      %4036 = vmatpush.msra.mxu0 %v3996
      %4037 = vmatmul.f32.gmra.mxu0 %v4016
      %v4038 = vpop.f32.mrf.mxu0
      %v4039 = vadd.f32 0.0, %v4038
      %4040 = vmatmul.f32.gmra.mxu0 %v4019
      %v4041 = vpop.f32.mrf.mxu0
      %v4042 = vadd.f32 0.0, %v4041
      %4043 = vdwg.mxu0
      %4044 = vmatpush.msra.mxu0 0.0
      %4045 = vmatpush.msra.mxu0 0.0
      %4046 = vmatpush.msra.mxu0 0.0
      %4047 = vmatpush.msra.mxu0 0.0
      %4048 = vmatpush.msra.mxu0 0.0
      %4049 = vmatpush.msra.mxu0 0.0
      %4050 = vmatpush.msra.mxu0 0.0
      %4051 = vmatpush.msra.mxu0 0.0
      %4052 = vmatpush.msra.mxu0 %v4011
      %4053 = vmatpush.msra.mxu0 %v4009
      %4054 = vmatpush.msra.mxu0 %v4007
      %4055 = vmatpush.msra.mxu0 %v4005
      %4056 = vmatpush.msra.mxu0 %v4003
      %4057 = vmatpush.msra.mxu0 %v4001
      %4058 = vmatpush.msra.mxu0 %v3999
      %4059 = vmatpush.msra.mxu0 %v3997
      %4060 = vmatmul.f32.gmra.mxu0 %v4016
      %v4061 = vpop.f32.mrf.mxu0
      %v4062 = vadd.f32 0.0, %v4061
      %4063 = vmatmul.f32.gmra.mxu0 %v4019
      %v4064 = vpop.f32.mrf.mxu0
      %v4065 = vadd.f32 0.0, %v4064
      %4066 = vdwg.mxu0
      %v4067 = vadd.f32 %v3916, %v4039
      %v4068 = vadd.f32 %v3939, %v4062
      %v4069 = vadd.f32 %v3919, %v4042
      %v4070 = vadd.f32 %v3942, %v4065
      %v4071 = vsel %vm797, %v3786, 0.0
      %v4072 = vsel %vm798, %v3778, 0.0
      %v4073 = vsel %vm797, %v3787, 0.0
      %v4074 = vsel %vm798, %v3779, 0.0
      %v4075 = vsel %vm797, %v3788, 0.0
      %v4076 = vsel %vm798, %v3780, 0.0
      %v4077 = vsel %vm797, %v3789, 0.0
      %v4078 = vsel %vm798, %v3781, 0.0
      %v4079 = vsel %vm797, %v3790, 0.0
      %v4080 = vsel %vm798, %v3782, 0.0
      %v4081 = vsel %vm797, %v3791, 0.0
      %v4082 = vsel %vm798, %v3783, 0.0
      %v4083 = vsel %vm797, %v3792, 0.0
      %v4084 = vsel %vm798, %v3784, 0.0
      %v4085 = vsel %vm797, %v3793, 0.0
      %v4086 = vsel %vm798, %v3785, 0.0
      %s4087 = scalar_lea.vmem %s10, 48
      %v4088 = vld [vmem:[%s4087] sm:$0xff]
      %v4089 = vld [vmem:[%s4087 + $0x8] sm:$0xff]
      %v4091 = vsel %vm3839, %v4088, 0
      %v4094 = vsel %vm3839, %v4089, 0
      %4096 = vmatpush.msra.mxu0 0.0
      %4097 = vmatpush.msra.mxu0 0.0
      %4098 = vmatpush.msra.mxu0 0.0
      %4099 = vmatpush.msra.mxu0 0.0
      %4100 = vmatpush.msra.mxu0 0.0
      %4101 = vmatpush.msra.mxu0 0.0
      %4102 = vmatpush.msra.mxu0 0.0
      %4103 = vmatpush.msra.mxu0 0.0
      %4104 = vmatpush.msra.mxu0 %v4085
      %4105 = vmatpush.msra.mxu0 %v4083
      %4106 = vmatpush.msra.mxu0 %v4081
      %4107 = vmatpush.msra.mxu0 %v4079
      %4108 = vmatpush.msra.mxu0 %v4077
      %4109 = vmatpush.msra.mxu0 %v4075
      %4110 = vmatpush.msra.mxu0 %v4073
      %4111 = vmatpush.msra.mxu0 %v4071
      %4112 = vmatmul.f32.gmra.mxu0 %v4091
      %v4113 = vpop.f32.mrf.mxu0
      %v4114 = vadd.f32 0.0, %v4113
      %4115 = vmatmul.f32.gmra.mxu0 %v4094
      %v4116 = vpop.f32.mrf.mxu0
      %v4117 = vadd.f32 0.0, %v4116
      %4118 = vdwg.mxu0
      %4119 = vmatpush.msra.mxu0 0.0
      %4120 = vmatpush.msra.mxu0 0.0
      %4121 = vmatpush.msra.mxu0 0.0
      %4122 = vmatpush.msra.mxu0 0.0
      %4123 = vmatpush.msra.mxu0 0.0
      %4124 = vmatpush.msra.mxu0 0.0
      %4125 = vmatpush.msra.mxu0 0.0
      %4126 = vmatpush.msra.mxu0 0.0
      %4127 = vmatpush.msra.mxu0 %v4086
      %4128 = vmatpush.msra.mxu0 %v4084
      %4129 = vmatpush.msra.mxu0 %v4082
      %4130 = vmatpush.msra.mxu0 %v4080
      %4131 = vmatpush.msra.mxu0 %v4078
      %4132 = vmatpush.msra.mxu0 %v4076
      %4133 = vmatpush.msra.mxu0 %v4074
      %4134 = vmatpush.msra.mxu0 %v4072
      %4135 = vmatmul.f32.gmra.mxu0 %v4091
      %v4136 = vpop.f32.mrf.mxu0
      %v4137 = vadd.f32 0.0, %v4136
      %4138 = vmatmul.f32.gmra.mxu0 %v4094
      %v4139 = vpop.f32.mrf.mxu0
      %v4140 = vadd.f32 0.0, %v4139
      %4141 = vdwg.mxu0
      %v4142 = vadd.f32 %v4067, %v4114
      %v4143 = vadd.f32 %v4068, %v4137
      %v4144 = vadd.f32 %v4069, %v4117
      %v4145 = vadd.f32 %v4070, %v4140
      %s4146 = scalar_lea.vmem %s10, 64
      %v4147 = vld [vmem:[%s4146] sm:$0xff]
      %v4148 = vld [vmem:[%s4146 + $0x8] sm:$0xff]
      %v4150 = vsel %vm3839, %v4147, 0
      %v4153 = vsel %vm3839, %v4148, 0
      %4155 = vmatpush.msra.mxu0 0.0
      %4156 = vmatpush.msra.mxu0 0.0
      %4157 = vmatpush.msra.mxu0 0.0
      %4158 = vmatpush.msra.mxu0 0.0
      %4159 = vmatpush.msra.mxu0 0.0
      %4160 = vmatpush.msra.mxu0 0.0
      %4161 = vmatpush.msra.mxu0 0.0
      %4162 = vmatpush.msra.mxu0 0.0
      %4163 = vmatpush.msra.mxu0 %v3738
      %4164 = vmatpush.msra.mxu0 %v3736
      %4165 = vmatpush.msra.mxu0 %v3734
      %4166 = vmatpush.msra.mxu0 %v3732
      %4167 = vmatpush.msra.mxu0 %v3730
      %4168 = vmatpush.msra.mxu0 %v3728
      %4169 = vmatpush.msra.mxu0 %v3726
      %4170 = vmatpush.msra.mxu0 %v3724
      %4171 = vmatmul.f32.gmra.mxu0 %v4150
      %v4172 = vpop.f32.mrf.mxu0
      %v4173 = vadd.f32 0.0, %v4172
      %4174 = vmatmul.f32.gmra.mxu0 %v4153
      %v4175 = vpop.f32.mrf.mxu0
      %v4176 = vadd.f32 0.0, %v4175
      %4177 = vdwg.mxu0
      %4178 = vmatpush.msra.mxu0 0.0
      %4179 = vmatpush.msra.mxu0 0.0
      %4180 = vmatpush.msra.mxu0 0.0
      %4181 = vmatpush.msra.mxu0 0.0
      %4182 = vmatpush.msra.mxu0 0.0
      %4183 = vmatpush.msra.mxu0 0.0
      %4184 = vmatpush.msra.mxu0 0.0
      %4185 = vmatpush.msra.mxu0 0.0
      %4186 = vmatpush.msra.mxu0 %v3739
      %4187 = vmatpush.msra.mxu0 %v3737
      %4188 = vmatpush.msra.mxu0 %v3735
      %4189 = vmatpush.msra.mxu0 %v3733
      %4190 = vmatpush.msra.mxu0 %v3731
      %4191 = vmatpush.msra.mxu0 %v3729
      %4192 = vmatpush.msra.mxu0 %v3727
      %4193 = vmatpush.msra.mxu0 %v3725
      %4194 = vmatmul.f32.gmra.mxu0 %v4150
      %v4195 = vpop.f32.mrf.mxu0
      %v4196 = vadd.f32 0.0, %v4195
      %4197 = vmatmul.f32.gmra.mxu0 %v4153
      %v4198 = vpop.f32.mrf.mxu0
      %v4199 = vadd.f32 0.0, %v4198
      %4200 = vdwg.mxu0
      %v4201 = vadd.f32 %v4142, %v4173
      %v4202 = vadd.f32 %v4143, %v4196
      %v4203 = vadd.f32 %v4144, %v4176
      %v4204 = vadd.f32 %v4145, %v4199
      %v4205 = vsel %vm936, %v3976, 0.0
      %v4206 = vsel %vm937, %v3984, 0.0
      %v4207 = vsel %vm936, %v3977, 0.0
      %v4208 = vsel %vm937, %v3985, 0.0
      %v4209 = vsel %vm936, %v3978, 0.0
      %v4210 = vsel %vm937, %v3986, 0.0
      %v4211 = vsel %vm936, %v3979, 0.0
      %v4212 = vsel %vm937, %v3987, 0.0
      %v4213 = vsel %vm936, %v3980, 0.0
      %v4214 = vsel %vm937, %v3988, 0.0
      %v4215 = vsel %vm936, %v3981, 0.0
      %v4216 = vsel %vm937, %v3989, 0.0
      %v4217 = vsel %vm936, %v3982, 0.0
      %v4218 = vsel %vm937, %v3990, 0.0
      %v4219 = vsel %vm936, %v3983, 0.0
      %v4220 = vsel %vm937, %v3991, 0.0
      %s4221 = scalar_lea.vmem %s10, 80
      %v4222 = vld [vmem:[%s4221] sm:$0xff]
      %v4223 = vld [vmem:[%s4221 + $0x8] sm:$0xff]
      %v4225 = vsel %vm3839, %v4222, 0
      %v4228 = vsel %vm3839, %v4223, 0
      %4230 = vmatpush.msra.mxu0 0.0
      %4231 = vmatpush.msra.mxu0 0.0
      %4232 = vmatpush.msra.mxu0 0.0
      %4233 = vmatpush.msra.mxu0 0.0
      %4234 = vmatpush.msra.mxu0 0.0
      %4235 = vmatpush.msra.mxu0 0.0
      %4236 = vmatpush.msra.mxu0 0.0
      %4237 = vmatpush.msra.mxu0 0.0
      %4238 = vmatpush.msra.mxu0 %v4219
      %4239 = vmatpush.msra.mxu0 %v4217
      %4240 = vmatpush.msra.mxu0 %v4215
      %4241 = vmatpush.msra.mxu0 %v4213
      %4242 = vmatpush.msra.mxu0 %v4211
      %4243 = vmatpush.msra.mxu0 %v4209
      %4244 = vmatpush.msra.mxu0 %v4207
      %4245 = vmatpush.msra.mxu0 %v4205
      %4246 = vmatmul.f32.gmra.mxu0 %v4225
      %v4247 = vpop.f32.mrf.mxu0
      %v4248 = vadd.f32 0.0, %v4247
      %4249 = vmatmul.f32.gmra.mxu0 %v4228
      %v4250 = vpop.f32.mrf.mxu0
      %v4251 = vadd.f32 0.0, %v4250
      %4252 = vdwg.mxu0
      %4253 = vmatpush.msra.mxu0 0.0
      %4254 = vmatpush.msra.mxu0 0.0
      %4255 = vmatpush.msra.mxu0 0.0
      %4256 = vmatpush.msra.mxu0 0.0
      %4257 = vmatpush.msra.mxu0 0.0
      %4258 = vmatpush.msra.mxu0 0.0
      %4259 = vmatpush.msra.mxu0 0.0
      %4260 = vmatpush.msra.mxu0 0.0
      %4261 = vmatpush.msra.mxu0 %v4220
      %4262 = vmatpush.msra.mxu0 %v4218
      %4263 = vmatpush.msra.mxu0 %v4216
      %4264 = vmatpush.msra.mxu0 %v4214
      %4265 = vmatpush.msra.mxu0 %v4212
      %4266 = vmatpush.msra.mxu0 %v4210
      %4267 = vmatpush.msra.mxu0 %v4208
      %4268 = vmatpush.msra.mxu0 %v4206
      %4269 = vmatmul.f32.gmra.mxu0 %v4225
      %v4270 = vpop.f32.mrf.mxu0
      %v4271 = vadd.f32 0.0, %v4270
      %4272 = vmatmul.f32.gmra.mxu0 %v4228
      %v4273 = vpop.f32.mrf.mxu0
      %v4274 = vadd.f32 0.0, %v4273
      %4275 = vdwg.mxu0
      %v4276 = vadd.f32 %v4201, %v4248
      %v4277 = vadd.f32 %v4202, %v4271
      %v4278 = vadd.f32 %v4203, %v4251
      %v4279 = vadd.f32 %v4204, %v4274
      %v4280 = vadd.f32 %v4276, %v4277
      %4281 = vadd.xlane.f32.xlu0 %v4280
      %v4282 = vpop.xlane.xlu0 %4281
      %v4283 = vadd.f32 %v4278, %v4279
      %4284 = vadd.xlane.f32.xlu0 %v4283
      %v4285 = vpop.xlane.xlu0 %4284
      %v4286 = vmul.f32 %v4276, %v4276
      %v4287 = vmul.f32 %v4277, %v4277
      %v4288 = vmul.f32 %v4278, %v4278
      %v4289 = vmul.f32 %v4279, %v4279
      %v4290 = vadd.f32 %v4286, %v4287
      %4291 = vadd.xlane.f32.xlu0 %v4290
      %v4292 = vpop.xlane.xlu0 %4291
      %v4293 = vadd.f32 %v4288, %v4289
      %4294 = vadd.xlane.f32.xlu0 %v4293
      %v4295 = vpop.xlane.xlu0 %4294
      %v4296 = vmul.f32 %v4282, 0.00390625
      %v4297 = vmul.f32 %v4285, 0.00390625
      %v4298 = vmul.f32 %v4292, 0.00390625
      %v4299 = vmul.f32 %v4295, 0.00390625
      %v4300 = vmul.f32 %v4296, %v4296
      %v4301 = vmul.f32 %v4297, %v4297
      %v4302 = vsub.f32 %v4298, %v4300
      %v4303 = vsub.f32 %v4299, %v4301
      %v4304 = vld [vmem:[%s12] sm:$0xff]
      %v4305 = vld [vmem:[%s12 + $0x8] sm:$0xff]
      %v4306 = vadd.f32 %v4302, 1e-05
      %v4307 = vadd.f32 %v4303, 1e-05
      %v4308 = vrsqrt.pop %v4306
      %v4309 = vmul.f32 %v4308, %v4306
      %v4310 = vmul.f32 %v4309, %v4308
      %v4311 = vmul.f32 0.5, %v4310
      %v4312 = vsub.f32 1.5, %v4311
      %v4313 = vmul.f32 %v4308, %v4312
      %vm4314 = vweird.f32 %v4306
      %vm4315 = vweird.f32 %v4308
      %vm4316 = vmor %vm4314, %vm4315
      %v4317 = vsel %vm4316, %v4308, %v4313
      %v4318 = vrsqrt.pop %v4307
      %v4319 = vmul.f32 %v4318, %v4307
      %v4320 = vmul.f32 %v4319, %v4318
      %v4321 = vmul.f32 0.5, %v4320
      %v4322 = vsub.f32 1.5, %v4321
      %v4323 = vmul.f32 %v4318, %v4322
      %vm4324 = vweird.f32 %v4307
      %vm4325 = vweird.f32 %v4318
      %vm4326 = vmor %vm4324, %vm4325
      %v4327 = vsel %vm4326, %v4318, %v4323
      %v4328 = vmul.f32 %v4304, %v4317
      %v4329 = vmul.f32 %v4305, %v4327
      %v4330 = vmul.f32 %v4296, %v4328
      %v4331 = vmul.f32 %v4297, %v4329
      %4334 = vrot.lane.b32.xlu0 %v4330, 1
      %v4335 = vpop.permute.xlu0 %4334
      %4336 = vrot.lane.b32.xlu0 %v4331, 1
      %v4337 = vpop.permute.xlu0 %4336
      %v4340 = vsub.f32 %v4304, %v4335
      %v4341 = vsub.f32 %v4305, %v4337
      %4343 = vset.pattern.permute.xlu0 0
      %4344 = vperm.xlu0 %4343, %v4328
      %v4345 = vpop.permute.xlu0 %4344
      %4348 = vset.pattern.permute.xlu0 0
      %4349 = vperm.xlu0 %4348, %v4329
      %v4350 = vpop.permute.xlu0 %4349
      %v4352 = vmul.f32 %v4276, %v4345
      %v4353 = vmul.f32 %v4277, %v4345
      %v4354 = vmul.f32 %v4278, %v4350
      %v4355 = vmul.f32 %v4279, %v4350
      %4357 = vset.pattern.permute.xlu0 1
      %4358 = vperm.xlu0 %4357, %v4340
      %v4359 = vpop.permute.xlu0 %4358
      %4362 = vset.pattern.permute.xlu0 1
      %4363 = vperm.xlu0 %4362, %v4341
      %v4364 = vpop.permute.xlu0 %4363
      %v4366 = vadd.f32 %v4352, %v4359
      %v4367 = vadd.f32 %v4353, %v4359
      %v4368 = vadd.f32 %v4354, %v4364
      %v4369 = vadd.f32 %v4355, %v4364
      %vm4370 = vcmp.ge.f32.partialorder %v4366, 0.0
      %vm4371 = vcmp.ge.f32.partialorder %v4367, 0.0
      %vm4372 = vcmp.ge.f32.partialorder %v4368, 0.0
      %vm4373 = vcmp.ge.f32.partialorder %v4369, 0.0
      %4375 = vset.pattern.permute.xlu0 2
      %4376 = vperm.xlu0 %4375, %v4304
      %v4377 = vpop.permute.xlu0 %4376
      %4380 = vset.pattern.permute.xlu0 2
      %4381 = vperm.xlu0 %4380, %v4305
      %v4382 = vpop.permute.xlu0 %4381
      %v4384 = vmul.f32 %v4377, %v4366
      %v4385 = vmul.f32 %v4377, %v4367
      %v4386 = vmul.f32 %v4382, %v4368
      %v4387 = vmul.f32 %v4382, %v4369
      %v4388 = vsel %vm4370, %v4366, %v4384
      %v4389 = vsel %vm4371, %v4367, %v4385
      %v4390 = vsel %vm4372, %v4368, %v4386
      %v4391 = vsel %vm4373, %v4369, %v4387
      %v4392 = vld [vmem:[%s11] sm:$0xff]
      %v4393 = vld [vmem:[%s11 + $0x8] sm:$0xff]
      %4394 = vset.pattern.permute.xlu0 3
      %4395 = vperm.xlu0 %4394, %v4304
      %v4396 = vpop.permute.xlu0 %4395
      %4398 = vset.pattern.permute.xlu0 3
      %4399 = vperm.xlu0 %4398, %v4305
      %v4400 = vpop.permute.xlu0 %4399
      %v4403 = vsel %vm597, %v4392, 0
      %v4406 = vsel %vm597, %v4393, 0
      %4408 = vmatpush.msra.mxu0 0.0
      %4409 = vmatpush.msra.mxu0 0.0
      %4410 = vmatpush.msra.mxu0 0.0
      %4411 = vmatpush.msra.mxu0 0.0
      %4412 = vmatpush.msra.mxu0 0.0
      %4413 = vmatpush.msra.mxu0 0.0
      %4414 = vmatpush.msra.mxu0 0.0
      %4415 = vmatpush.msra.mxu0 0.0
      %4416 = vmatpush.msra.mxu0 0.0
      %4417 = vmatpush.msra.mxu0 0.0
      %4418 = vmatpush.msra.mxu0 0.0
      %4419 = vmatpush.msra.mxu0 0.0
      %4420 = vmatpush.msra.mxu0 0.0
      %4421 = vmatpush.msra.mxu0 0.0
      %4422 = vmatpush.msra.mxu0 %v4390
      %4423 = vmatpush.msra.mxu0 %v4388
      %4424 = vmatmul.f32.gmra.mxu0 %v4403
      %v4425 = vpop.f32.mrf.mxu0
      %v4426 = vadd.f32 %v4396, %v4425
      %4427 = vmatmul.f32.gmra.mxu0 %v4406
      %v4428 = vpop.f32.mrf.mxu0
      %v4429 = vadd.f32 %v4400, %v4428
      %4430 = vdwg.mxu0
      %4431 = vmatpush.msra.mxu0 0.0
      %4432 = vmatpush.msra.mxu0 0.0
      %4433 = vmatpush.msra.mxu0 0.0
      %4434 = vmatpush.msra.mxu0 0.0
      %4435 = vmatpush.msra.mxu0 0.0
      %4436 = vmatpush.msra.mxu0 0.0
      %4437 = vmatpush.msra.mxu0 0.0
      %4438 = vmatpush.msra.mxu0 0.0
      %4439 = vmatpush.msra.mxu0 0.0
      %4440 = vmatpush.msra.mxu0 0.0
      %4441 = vmatpush.msra.mxu0 0.0
      %4442 = vmatpush.msra.mxu0 0.0
      %4443 = vmatpush.msra.mxu0 0.0
      %4444 = vmatpush.msra.mxu0 0.0
      %4445 = vmatpush.msra.mxu0 %v4391
      %4446 = vmatpush.msra.mxu0 %v4389
      %4447 = vmatmul.f32.gmra.mxu0 %v4403
      %v4448 = vpop.f32.mrf.mxu0
      %v4449 = vadd.f32 %v4396, %v4448
      %4450 = vmatmul.f32.gmra.mxu0 %v4406
      %v4451 = vpop.f32.mrf.mxu0
      %v4452 = vadd.f32 %v4400, %v4451
      %4453 = vdwg.mxu0
      %v4454 = vmax.f32 %v4426, 0.0
      %v4455 = vmax.f32 %v4449, 0.0
      %v4456 = vmax.f32 %v4429, 0.0
      %v4457 = vmax.f32 %v4452, 0.0
      %s4458 = scalar_lea.vmem %s11, 16
      %v4459 = vld [vmem:[%s4458] sm:$0xff]
      %v4460 = vld [vmem:[%s4458 + $0x8] sm:$0xff]
      %v4462 = vsel %vm597, %v4459, 0
      %v4465 = vsel %vm597, %v4460, 0
      %4467 = vmatpush.msra.mxu0 0.0
      %4468 = vmatpush.msra.mxu0 0.0
      %4469 = vmatpush.msra.mxu0 0.0
      %4470 = vmatpush.msra.mxu0 0.0
      %4471 = vmatpush.msra.mxu0 0.0
      %4472 = vmatpush.msra.mxu0 0.0
      %4473 = vmatpush.msra.mxu0 0.0
      %4474 = vmatpush.msra.mxu0 0.0
      %4475 = vmatpush.msra.mxu0 0.0
      %4476 = vmatpush.msra.mxu0 0.0
      %4477 = vmatpush.msra.mxu0 0.0
      %4478 = vmatpush.msra.mxu0 0.0
      %4479 = vmatpush.msra.mxu0 0.0
      %4480 = vmatpush.msra.mxu0 0.0
      %4481 = vmatpush.msra.mxu0 %v4456
      %4482 = vmatpush.msra.mxu0 %v4454
      %4483 = vmatmul.f32.gmra.mxu0 %v4462
      %v4484 = vpop.f32.mrf.mxu0
      %v4485 = vadd.f32 0.0, %v4484
      %4486 = vmatmul.f32.gmra.mxu0 %v4465
      %v4487 = vpop.f32.mrf.mxu0
      %v4488 = vadd.f32 0.0, %v4487
      %4489 = vdwg.mxu0
      %4490 = vmatpush.msra.mxu0 0.0
      %4491 = vmatpush.msra.mxu0 0.0
      %4492 = vmatpush.msra.mxu0 0.0
      %4493 = vmatpush.msra.mxu0 0.0
      %4494 = vmatpush.msra.mxu0 0.0
      %4495 = vmatpush.msra.mxu0 0.0
      %4496 = vmatpush.msra.mxu0 0.0
      %4497 = vmatpush.msra.mxu0 0.0
      %4498 = vmatpush.msra.mxu0 0.0
      %4499 = vmatpush.msra.mxu0 0.0
      %4500 = vmatpush.msra.mxu0 0.0
      %4501 = vmatpush.msra.mxu0 0.0
      %4502 = vmatpush.msra.mxu0 0.0
      %4503 = vmatpush.msra.mxu0 0.0
      %4504 = vmatpush.msra.mxu0 %v4457
      %4505 = vmatpush.msra.mxu0 %v4455
      %4506 = vmatmul.f32.gmra.mxu0 %v4462
      %v4507 = vpop.f32.mrf.mxu0
      %v4508 = vadd.f32 0.0, %v4507
      %4509 = vmatmul.f32.gmra.mxu0 %v4465
      %v4510 = vpop.f32.mrf.mxu0
      %v4511 = vadd.f32 0.0, %v4510
      %4512 = vdwg.mxu0
      %4513 = vrot.lane.b32.xlu0 %v4485, 4
      %v4514 = vpop.permute.xlu0 %4513
      %4515 = vrot.lane.b32.xlu0 %v4488, 4
      %v4516 = vpop.permute.xlu0 %4515
      %4517 = vrot.lane.b32.xlu0 %v4508, 4
      %v4518 = vpop.permute.xlu0 %4517
      %4519 = vrot.lane.b32.xlu0 %v4511, 4
      %v4520 = vpop.permute.xlu0 %4519
      %v4521 = vsel %vm1242, %v4514, %v4518
      %v4522 = vsel %vm1242, %v4516, %v4520
      %v4523 = vsel %vm1242, %v4518, %v4514
      %v4524 = vsel %vm1242, %v4520, %v4516
      %v4525 = vsel %vm1249, %v4523, 0.0
      %v4526 = vsel %vm1250, %v4521, 0.0
      %v4527 = vsel %vm1249, %v4524, 0.0
      %v4528 = vsel %vm1250, %v4522, 0.0
      %4529 = vset.pattern.permute.xlu0 4
      %4530 = vperm.xlu0 %4529, %v4304
      %v4531 = vpop.permute.xlu0 %4530
      %4533 = vset.pattern.permute.xlu0 4
      %4534 = vperm.xlu0 %4533, %v4305
      %v4535 = vpop.permute.xlu0 %4534
      %v4537 = vmul.f32 %v4531, %v4525
      %v4538 = vmul.f32 %v4531, %v4526
      %v4539 = vmul.f32 %v4535, %v4527
      %v4540 = vmul.f32 %v4535, %v4528
      %4541 = vrot.lane.b32.xlu0 %v4485, 3
      %v4542 = vpop.permute.xlu0 %4541
      %4543 = vrot.lane.b32.xlu0 %v4488, 3
      %v4544 = vpop.permute.xlu0 %4543
      %4545 = vrot.lane.b32.xlu0 %v4508, 3
      %v4546 = vpop.permute.xlu0 %4545
      %4547 = vrot.lane.b32.xlu0 %v4511, 3
      %v4548 = vpop.permute.xlu0 %4547
      %v4549 = vsel %vm1275, %v4542, %v4546
      %v4550 = vsel %vm1275, %v4544, %v4548
      %v4551 = vsel %vm1275, %v4546, %v4542
      %v4552 = vsel %vm1275, %v4548, %v4544
      %v4553 = vsel %vm1282, %v4551, 0.0
      %v4554 = vsel %vm1283, %v4549, 0.0
      %v4555 = vsel %vm1282, %v4552, 0.0
      %v4556 = vsel %vm1283, %v4550, 0.0
      %4557 = vset.pattern.permute.xlu0 5
      %4558 = vperm.xlu0 %4557, %v4304
      %v4559 = vpop.permute.xlu0 %4558
      %4561 = vset.pattern.permute.xlu0 5
      %4562 = vperm.xlu0 %4561, %v4305
      %v4563 = vpop.permute.xlu0 %4562
      %v4565 = vmul.f32 %v4559, %v4553
      %v4566 = vmul.f32 %v4559, %v4554
      %v4567 = vmul.f32 %v4563, %v4555
      %v4568 = vmul.f32 %v4563, %v4556
      %v4569 = vadd.f32 %v4537, %v4565
      %v4570 = vadd.f32 %v4538, %v4566
      %v4571 = vadd.f32 %v4539, %v4567
      %v4572 = vadd.f32 %v4540, %v4568
      %4573 = vrot.lane.b32.xlu0 %v4485, 2
      %v4574 = vpop.permute.xlu0 %4573
      %4575 = vrot.lane.b32.xlu0 %v4488, 2
      %v4576 = vpop.permute.xlu0 %4575
      %4577 = vrot.lane.b32.xlu0 %v4508, 2
      %v4578 = vpop.permute.xlu0 %4577
      %4579 = vrot.lane.b32.xlu0 %v4511, 2
      %v4580 = vpop.permute.xlu0 %4579
      %v4581 = vsel %vm1312, %v4574, %v4578
      %v4582 = vsel %vm1312, %v4576, %v4580
      %v4583 = vsel %vm1312, %v4578, %v4574
      %v4584 = vsel %vm1312, %v4580, %v4576
      %v4585 = vsel %vm1319, %v4583, 0.0
      %v4586 = vsel %vm1320, %v4581, 0.0
      %v4587 = vsel %vm1319, %v4584, 0.0
      %v4588 = vsel %vm1320, %v4582, 0.0
      %4589 = vset.pattern.permute.xlu0 6
      %4590 = vperm.xlu0 %4589, %v4304
      %v4591 = vpop.permute.xlu0 %4590
      %4593 = vset.pattern.permute.xlu0 6
      %4594 = vperm.xlu0 %4593, %v4305
      %v4595 = vpop.permute.xlu0 %4594
      %v4597 = vmul.f32 %v4591, %v4585
      %v4598 = vmul.f32 %v4591, %v4586
      %v4599 = vmul.f32 %v4595, %v4587
      %v4600 = vmul.f32 %v4595, %v4588
      %v4601 = vadd.f32 %v4569, %v4597
      %v4602 = vadd.f32 %v4570, %v4598
      %v4603 = vadd.f32 %v4571, %v4599
      %v4604 = vadd.f32 %v4572, %v4600
      %4605 = vrot.lane.b32.xlu0 %v4485, 1
      %v4606 = vpop.permute.xlu0 %4605
      %4607 = vrot.lane.b32.xlu0 %v4488, 1
      %v4608 = vpop.permute.xlu0 %4607
      %4609 = vrot.lane.b32.xlu0 %v4508, 1
      %v4610 = vpop.permute.xlu0 %4609
      %4611 = vrot.lane.b32.xlu0 %v4511, 1
      %v4612 = vpop.permute.xlu0 %4611
      %v4613 = vsel %vm790, %v4606, %v4610
      %v4614 = vsel %vm790, %v4608, %v4612
      %v4615 = vsel %vm790, %v4610, %v4606
      %v4616 = vsel %vm790, %v4612, %v4608
      %v4617 = vsel %vm797, %v4615, 0.0
      %v4618 = vsel %vm798, %v4613, 0.0
      %v4619 = vsel %vm797, %v4616, 0.0
      %v4620 = vsel %vm798, %v4614, 0.0
      %4621 = vset.pattern.permute.xlu0 7
      %4622 = vperm.xlu0 %4621, %v4304
      %v4623 = vpop.permute.xlu0 %4622
      %4625 = vset.pattern.permute.xlu0 7
      %4626 = vperm.xlu0 %4625, %v4305
      %v4627 = vpop.permute.xlu0 %4626
      %v4629 = vmul.f32 %v4623, %v4617
      %v4630 = vmul.f32 %v4623, %v4618
      %v4631 = vmul.f32 %v4627, %v4619
      %v4632 = vmul.f32 %v4627, %v4620
      %v4633 = vadd.f32 %v4601, %v4629
      %v4634 = vadd.f32 %v4602, %v4630
      %v4635 = vadd.f32 %v4603, %v4631
      %v4636 = vadd.f32 %v4604, %v4632
      %4637 = vset.pattern.permute.xlu0 8
      %4638 = vperm.xlu0 %4637, %v4304
      %v4639 = vpop.permute.xlu0 %4638
      %4641 = vset.pattern.permute.xlu0 8
      %4642 = vperm.xlu0 %4641, %v4305
      %v4643 = vpop.permute.xlu0 %4642
      %v4645 = vmul.f32 %v4639, %v4485
      %v4646 = vmul.f32 %v4639, %v4508
      %v4647 = vmul.f32 %v4643, %v4488
      %v4648 = vmul.f32 %v4643, %v4511
      %v4649 = vadd.f32 %v4633, %v4645
      %v4650 = vadd.f32 %v4634, %v4646
      %v4651 = vadd.f32 %v4635, %v4647
      %v4652 = vadd.f32 %v4636, %v4648
      %4653 = vrot.lane.b32.xlu0 %v4485, 127
      %v4654 = vpop.permute.xlu0 %4653
      %4655 = vrot.lane.b32.xlu0 %v4488, 127
      %v4656 = vpop.permute.xlu0 %4655
      %4657 = vrot.lane.b32.xlu0 %v4508, 127
      %v4658 = vpop.permute.xlu0 %4657
      %4659 = vrot.lane.b32.xlu0 %v4511, 127
      %v4660 = vpop.permute.xlu0 %4659
      %v4661 = vsel %vm929, %v4654, %v4658
      %v4662 = vsel %vm929, %v4656, %v4660
      %v4663 = vsel %vm929, %v4658, %v4654
      %v4664 = vsel %vm929, %v4660, %v4656
      %v4665 = vsel %vm936, %v4661, 0.0
      %v4666 = vsel %vm937, %v4663, 0.0
      %v4667 = vsel %vm936, %v4662, 0.0
      %v4668 = vsel %vm937, %v4664, 0.0
      %4669 = vset.pattern.permute.xlu0 9
      %4670 = vperm.xlu0 %4669, %v4304
      %v4671 = vpop.permute.xlu0 %4670
      %4673 = vset.pattern.permute.xlu0 9
      %4674 = vperm.xlu0 %4673, %v4305
      %v4675 = vpop.permute.xlu0 %4674
      %v4677 = vmul.f32 %v4671, %v4665
      %v4678 = vmul.f32 %v4671, %v4666
      %v4679 = vmul.f32 %v4675, %v4667
      %v4680 = vmul.f32 %v4675, %v4668
      %v4681 = vadd.f32 %v4649, %v4677
      %v4682 = vadd.f32 %v4650, %v4678
      %v4683 = vadd.f32 %v4651, %v4679
      %v4684 = vadd.f32 %v4652, %v4680
      %4685 = vrot.lane.b32.xlu0 %v4485, 126
      %v4686 = vpop.permute.xlu0 %4685
      %4687 = vrot.lane.b32.xlu0 %v4488, 126
      %v4688 = vpop.permute.xlu0 %4687
      %4689 = vrot.lane.b32.xlu0 %v4508, 126
      %v4690 = vpop.permute.xlu0 %4689
      %4691 = vrot.lane.b32.xlu0 %v4511, 126
      %v4692 = vpop.permute.xlu0 %4691
      %v4693 = vsel %vm1429, %v4686, %v4690
      %v4694 = vsel %vm1429, %v4688, %v4692
      %v4695 = vsel %vm1429, %v4690, %v4686
      %v4696 = vsel %vm1429, %v4692, %v4688
      %v4697 = vsel %vm1436, %v4693, 0.0
      %v4698 = vsel %vm1437, %v4695, 0.0
      %v4699 = vsel %vm1436, %v4694, 0.0
      %v4700 = vsel %vm1437, %v4696, 0.0
      %4701 = vset.pattern.permute.xlu0 10
      %4702 = vperm.xlu0 %4701, %v4304
      %v4703 = vpop.permute.xlu0 %4702
      %4705 = vset.pattern.permute.xlu0 10
      %4706 = vperm.xlu0 %4705, %v4305
      %v4707 = vpop.permute.xlu0 %4706
      %v4709 = vmul.f32 %v4703, %v4697
      %v4710 = vmul.f32 %v4703, %v4698
      %v4711 = vmul.f32 %v4707, %v4699
      %v4712 = vmul.f32 %v4707, %v4700
      %v4713 = vadd.f32 %v4681, %v4709
      %v4714 = vadd.f32 %v4682, %v4710
      %v4715 = vadd.f32 %v4683, %v4711
      %v4716 = vadd.f32 %v4684, %v4712
      %4717 = vrot.lane.b32.xlu0 %v4485, 125
      %v4718 = vpop.permute.xlu0 %4717
      %4719 = vrot.lane.b32.xlu0 %v4488, 125
      %v4720 = vpop.permute.xlu0 %4719
      %4721 = vrot.lane.b32.xlu0 %v4508, 125
      %v4722 = vpop.permute.xlu0 %4721
      %4723 = vrot.lane.b32.xlu0 %v4511, 125
      %v4724 = vpop.permute.xlu0 %4723
      %v4725 = vsel %vm1466, %v4718, %v4722
      %v4726 = vsel %vm1466, %v4720, %v4724
      %v4727 = vsel %vm1466, %v4722, %v4718
      %v4728 = vsel %vm1466, %v4724, %v4720
      %v4729 = vsel %vm1473, %v4725, 0.0
      %v4730 = vsel %vm1474, %v4727, 0.0
      %v4731 = vsel %vm1473, %v4726, 0.0
      %v4732 = vsel %vm1474, %v4728, 0.0
      %4733 = vset.pattern.permute.xlu0 11
      %4734 = vperm.xlu0 %4733, %v4304
      %v4735 = vpop.permute.xlu0 %4734
      %4737 = vset.pattern.permute.xlu0 11
      %4738 = vperm.xlu0 %4737, %v4305
      %v4739 = vpop.permute.xlu0 %4738
      %v4741 = vmul.f32 %v4735, %v4729
      %v4742 = vmul.f32 %v4735, %v4730
      %v4743 = vmul.f32 %v4739, %v4731
      %v4744 = vmul.f32 %v4739, %v4732
      %v4745 = vadd.f32 %v4713, %v4741
      %v4746 = vadd.f32 %v4714, %v4742
      %v4747 = vadd.f32 %v4715, %v4743
      %v4748 = vadd.f32 %v4716, %v4744
      %4749 = vrot.lane.b32.xlu0 %v4485, 124
      %v4750 = vpop.permute.xlu0 %4749
      %4751 = vrot.lane.b32.xlu0 %v4488, 124
      %v4752 = vpop.permute.xlu0 %4751
      %4753 = vrot.lane.b32.xlu0 %v4508, 124
      %v4754 = vpop.permute.xlu0 %4753
      %4755 = vrot.lane.b32.xlu0 %v4511, 124
      %v4756 = vpop.permute.xlu0 %4755
      %v4757 = vsel %vm1503, %v4750, %v4754
      %v4758 = vsel %vm1503, %v4752, %v4756
      %v4759 = vsel %vm1503, %v4754, %v4750
      %v4760 = vsel %vm1503, %v4756, %v4752
      %v4761 = vsel %vm1510, %v4757, 0.0
      %v4762 = vsel %vm1511, %v4759, 0.0
      %v4763 = vsel %vm1510, %v4758, 0.0
      %v4764 = vsel %vm1511, %v4760, 0.0
      %4765 = vset.pattern.permute.xlu0 12
      %4766 = vperm.xlu0 %4765, %v4304
      %v4767 = vpop.permute.xlu0 %4766
      %4769 = vset.pattern.permute.xlu0 12
      %4770 = vperm.xlu0 %4769, %v4305
      %v4771 = vpop.permute.xlu0 %4770
      %v4773 = vmul.f32 %v4767, %v4761
      %v4774 = vmul.f32 %v4767, %v4762
      %v4775 = vmul.f32 %v4771, %v4763
      %v4776 = vmul.f32 %v4771, %v4764
      %v4777 = vadd.f32 %v4745, %v4773
      %v4778 = vadd.f32 %v4746, %v4774
      %v4779 = vadd.f32 %v4747, %v4775
      %v4780 = vadd.f32 %v4748, %v4776
      %v4781 = vadd.f32 %v4388, %v4485
      %v4782 = vadd.f32 %v4389, %v4508
      %v4783 = vadd.f32 %v4390, %v4488
      %v4784 = vadd.f32 %v4391, %v4511
      %v4785 = vadd.f32 %v4781, %v4777
      %v4786 = vadd.f32 %v4782, %v4778
      %v4787 = vadd.f32 %v4783, %v4779
      %v4788 = vadd.f32 %v4784, %v4780
      %4789 = vst [vmem:[%s440] sm:$0xff] %v4785
      %4790 = vst [vmem:[%s440 + $0x8] sm:$0xff] %v4786
      %4791 = vst [vmem:[%s440 + $0x10] sm:$0xff] %v4787
      %4792 = vst [vmem:[%s440 + $0x18] sm:$0xff] %v4788
      %p4793 = scmp.lt.s32.totalorder %s24, 1
      %s4794 = scalar_select %p4793, %s24, 1
      %s4795 = smul.addr %s4794, 4
      %s4796 = smul.addr %s4795, 8
      %s4797 = scalar_lea.vmem %s13, %s4796
      // Predicated region
      $region73: #{dilated_dense_net_forward.1} parent=71 // pred_check
        %p4798 = pneg %p320
      $region74: #{dilated_dense_net_forward.1} parent=71 // pred_check_branch
        %4800 = sbr.rel (%p4798) target = $region76
      $region75: #{dilated_dense_net_forward.1} parent=71 // pred_region
        _
      $region76: #{dilated_dense_net_forward.1} parent=71 // pred_fallthru
        _
    $region72: #{dilated_dense_net_forward.1} parent=5 // pred_fallthru
      _
    %p4801 = scmp.le.s32.totalorder 2, %s19
    // Predicated region
    $region77: #{dilated_dense_net_forward.1} parent=5 // pred_check
      %p4802 = pneg %p4801
    $region78: #{dilated_dense_net_forward.1} parent=5 // pred_check_branch
      %4804 = sbr.rel (%p4802) target = $region80
    $region79: #{dilated_dense_net_forward.1} parent=5 // pred_region
      %s4805 = ssub.s32 %s19, 2
      // Predicated region
      $region81: #{dilated_dense_net_forward.1} parent=79 // pred_check
        %p4806 = pneg %p326
      $region82: #{dilated_dense_net_forward.1} parent=79 // pred_check_branch
        %4808 = sbr.rel (%p4806) target = $region84
      $region83: #{dilated_dense_net_forward.1} parent=79 // pred_region
        %p4809 = scmp.lt.s32.totalorder %s25, 1
        %s4810 = scalar_select %p4809, %s25, 1
        %s4811 = smul.addr %s4810, 4
        %s4812 = smul.addr %s4811, 8
        %s4813 = scalar_lea.vmem %s13, %s4812
      $region84: #{dilated_dense_net_forward.1} parent=79 // pred_fallthru
        _
    $region80: #{dilated_dense_net_forward.1} parent=5 // pred_fallthru
      _
  $region6: #{dilated_dense_net_forward.1} parent=0 // loop_footer
    %s23 = sadd.s32 1, %s19
  $region7: #{dilated_dense_net_forward.1} parent=0 // loop_footer_branch
    %18 = sbr.rel target = $region3
  $region8: #{dilated_dense_net_forward.1} parent=0 // loop_exit
    _

</llo_original>
